<compile_context>
chip_gen: v7x
topology: tpu7x:2x2x1
jax: 0.10.0
libtpu: 0.0.40
codegen_flags: <defaults>
</compile_context>

<pallas_src>
import functools

import jax
import jax.numpy as jnp
from jax.experimental import pallas as pl
from jax.experimental.pallas import tpu as pltpu

K = 4                   # Conv kernel size used by every ConvBlock
PAD_LO, PAD_HI = 1, 2   # PyTorch padding='same' with even kernel: (1, 2)


# ----------------------------------------------------------------------------
# Fused 5-layer kernel (one batch element per grid step).
# ----------------------------------------------------------------------------
def _generator_kernel(x_ref, w_ref, b_ref, m_ref, o_ref, p_ref, *,
                      c_in, c_out, c_pad, H, W, n_layers):
    """x_ref: (1, c_in, H*W) f32     input image, channels on sublanes, HW on lanes
       w_ref: (L, c_pad, K*K*c_pad) bf16   BN-folded, channel-padded conv weights
       b_ref: (L, c_pad, 1) f32            BN-folded conv bias
       m_ref: (K, H*W) bf16                column-validity masks per kw (row-wrap)
       o_ref: (1, c_out, H*W) f32          output (lane-dense: last dim = H*W)
       p_ref: (K*K*c_pad, H*W) bf16 VMEM   im2col patch scratch
    """
    HW = H * W

    def shift_lanes(v, s):
        # y[:, f] = v[:, f + s] for 0 <= f + s < HW, else 0  (zero fill).
        if s == 0:
            return v
        z = jnp.zeros((v.shape[0], abs(s)), v.dtype)
        if s > 0:
            return jnp.concatenate([v[:, s:], z], axis=1)
        return jnp.concatenate([z, v[:, :HW + s]], axis=1)

    # Hoist the small column masks out of the layer loops.
    col_masks = [m_ref[i:i + 1, :] for i in range(K)]            # each (1, HW) bf16

    # Initial activation: zero-pad input channels up to c_pad.
    act = x_ref[0]                                               # (c_in, HW) f32
    if c_pad > c_in:
        act = jnp.concatenate(
            [act, jnp.zeros((c_pad - c_in, HW), jnp.float32)], axis=0)

    for layer in range(n_layers):
        xb = act.astype(jnp.bfloat16)                            # bf16 matmul input
        # Build the im2col patch matrix: one (c_pad, HW) slab per (kh, kw).
        for kh in range(K):
            dy = kh - PAD_LO
            for kw in range(K):
                dx = kw - PAD_LO
                idx = kh * K + kw
                piece = shift_lanes(xb, dy * W + dx)
                if dx != 0:
                    piece = piece * col_masks[kw]                # kill row-wrapped cols
                p_ref[idx * c_pad:(idx + 1) * c_pad, :] = piece
        # Single MXU matmul over the full K*K*c_pad contraction (f32 accumulate).
        y = jnp.dot(w_ref[layer], p_ref[...],
                    preferred_element_type=jnp.float32)          # (c_pad, HW)
        y = y + b_ref[layer]                                     # folded conv+BN bias
        if layer < n_layers - 1:
            act = jnp.maximum(y, 0.0)                            # relu (f32 epilogue)
        else:
            act = jax.nn.sigmoid(y)                              # final sigmoid

    o_ref[0] = act[:c_out, :]


# ----------------------------------------------------------------------------
# Host-side parameter preparation (BN folding, channel padding, stacking).
# ----------------------------------------------------------------------------
def _fold_and_stack(params, c_pad):
    ws, bs = [], []
    for p in params:
        w = p["w"]                                   # (cout, cin, K, K), PyTorch OIHW
        b = p["b"]                                   # (cout,)
        cout, cin = w.shape[0], w.shape[1]
        if p["bn"] is not None:
            bn = p["bn"]
            scale = bn["gamma"] / jnp.sqrt(bn["var"] + bn["eps"])
            w = w * scale[:, None, None, None]
            b = b * scale + (bn["beta"] - bn["mean"] * scale)
        # (cout, cin, kh, kw) -> (cout, kh, kw, cin); zero-pad channels; flatten so
        # row index matches the kernel's patch layout (kh*K + kw)*c_pad + ci.
        w = jnp.transpose(w, (0, 2, 3, 1))
        w = jnp.pad(w, ((0, c_pad - cout), (0, 0), (0, 0), (0, c_pad - cin)))
        ws.append(w.reshape(c_pad, K * K * c_pad))
        bs.append(jnp.pad(b, (0, c_pad - cout)))
    w_stack = jnp.stack(ws).astype(jnp.bfloat16)                 # (L, c_pad, KK*c_pad)
    b_stack = jnp.stack(bs).astype(jnp.float32)[..., None]       # (L, c_pad, 1)
    return w_stack, b_stack


def _column_masks(H, W):
    """Mask row kw is 1 where column x + (kw - PAD_LO) stays inside [0, W)."""
    col = jnp.arange(H * W, dtype=jnp.int32) % W
    rows = []
    for kw in range(K):
        dx = kw - PAD_LO
        rows.append(((col + dx >= 0) & (col + dx < W)).astype(jnp.bfloat16))
    return jnp.stack(rows)                                       # (K, H*W)


def generator_forward(params, x_nchw):
    """Matches Generator.forward (eval mode): input/output in NCHW."""
    N, c_in, H, W = x_nchw.shape
    HW = H * W
    n_layers = len(params)
    c_out = params[-1]["w"].shape[0]
    c_max = max(max(p["w"].shape[0], p["w"].shape[1]) for p in params)
    c_pad = max(16, -(-c_max // 16) * 16)            # bf16 sublane-tile aligned

    w_stack, b_stack = _fold_and_stack(params, c_pad)
    masks = _column_masks(H, W)
    x = x_nchw.reshape(N, c_in, HW).astype(jnp.float32)

    kernel = functools.partial(_generator_kernel, c_in=c_in, c_out=c_out,
                               c_pad=c_pad, H=H, W=W, n_layers=n_layers)
    out = pl.pallas_call(
        kernel,
        out_shape=jax.ShapeDtypeStruct((N, c_out, HW), jnp.float32),
        grid=(N,),
        in_specs=[
            pl.BlockSpec((1, c_in, HW), lambda n: (n, 0, 0)),
            pl.BlockSpec((n_layers, c_pad, K * K * c_pad), lambda n: (0, 0, 0)),
            pl.BlockSpec((n_layers, c_pad, 1), lambda n: (0, 0, 0)),
            pl.BlockSpec((K, HW), lambda n: (0, 0)),
        ],
        out_specs=pl.BlockSpec((1, c_out, HW), lambda n: (n, 0, 0)),
        scratch_shapes=[pltpu.VMEM((K * K * c_pad, HW), jnp.bfloat16)],
        compiler_params=pltpu.CompilerParams(
            dimension_semantics=("parallel",)),
    )(x, w_stack, b_stack, masks)
    return out.reshape(N, c_out, H, W)


# ----------------------------------------------------------------------------
# Parameter init (PyTorch-equivalent shapes / defaults) and pure-JAX reference.
# ----------------------------------------------------------------------------
def init_generator_params(key, nc):
    chans = [(nc, 8 * nc), (8 * nc, 4 * nc), (4 * nc, 2 * nc), (2 * nc, nc), (nc, nc)]
    has_bn = [True, True, True, True, False]
    params = []
    for (cin, cout), bn in zip(chans, has_bn):
        key, kw_, kb_ = jax.random.split(key, 3)
        bound = (cin * K * K) ** -0.5
        w = jax.random.uniform(kw_, (cout, cin, K, K), jnp.float32, -bound, bound)
        b = jax.random.uniform(kb_, (cout,), jnp.float32, -bound, bound)
        bn_p = None
        if bn:
            bn_p = dict(gamma=jnp.ones((cout,), jnp.float32),
                        beta=jnp.zeros((cout,), jnp.float32),
                        mean=jnp.zeros((cout,), jnp.float32),
                        var=jnp.ones((cout,), jnp.float32),
                        eps=1e-5)
        params.append(dict(w=w, b=b, bn=bn_p))
    return params


def reference_forward(params, x_nchw):
    """Pure-JAX (XLA) reference of the PyTorch Generator in eval mode."""
    x = x_nchw.astype(jnp.float32)
    n_layers = len(params)
    for i, p in enumerate(params):
        y = jax.lax.conv_general_dilated(
            x, p["w"], window_strides=(1, 1),
            padding=((PAD_LO, PAD_HI), (PAD_LO, PAD_HI)),
            dimension_numbers=("NCHW", "OIHW", "NCHW"),
            precision=jax.lax.Precision.HIGHEST)
        y = y + p["b"][None, :, None, None]
        if p["bn"] is not None:
            bn = p["bn"]
            scale = bn["gamma"] / jnp.sqrt(bn["var"] + bn["eps"])
            y = (y - bn["mean"][None, :, None, None]) * scale[None, :, None, None] \
                + bn["beta"][None, :, None, None]
        x = jnp.maximum(y, 0.0) if i < n_layers - 1 else jax.nn.sigmoid(y)
    return x


if __name__ == "__main__":
    nc = 4
    N, H, W = 2, 16, 16
    key = jax.random.PRNGKey(0)
    k_x, k_p = jax.random.split(key)
    x = jax.random.normal(k_x, (N, nc, H, W), jnp.float32)   # NCHW, like PyTorch
    params = init_generator_params(k_p, nc)

    fwd = jax.jit(generator_forward)
    out = jax.block_until_ready(fwd(params, x))

    assert out.shape == (N, nc, H, W), out.shape
    assert bool(jnp.all(jnp.isfinite(out)))
    # Last block is sigmoid -> values in (0, 1).
    assert bool(jnp.all((out > 0.0) & (out < 1.0)))

    # Validate against the pure-JAX reference (bf16 matmul -> loose tolerance).
    ref = jax.block_until_ready(reference_forward(params, x))
    max_err = float(jnp.max(jnp.abs(out - ref)))
    assert max_err < 2e-2, f"max abs error vs reference: {max_err}"

    print("KERNEL_OK")
</pallas_src>

<mosaic_0001>
module attributes {stable_mosaic.version = 11 : i64} {
  func.func @_generator_kernel(%arg0: i32, %arg1: memref<1x4x256xf32, #tpu.memory_space<vmem>>, %arg2: memref<5x32x512xbf16, #tpu.memory_space<vmem>>, %arg3: memref<5x32x1xf32, #tpu.memory_space<vmem>>, %arg4: memref<4x256xbf16, #tpu.memory_space<vmem>>, %arg5: memref<1x4x256xf32, #tpu.memory_space<vmem>>, %arg6: memref<512x256xbf16, #tpu.memory_space<vmem>>) attributes {dimension_semantics = [#tpu.dimension_semantics<parallel>], iteration_bounds = array<i64: 2>, scalar_prefetch = 0 : i64, scratch_operands = 1 : i64, tpu.core_type = #tpu.core_type<tc>, window_params = [{transform_indices = @transform_0, window_bounds = array<i64: 1, 4, 256>}, {pipeline_mode = #tpu.pipeline_mode<synchronous>, transform_indices = @transform_1, window_bounds = array<i64: 5, 32, 512>}, {pipeline_mode = #tpu.pipeline_mode<synchronous>, transform_indices = @transform_2, window_bounds = array<i64: 5, 32, 1>}, {pipeline_mode = #tpu.pipeline_mode<synchronous>, transform_indices = @transform_3, window_bounds = array<i64: 4, 256>}, {transform_indices = @transform_4, window_bounds = array<i64: 1, 4, 256>}]} {
    %c0 = arith.constant 0 : index
    %c0_0 = arith.constant 0 : index
    %0 = vector.load %arg4[%c0, %c0_0] : memref<4x256xbf16, #tpu.memory_space<vmem>>, vector<1x256xbf16>
    %c2 = arith.constant 2 : index
    %c0_1 = arith.constant 0 : index
    %1 = vector.load %arg4[%c2, %c0_1] : memref<4x256xbf16, #tpu.memory_space<vmem>>, vector<1x256xbf16>
    %c3 = arith.constant 3 : index
    %c0_2 = arith.constant 0 : index
    %2 = vector.load %arg4[%c3, %c0_2] : memref<4x256xbf16, #tpu.memory_space<vmem>>, vector<1x256xbf16>
    %c0_3 = arith.constant 0 : index
    %c0_4 = arith.constant 0 : index
    %c0_5 = arith.constant 0 : index
    %3 = vector.load %arg1[%c0_3, %c0_4, %c0_5] : memref<1x4x256xf32, #tpu.memory_space<vmem>>, vector<1x4x256xf32>
    %4 = vector.shape_cast %3 : vector<1x4x256xf32> to vector<4x256xf32>
    %cst = arith.constant 0.000000e+00 : f32
    %5 = vector.broadcast %cst : f32 to vector<28x256xf32>
    %6 = tpu.concatenate %4, %5 in 0 : vector<4x256xf32>, vector<28x256xf32> -> vector<32x256xf32>
    %7 = arith.truncf %6 : vector<32x256xf32> to vector<32x256xbf16>
    %cst_6 = arith.constant 0.000000e+00 : bf16
    %8 = vector.broadcast %cst_6 : bf16 to vector<32x17xbf16>
    %9 = vector.extract_strided_slice %7 {offsets = [0, 0], sizes = [32, 239], strides = [1, 1]} : vector<32x256xbf16> to vector<32x239xbf16>
    %10 = tpu.concatenate %8, %9 in 1 : vector<32x17xbf16>, vector<32x239xbf16> -> vector<32x256xbf16>
    %11 = vector.broadcast %0 : vector<1x256xbf16> to vector<32x256xbf16>
    %12 = arith.mulf %10, %11 : vector<32x256xbf16>
    %c0_7 = arith.constant 0 : index
    %c0_8 = arith.constant 0 : index
    %13 = vector.load %arg6[%c0_7, %c0_8] : memref<512x256xbf16, #tpu.memory_space<vmem>>, vector<32x256xbf16>
    tpu.vector_store %arg6[%c0_7, %c0_8], %12 {strides = array<i32>} : memref<512x256xbf16, #tpu.memory_space<vmem>>, vector<32x256xbf16>,
    %cst_9 = arith.constant 0.000000e+00 : bf16
    %14 = vector.broadcast %cst_9 : bf16 to vector<32x16xbf16>
    %15 = vector.extract_strided_slice %7 {offsets = [0, 0], sizes = [32, 240], strides = [1, 1]} : vector<32x256xbf16> to vector<32x240xbf16>
    %16 = tpu.concatenate %14, %15 in 1 : vector<32x16xbf16>, vector<32x240xbf16> -> vector<32x256xbf16>
    %c32 = arith.constant 32 : index
    %c0_10 = arith.constant 0 : index
    %17 = vector.load %arg6[%c32, %c0_10] : memref<512x256xbf16, #tpu.memory_space<vmem>>, vector<32x256xbf16>
    tpu.vector_store %arg6[%c32, %c0_10], %16 {strides = array<i32>} : memref<512x256xbf16, #tpu.memory_space<vmem>>, vector<32x256xbf16>,
    %cst_11 = arith.constant 0.000000e+00 : bf16
    %18 = vector.broadcast %cst_11 : bf16 to vector<32x15xbf16>
    %19 = vector.extract_strided_slice %7 {offsets = [0, 0], sizes = [32, 241], strides = [1, 1]} : vector<32x256xbf16> to vector<32x241xbf16>
    %20 = tpu.concatenate %18, %19 in 1 : vector<32x15xbf16>, vector<32x241xbf16> -> vector<32x256xbf16>
    %21 = vector.broadcast %1 : vector<1x256xbf16> to vector<32x256xbf16>
    %22 = arith.mulf %20, %21 : vector<32x256xbf16>
    %c64 = arith.constant 64 : index
    %c0_12 = arith.constant 0 : index
    %23 = vector.load %arg6[%c64, %c0_12] : memref<512x256xbf16, #tpu.memory_space<vmem>>, vector<32x256xbf16>
    tpu.vector_store %arg6[%c64, %c0_12], %22 {strides = array<i32>} : memref<512x256xbf16, #tpu.memory_space<vmem>>, vector<32x256xbf16>,
    %cst_13 = arith.constant 0.000000e+00 : bf16
    %24 = vector.broadcast %cst_13 : bf16 to vector<32x14xbf16>
    %25 = vector.extract_strided_slice %7 {offsets = [0, 0], sizes = [32, 242], strides = [1, 1]} : vector<32x256xbf16> to vector<32x242xbf16>
    %26 = tpu.concatenate %24, %25 in 1 : vector<32x14xbf16>, vector<32x242xbf16> -> vector<32x256xbf16>
    %27 = vector.broadcast %2 : vector<1x256xbf16> to vector<32x256xbf16>
    %28 = arith.mulf %26, %27 : vector<32x256xbf16>
    %c96 = arith.constant 96 : index
    %c0_14 = arith.constant 0 : index
    %29 = vector.load %arg6[%c96, %c0_14] : memref<512x256xbf16, #tpu.memory_space<vmem>>, vector<32x256xbf16>
    tpu.vector_store %arg6[%c96, %c0_14], %28 {strides = array<i32>} : memref<512x256xbf16, #tpu.memory_space<vmem>>, vector<32x256xbf16>,
    %cst_15 = arith.constant 0.000000e+00 : bf16
    %30 = vector.broadcast %cst_15 : bf16 to vector<32x1xbf16>
    %31 = vector.extract_strided_slice %7 {offsets = [0, 0], sizes = [32, 255], strides = [1, 1]} : vector<32x256xbf16> to vector<32x255xbf16>
    %32 = tpu.concatenate %30, %31 in 1 : vector<32x1xbf16>, vector<32x255xbf16> -> vector<32x256xbf16>
    %33 = vector.broadcast %0 : vector<1x256xbf16> to vector<32x256xbf16>
    %34 = arith.mulf %32, %33 : vector<32x256xbf16>
    %c128 = arith.constant 128 : index
    %c0_16 = arith.constant 0 : index
    %35 = vector.load %arg6[%c128, %c0_16] : memref<512x256xbf16, #tpu.memory_space<vmem>>, vector<32x256xbf16>
    tpu.vector_store %arg6[%c128, %c0_16], %34 {strides = array<i32>} : memref<512x256xbf16, #tpu.memory_space<vmem>>, vector<32x256xbf16>,
    %c160 = arith.constant 160 : index
    %c0_17 = arith.constant 0 : index
    %36 = vector.load %arg6[%c160, %c0_17] : memref<512x256xbf16, #tpu.memory_space<vmem>>, vector<32x256xbf16>
    tpu.vector_store %arg6[%c160, %c0_17], %7 {strides = array<i32>} : memref<512x256xbf16, #tpu.memory_space<vmem>>, vector<32x256xbf16>,
    %cst_18 = arith.constant 0.000000e+00 : bf16
    %37 = vector.broadcast %cst_18 : bf16 to vector<32x1xbf16>
    %38 = vector.extract_strided_slice %7 {offsets = [0, 1], sizes = [32, 255], strides = [1, 1]} : vector<32x256xbf16> to vector<32x255xbf16>
    %39 = tpu.concatenate %38, %37 in 1 : vector<32x255xbf16>, vector<32x1xbf16> -> vector<32x256xbf16>
    %40 = vector.broadcast %1 : vector<1x256xbf16> to vector<32x256xbf16>
    %41 = arith.mulf %39, %40 : vector<32x256xbf16>
    %c192 = arith.constant 192 : index
    %c0_19 = arith.constant 0 : index
    %42 = vector.load %arg6[%c192, %c0_19] : memref<512x256xbf16, #tpu.memory_space<vmem>>, vector<32x256xbf16>
    tpu.vector_store %arg6[%c192, %c0_19], %41 {strides = array<i32>} : memref<512x256xbf16, #tpu.memory_space<vmem>>, vector<32x256xbf16>,
    %cst_20 = arith.constant 0.000000e+00 : bf16
    %43 = vector.broadcast %cst_20 : bf16 to vector<32x2xbf16>
    %44 = vector.extract_strided_slice %7 {offsets = [0, 2], sizes = [32, 254], strides = [1, 1]} : vector<32x256xbf16> to vector<32x254xbf16>
    %45 = tpu.concatenate %44, %43 in 1 : vector<32x254xbf16>, vector<32x2xbf16> -> vector<32x256xbf16>
    %46 = vector.broadcast %2 : vector<1x256xbf16> to vector<32x256xbf16>
    %47 = arith.mulf %45, %46 : vector<32x256xbf16>
    %c224 = arith.constant 224 : index
    %c0_21 = arith.constant 0 : index
    %48 = vector.load %arg6[%c224, %c0_21] : memref<512x256xbf16, #tpu.memory_space<vmem>>, vector<32x256xbf16>
    tpu.vector_store %arg6[%c224, %c0_21], %47 {strides = array<i32>} : memref<512x256xbf16, #tpu.memory_space<vmem>>, vector<32x256xbf16>,
    %cst_22 = arith.constant 0.000000e+00 : bf16
    %49 = vector.broadcast %cst_22 : bf16 to vector<32x15xbf16>
    %50 = vector.extract_strided_slice %7 {offsets = [0, 15], sizes = [32, 241], strides = [1, 1]} : vector<32x256xbf16> to vector<32x241xbf16>
    %51 = tpu.concatenate %50, %49 in 1 : vector<32x241xbf16>, vector<32x15xbf16> -> vector<32x256xbf16>
    %52 = vector.broadcast %0 : vector<1x256xbf16> to vector<32x256xbf16>
    %53 = arith.mulf %51, %52 : vector<32x256xbf16>
    %c256 = arith.constant 256 : index
    %c0_23 = arith.constant 0 : index
    %54 = vector.load %arg6[%c256, %c0_23] : memref<512x256xbf16, #tpu.memory_space<vmem>>, vector<32x256xbf16>
    tpu.vector_store %arg6[%c256, %c0_23], %53 {strides = array<i32>} : memref<512x256xbf16, #tpu.memory_space<vmem>>, vector<32x256xbf16>,
    %cst_24 = arith.constant 0.000000e+00 : bf16
    %55 = vector.broadcast %cst_24 : bf16 to vector<32x16xbf16>
    %56 = vector.extract_strided_slice %7 {offsets = [0, 16], sizes = [32, 240], strides = [1, 1]} : vector<32x256xbf16> to vector<32x240xbf16>
    %57 = tpu.concatenate %56, %55 in 1 : vector<32x240xbf16>, vector<32x16xbf16> -> vector<32x256xbf16>
    %c288 = arith.constant 288 : index
    %c0_25 = arith.constant 0 : index
    %58 = vector.load %arg6[%c288, %c0_25] : memref<512x256xbf16, #tpu.memory_space<vmem>>, vector<32x256xbf16>
    tpu.vector_store %arg6[%c288, %c0_25], %57 {strides = array<i32>} : memref<512x256xbf16, #tpu.memory_space<vmem>>, vector<32x256xbf16>,
    %cst_26 = arith.constant 0.000000e+00 : bf16
    %59 = vector.broadcast %cst_26 : bf16 to vector<32x17xbf16>
    %60 = vector.extract_strided_slice %7 {offsets = [0, 17], sizes = [32, 239], strides = [1, 1]} : vector<32x256xbf16> to vector<32x239xbf16>
    %61 = tpu.concatenate %60, %59 in 1 : vector<32x239xbf16>, vector<32x17xbf16> -> vector<32x256xbf16>
    %62 = vector.broadcast %1 : vector<1x256xbf16> to vector<32x256xbf16>
    %63 = arith.mulf %61, %62 : vector<32x256xbf16>
    %c320 = arith.constant 320 : index
    %c0_27 = arith.constant 0 : index
    %64 = vector.load %arg6[%c320, %c0_27] : memref<512x256xbf16, #tpu.memory_space<vmem>>, vector<32x256xbf16>
    tpu.vector_store %arg6[%c320, %c0_27], %63 {strides = array<i32>} : memref<512x256xbf16, #tpu.memory_space<vmem>>, vector<32x256xbf16>,
    %cst_28 = arith.constant 0.000000e+00 : bf16
    %65 = vector.broadcast %cst_28 : bf16 to vector<32x18xbf16>
    %66 = vector.extract_strided_slice %7 {offsets = [0, 18], sizes = [32, 238], strides = [1, 1]} : vector<32x256xbf16> to vector<32x238xbf16>
    %67 = tpu.concatenate %66, %65 in 1 : vector<32x238xbf16>, vector<32x18xbf16> -> vector<32x256xbf16>
    %68 = vector.broadcast %2 : vector<1x256xbf16> to vector<32x256xbf16>
    %69 = arith.mulf %67, %68 : vector<32x256xbf16>
    %c352 = arith.constant 352 : index
    %c0_29 = arith.constant 0 : index
    %70 = vector.load %arg6[%c352, %c0_29] : memref<512x256xbf16, #tpu.memory_space<vmem>>, vector<32x256xbf16>
    tpu.vector_store %arg6[%c352, %c0_29], %69 {strides = array<i32>} : memref<512x256xbf16, #tpu.memory_space<vmem>>, vector<32x256xbf16>,
    %cst_30 = arith.constant 0.000000e+00 : bf16
    %71 = vector.broadcast %cst_30 : bf16 to vector<32x31xbf16>
    %72 = vector.extract_strided_slice %7 {offsets = [0, 31], sizes = [32, 225], strides = [1, 1]} : vector<32x256xbf16> to vector<32x225xbf16>
    %73 = tpu.concatenate %72, %71 in 1 : vector<32x225xbf16>, vector<32x31xbf16> -> vector<32x256xbf16>
    %74 = vector.broadcast %0 : vector<1x256xbf16> to vector<32x256xbf16>
    %75 = arith.mulf %73, %74 : vector<32x256xbf16>
    %c384 = arith.constant 384 : index
    %c0_31 = arith.constant 0 : index
    %76 = vector.load %arg6[%c384, %c0_31] : memref<512x256xbf16, #tpu.memory_space<vmem>>, vector<32x256xbf16>
    tpu.vector_store %arg6[%c384, %c0_31], %75 {strides = array<i32>} : memref<512x256xbf16, #tpu.memory_space<vmem>>, vector<32x256xbf16>,
    %cst_32 = arith.constant 0.000000e+00 : bf16
    %77 = vector.broadcast %cst_32 : bf16 to vector<32x32xbf16>
    %78 = vector.extract_strided_slice %7 {offsets = [0, 32], sizes = [32, 224], strides = [1, 1]} : vector<32x256xbf16> to vector<32x224xbf16>
    %79 = tpu.concatenate %78, %77 in 1 : vector<32x224xbf16>, vector<32x32xbf16> -> vector<32x256xbf16>
    %c416 = arith.constant 416 : index
    %c0_33 = arith.constant 0 : index
    %80 = vector.load %arg6[%c416, %c0_33] : memref<512x256xbf16, #tpu.memory_space<vmem>>, vector<32x256xbf16>
    tpu.vector_store %arg6[%c416, %c0_33], %79 {strides = array<i32>} : memref<512x256xbf16, #tpu.memory_space<vmem>>, vector<32x256xbf16>,
    %cst_34 = arith.constant 0.000000e+00 : bf16
    %81 = vector.broadcast %cst_34 : bf16 to vector<32x33xbf16>
    %82 = vector.extract_strided_slice %7 {offsets = [0, 33], sizes = [32, 223], strides = [1, 1]} : vector<32x256xbf16> to vector<32x223xbf16>
    %83 = tpu.concatenate %82, %81 in 1 : vector<32x223xbf16>, vector<32x33xbf16> -> vector<32x256xbf16>
    %84 = vector.broadcast %1 : vector<1x256xbf16> to vector<32x256xbf16>
    %85 = arith.mulf %83, %84 : vector<32x256xbf16>
    %c448 = arith.constant 448 : index
    %c0_35 = arith.constant 0 : index
    %86 = vector.load %arg6[%c448, %c0_35] : memref<512x256xbf16, #tpu.memory_space<vmem>>, vector<32x256xbf16>
    tpu.vector_store %arg6[%c448, %c0_35], %85 {strides = array<i32>} : memref<512x256xbf16, #tpu.memory_space<vmem>>, vector<32x256xbf16>,
    %cst_36 = arith.constant 0.000000e+00 : bf16
    %87 = vector.broadcast %cst_36 : bf16 to vector<32x34xbf16>
    %88 = vector.extract_strided_slice %7 {offsets = [0, 34], sizes = [32, 222], strides = [1, 1]} : vector<32x256xbf16> to vector<32x222xbf16>
    %89 = tpu.concatenate %88, %87 in 1 : vector<32x222xbf16>, vector<32x34xbf16> -> vector<32x256xbf16>
    %90 = vector.broadcast %2 : vector<1x256xbf16> to vector<32x256xbf16>
    %91 = arith.mulf %89, %90 : vector<32x256xbf16>
    %c480 = arith.constant 480 : index
    %c0_37 = arith.constant 0 : index
    %92 = vector.load %arg6[%c480, %c0_37] : memref<512x256xbf16, #tpu.memory_space<vmem>>, vector<32x256xbf16>
    tpu.vector_store %arg6[%c480, %c0_37], %91 {strides = array<i32>} : memref<512x256xbf16, #tpu.memory_space<vmem>>, vector<32x256xbf16>,
    %c0_38 = arith.constant 0 : index
    %c0_39 = arith.constant 0 : index
    %c0_40 = arith.constant 0 : index
    %93 = vector.load %arg2[%c0_38, %c0_39, %c0_40] : memref<5x32x512xbf16, #tpu.memory_space<vmem>>, vector<1x32x512xbf16>
    %94 = vector.shape_cast %93 : vector<1x32x512xbf16> to vector<32x512xbf16>
    %c0_41 = arith.constant 0 : index
    %c0_42 = arith.constant 0 : index
    %95 = vector.load %arg6[%c0_41, %c0_42] : memref<512x256xbf16, #tpu.memory_space<vmem>>, vector<512x256xbf16>
    %cst_43 = arith.constant dense<0.000000e+00> : vector<32x256xf32>
    %96 = tpu.matmul %94, %95, %cst_43 {dimension_numbers = #tpu.dot_dimension_numbers<[1], [0], [0], [1], [0, 0, 1, 1], [], []>} : vector<32x512xbf16>, vector<512x256xbf16>, vector<32x256xf32> -> vector<32x256xf32>
    %c0_44 = arith.constant 0 : index
    %c0_45 = arith.constant 0 : index
    %c0_46 = arith.constant 0 : index
    %97 = vector.load %arg3[%c0_44, %c0_45, %c0_46] : memref<5x32x1xf32, #tpu.memory_space<vmem>>, vector<1x32x1xf32>
    %98 = vector.shape_cast %97 : vector<1x32x1xf32> to vector<32x1xf32>
    %99 = vector.broadcast %98 : vector<32x1xf32> to vector<32x256xf32>
    %100 = arith.addf %96, %99 : vector<32x256xf32>
    %cst_47 = arith.constant 0.000000e+00 : f32
    %101 = vector.broadcast %cst_47 : f32 to vector<32x256xf32>
    %102 = arith.maximumf %100, %101 : vector<32x256xf32>
    %103 = arith.truncf %102 : vector<32x256xf32> to vector<32x256xbf16>
    %cst_48 = arith.constant 0.000000e+00 : bf16
    %104 = vector.broadcast %cst_48 : bf16 to vector<32x17xbf16>
    %105 = vector.extract_strided_slice %103 {offsets = [0, 0], sizes = [32, 239], strides = [1, 1]} : vector<32x256xbf16> to vector<32x239xbf16>
    %106 = tpu.concatenate %104, %105 in 1 : vector<32x17xbf16>, vector<32x239xbf16> -> vector<32x256xbf16>
    %107 = vector.broadcast %0 : vector<1x256xbf16> to vector<32x256xbf16>
    %108 = arith.mulf %106, %107 : vector<32x256xbf16>
    %c0_49 = arith.constant 0 : index
    %c0_50 = arith.constant 0 : index
    %109 = vector.load %arg6[%c0_49, %c0_50] : memref<512x256xbf16, #tpu.memory_space<vmem>>, vector<32x256xbf16>
    tpu.vector_store %arg6[%c0_49, %c0_50], %108 {strides = array<i32>} : memref<512x256xbf16, #tpu.memory_space<vmem>>, vector<32x256xbf16>,
    %cst_51 = arith.constant 0.000000e+00 : bf16
    %110 = vector.broadcast %cst_51 : bf16 to vector<32x16xbf16>
    %111 = vector.extract_strided_slice %103 {offsets = [0, 0], sizes = [32, 240], strides = [1, 1]} : vector<32x256xbf16> to vector<32x240xbf16>
    %112 = tpu.concatenate %110, %111 in 1 : vector<32x16xbf16>, vector<32x240xbf16> -> vector<32x256xbf16>
    %c32_52 = arith.constant 32 : index
    %c0_53 = arith.constant 0 : index
    %113 = vector.load %arg6[%c32_52, %c0_53] : memref<512x256xbf16, #tpu.memory_space<vmem>>, vector<32x256xbf16>
    tpu.vector_store %arg6[%c32_52, %c0_53], %112 {strides = array<i32>} : memref<512x256xbf16, #tpu.memory_space<vmem>>, vector<32x256xbf16>,
    %cst_54 = arith.constant 0.000000e+00 : bf16
    %114 = vector.broadcast %cst_54 : bf16 to vector<32x15xbf16>
    %115 = vector.extract_strided_slice %103 {offsets = [0, 0], sizes = [32, 241], strides = [1, 1]} : vector<32x256xbf16> to vector<32x241xbf16>
    %116 = tpu.concatenate %114, %115 in 1 : vector<32x15xbf16>, vector<32x241xbf16> -> vector<32x256xbf16>
    %117 = vector.broadcast %1 : vector<1x256xbf16> to vector<32x256xbf16>
    %118 = arith.mulf %116, %117 : vector<32x256xbf16>
    %c64_55 = arith.constant 64 : index
    %c0_56 = arith.constant 0 : index
    %119 = vector.load %arg6[%c64_55, %c0_56] : memref<512x256xbf16, #tpu.memory_space<vmem>>, vector<32x256xbf16>
    tpu.vector_store %arg6[%c64_55, %c0_56], %118 {strides = array<i32>} : memref<512x256xbf16, #tpu.memory_space<vmem>>, vector<32x256xbf16>,
    %cst_57 = arith.constant 0.000000e+00 : bf16
    %120 = vector.broadcast %cst_57 : bf16 to vector<32x14xbf16>
    %121 = vector.extract_strided_slice %103 {offsets = [0, 0], sizes = [32, 242], strides = [1, 1]} : vector<32x256xbf16> to vector<32x242xbf16>
    %122 = tpu.concatenate %120, %121 in 1 : vector<32x14xbf16>, vector<32x242xbf16> -> vector<32x256xbf16>
    %123 = vector.broadcast %2 : vector<1x256xbf16> to vector<32x256xbf16>
    %124 = arith.mulf %122, %123 : vector<32x256xbf16>
    %c96_58 = arith.constant 96 : index
    %c0_59 = arith.constant 0 : index
    %125 = vector.load %arg6[%c96_58, %c0_59] : memref<512x256xbf16, #tpu.memory_space<vmem>>, vector<32x256xbf16>
    tpu.vector_store %arg6[%c96_58, %c0_59], %124 {strides = array<i32>} : memref<512x256xbf16, #tpu.memory_space<vmem>>, vector<32x256xbf16>,
    %cst_60 = arith.constant 0.000000e+00 : bf16
    %126 = vector.broadcast %cst_60 : bf16 to vector<32x1xbf16>
    %127 = vector.extract_strided_slice %103 {offsets = [0, 0], sizes = [32, 255], strides = [1, 1]} : vector<32x256xbf16> to vector<32x255xbf16>
    %128 = tpu.concatenate %126, %127 in 1 : vector<32x1xbf16>, vector<32x255xbf16> -> vector<32x256xbf16>
    %129 = vector.broadcast %0 : vector<1x256xbf16> to vector<32x256xbf16>
    %130 = arith.mulf %128, %129 : vector<32x256xbf16>
    %c128_61 = arith.constant 128 : index
    %c0_62 = arith.constant 0 : index
    %131 = vector.load %arg6[%c128_61, %c0_62] : memref<512x256xbf16, #tpu.memory_space<vmem>>, vector<32x256xbf16>
    tpu.vector_store %arg6[%c128_61, %c0_62], %130 {strides = array<i32>} : memref<512x256xbf16, #tpu.memory_space<vmem>>, vector<32x256xbf16>,
    %c160_63 = arith.constant 160 : index
    %c0_64 = arith.constant 0 : index
    %132 = vector.load %arg6[%c160_63, %c0_64] : memref<512x256xbf16, #tpu.memory_space<vmem>>, vector<32x256xbf16>
    tpu.vector_store %arg6[%c160_63, %c0_64], %103 {strides = array<i32>} : memref<512x256xbf16, #tpu.memory_space<vmem>>, vector<32x256xbf16>,
    %cst_65 = arith.constant 0.000000e+00 : bf16
    %133 = vector.broadcast %cst_65 : bf16 to vector<32x1xbf16>
    %134 = vector.extract_strided_slice %103 {offsets = [0, 1], sizes = [32, 255], strides = [1, 1]} : vector<32x256xbf16> to vector<32x255xbf16>
    %135 = tpu.concatenate %134, %133 in 1 : vector<32x255xbf16>, vector<32x1xbf16> -> vector<32x256xbf16>
    %136 = vector.broadcast %1 : vector<1x256xbf16> to vector<32x256xbf16>
    %137 = arith.mulf %135, %136 : vector<32x256xbf16>
    %c192_66 = arith.constant 192 : index
    %c0_67 = arith.constant 0 : index
    %138 = vector.load %arg6[%c192_66, %c0_67] : memref<512x256xbf16, #tpu.memory_space<vmem>>, vector<32x256xbf16>
    tpu.vector_store %arg6[%c192_66, %c0_67], %137 {strides = array<i32>} : memref<512x256xbf16, #tpu.memory_space<vmem>>, vector<32x256xbf16>,
    %cst_68 = arith.constant 0.000000e+00 : bf16
    %139 = vector.broadcast %cst_68 : bf16 to vector<32x2xbf16>
    %140 = vector.extract_strided_slice %103 {offsets = [0, 2], sizes = [32, 254], strides = [1, 1]} : vector<32x256xbf16> to vector<32x254xbf16>
    %141 = tpu.concatenate %140, %139 in 1 : vector<32x254xbf16>, vector<32x2xbf16> -> vector<32x256xbf16>
    %142 = vector.broadcast %2 : vector<1x256xbf16> to vector<32x256xbf16>
    %143 = arith.mulf %141, %142 : vector<32x256xbf16>
    %c224_69 = arith.constant 224 : index
    %c0_70 = arith.constant 0 : index
    %144 = vector.load %arg6[%c224_69, %c0_70] : memref<512x256xbf16, #tpu.memory_space<vmem>>, vector<32x256xbf16>
    tpu.vector_store %arg6[%c224_69, %c0_70], %143 {strides = array<i32>} : memref<512x256xbf16, #tpu.memory_space<vmem>>, vector<32x256xbf16>,
    %cst_71 = arith.constant 0.000000e+00 : bf16
    %145 = vector.broadcast %cst_71 : bf16 to vector<32x15xbf16>
    %146 = vector.extract_strided_slice %103 {offsets = [0, 15], sizes = [32, 241], strides = [1, 1]} : vector<32x256xbf16> to vector<32x241xbf16>
    %147 = tpu.concatenate %146, %145 in 1 : vector<32x241xbf16>, vector<32x15xbf16> -> vector<32x256xbf16>
    %148 = vector.broadcast %0 : vector<1x256xbf16> to vector<32x256xbf16>
    %149 = arith.mulf %147, %148 : vector<32x256xbf16>
    %c256_72 = arith.constant 256 : index
    %c0_73 = arith.constant 0 : index
    %150 = vector.load %arg6[%c256_72, %c0_73] : memref<512x256xbf16, #tpu.memory_space<vmem>>, vector<32x256xbf16>
    tpu.vector_store %arg6[%c256_72, %c0_73], %149 {strides = array<i32>} : memref<512x256xbf16, #tpu.memory_space<vmem>>, vector<32x256xbf16>,
    %cst_74 = arith.constant 0.000000e+00 : bf16
    %151 = vector.broadcast %cst_74 : bf16 to vector<32x16xbf16>
    %152 = vector.extract_strided_slice %103 {offsets = [0, 16], sizes = [32, 240], strides = [1, 1]} : vector<32x256xbf16> to vector<32x240xbf16>
    %153 = tpu.concatenate %152, %151 in 1 : vector<32x240xbf16>, vector<32x16xbf16> -> vector<32x256xbf16>
    %c288_75 = arith.constant 288 : index
    %c0_76 = arith.constant 0 : index
    %154 = vector.load %arg6[%c288_75, %c0_76] : memref<512x256xbf16, #tpu.memory_space<vmem>>, vector<32x256xbf16>
    tpu.vector_store %arg6[%c288_75, %c0_76], %153 {strides = array<i32>} : memref<512x256xbf16, #tpu.memory_space<vmem>>, vector<32x256xbf16>,
    %cst_77 = arith.constant 0.000000e+00 : bf16
    %155 = vector.broadcast %cst_77 : bf16 to vector<32x17xbf16>
    %156 = vector.extract_strided_slice %103 {offsets = [0, 17], sizes = [32, 239], strides = [1, 1]} : vector<32x256xbf16> to vector<32x239xbf16>
    %157 = tpu.concatenate %156, %155 in 1 : vector<32x239xbf16>, vector<32x17xbf16> -> vector<32x256xbf16>
    %158 = vector.broadcast %1 : vector<1x256xbf16> to vector<32x256xbf16>
    %159 = arith.mulf %157, %158 : vector<32x256xbf16>
    %c320_78 = arith.constant 320 : index
    %c0_79 = arith.constant 0 : index
    %160 = vector.load %arg6[%c320_78, %c0_79] : memref<512x256xbf16, #tpu.memory_space<vmem>>, vector<32x256xbf16>
    tpu.vector_store %arg6[%c320_78, %c0_79], %159 {strides = array<i32>} : memref<512x256xbf16, #tpu.memory_space<vmem>>, vector<32x256xbf16>,
    %cst_80 = arith.constant 0.000000e+00 : bf16
    %161 = vector.broadcast %cst_80 : bf16 to vector<32x18xbf16>
    %162 = vector.extract_strided_slice %103 {offsets = [0, 18], sizes = [32, 238], strides = [1, 1]} : vector<32x256xbf16> to vector<32x238xbf16>
    %163 = tpu.concatenate %162, %161 in 1 : vector<32x238xbf16>, vector<32x18xbf16> -> vector<32x256xbf16>
    %164 = vector.broadcast %2 : vector<1x256xbf16> to vector<32x256xbf16>
    %165 = arith.mulf %163, %164 : vector<32x256xbf16>
    %c352_81 = arith.constant 352 : index
    %c0_82 = arith.constant 0 : index
    %166 = vector.load %arg6[%c352_81, %c0_82] : memref<512x256xbf16, #tpu.memory_space<vmem>>, vector<32x256xbf16>
    tpu.vector_store %arg6[%c352_81, %c0_82], %165 {strides = array<i32>} : memref<512x256xbf16, #tpu.memory_space<vmem>>, vector<32x256xbf16>,
    %cst_83 = arith.constant 0.000000e+00 : bf16
    %167 = vector.broadcast %cst_83 : bf16 to vector<32x31xbf16>
    %168 = vector.extract_strided_slice %103 {offsets = [0, 31], sizes = [32, 225], strides = [1, 1]} : vector<32x256xbf16> to vector<32x225xbf16>
    %169 = tpu.concatenate %168, %167 in 1 : vector<32x225xbf16>, vector<32x31xbf16> -> vector<32x256xbf16>
    %170 = vector.broadcast %0 : vector<1x256xbf16> to vector<32x256xbf16>
    %171 = arith.mulf %169, %170 : vector<32x256xbf16>
    %c384_84 = arith.constant 384 : index
    %c0_85 = arith.constant 0 : index
    %172 = vector.load %arg6[%c384_84, %c0_85] : memref<512x256xbf16, #tpu.memory_space<vmem>>, vector<32x256xbf16>
    tpu.vector_store %arg6[%c384_84, %c0_85], %171 {strides = array<i32>} : memref<512x256xbf16, #tpu.memory_space<vmem>>, vector<32x256xbf16>,
    %cst_86 = arith.constant 0.000000e+00 : bf16
    %173 = vector.broadcast %cst_86 : bf16 to vector<32x32xbf16>
    %174 = vector.extract_strided_slice %103 {offsets = [0, 32], sizes = [32, 224], strides = [1, 1]} : vector<32x256xbf16> to vector<32x224xbf16>
    %175 = tpu.concatenate %174, %173 in 1 : vector<32x224xbf16>, vector<32x32xbf16> -> vector<32x256xbf16>
    %c416_87 = arith.constant 416 : index
    %c0_88 = arith.constant 0 : index
    %176 = vector.load %arg6[%c416_87, %c0_88] : memref<512x256xbf16, #tpu.memory_space<vmem>>, vector<32x256xbf16>
    tpu.vector_store %arg6[%c416_87, %c0_88], %175 {strides = array<i32>} : memref<512x256xbf16, #tpu.memory_space<vmem>>, vector<32x256xbf16>,
    %cst_89 = arith.constant 0.000000e+00 : bf16
    %177 = vector.broadcast %cst_89 : bf16 to vector<32x33xbf16>
    %178 = vector.extract_strided_slice %103 {offsets = [0, 33], sizes = [32, 223], strides = [1, 1]} : vector<32x256xbf16> to vector<32x223xbf16>
    %179 = tpu.concatenate %178, %177 in 1 : vector<32x223xbf16>, vector<32x33xbf16> -> vector<32x256xbf16>
    %180 = vector.broadcast %1 : vector<1x256xbf16> to vector<32x256xbf16>
    %181 = arith.mulf %179, %180 : vector<32x256xbf16>
    %c448_90 = arith.constant 448 : index
    %c0_91 = arith.constant 0 : index
    %182 = vector.load %arg6[%c448_90, %c0_91] : memref<512x256xbf16, #tpu.memory_space<vmem>>, vector<32x256xbf16>
    tpu.vector_store %arg6[%c448_90, %c0_91], %181 {strides = array<i32>} : memref<512x256xbf16, #tpu.memory_space<vmem>>, vector<32x256xbf16>,
    %cst_92 = arith.constant 0.000000e+00 : bf16
    %183 = vector.broadcast %cst_92 : bf16 to vector<32x34xbf16>
    %184 = vector.extract_strided_slice %103 {offsets = [0, 34], sizes = [32, 222], strides = [1, 1]} : vector<32x256xbf16> to vector<32x222xbf16>
    %185 = tpu.concatenate %184, %183 in 1 : vector<32x222xbf16>, vector<32x34xbf16> -> vector<32x256xbf16>
    %186 = vector.broadcast %2 : vector<1x256xbf16> to vector<32x256xbf16>
    %187 = arith.mulf %185, %186 : vector<32x256xbf16>
    %c480_93 = arith.constant 480 : index
    %c0_94 = arith.constant 0 : index
    %188 = vector.load %arg6[%c480_93, %c0_94] : memref<512x256xbf16, #tpu.memory_space<vmem>>, vector<32x256xbf16>
    tpu.vector_store %arg6[%c480_93, %c0_94], %187 {strides = array<i32>} : memref<512x256xbf16, #tpu.memory_space<vmem>>, vector<32x256xbf16>,
    %c1 = arith.constant 1 : index
    %c0_95 = arith.constant 0 : index
    %c0_96 = arith.constant 0 : index
    %189 = vector.load %arg2[%c1, %c0_95, %c0_96] : memref<5x32x512xbf16, #tpu.memory_space<vmem>>, vector<1x32x512xbf16>
    %190 = vector.shape_cast %189 : vector<1x32x512xbf16> to vector<32x512xbf16>
    %c0_97 = arith.constant 0 : index
    %c0_98 = arith.constant 0 : index
    %191 = vector.load %arg6[%c0_97, %c0_98] : memref<512x256xbf16, #tpu.memory_space<vmem>>, vector<512x256xbf16>
    %cst_99 = arith.constant dense<0.000000e+00> : vector<32x256xf32>
    %192 = tpu.matmul %190, %191, %cst_99 {dimension_numbers = #tpu.dot_dimension_numbers<[1], [0], [0], [1], [0, 0, 1, 1], [], []>} : vector<32x512xbf16>, vector<512x256xbf16>, vector<32x256xf32> -> vector<32x256xf32>
    %c1_100 = arith.constant 1 : index
    %c0_101 = arith.constant 0 : index
    %c0_102 = arith.constant 0 : index
    %193 = vector.load %arg3[%c1_100, %c0_101, %c0_102] : memref<5x32x1xf32, #tpu.memory_space<vmem>>, vector<1x32x1xf32>
    %194 = vector.shape_cast %193 : vector<1x32x1xf32> to vector<32x1xf32>
    %195 = vector.broadcast %194 : vector<32x1xf32> to vector<32x256xf32>
    %196 = arith.addf %192, %195 : vector<32x256xf32>
    %cst_103 = arith.constant 0.000000e+00 : f32
    %197 = vector.broadcast %cst_103 : f32 to vector<32x256xf32>
    %198 = arith.maximumf %196, %197 : vector<32x256xf32>
    %199 = arith.truncf %198 : vector<32x256xf32> to vector<32x256xbf16>
    %cst_104 = arith.constant 0.000000e+00 : bf16
    %200 = vector.broadcast %cst_104 : bf16 to vector<32x17xbf16>
    %201 = vector.extract_strided_slice %199 {offsets = [0, 0], sizes = [32, 239], strides = [1, 1]} : vector<32x256xbf16> to vector<32x239xbf16>
    %202 = tpu.concatenate %200, %201 in 1 : vector<32x17xbf16>, vector<32x239xbf16> -> vector<32x256xbf16>
    %203 = vector.broadcast %0 : vector<1x256xbf16> to vector<32x256xbf16>
    %204 = arith.mulf %202, %203 : vector<32x256xbf16>
    %c0_105 = arith.constant 0 : index
    %c0_106 = arith.constant 0 : index
    %205 = vector.load %arg6[%c0_105, %c0_106] : memref<512x256xbf16, #tpu.memory_space<vmem>>, vector<32x256xbf16>
    tpu.vector_store %arg6[%c0_105, %c0_106], %204 {strides = array<i32>} : memref<512x256xbf16, #tpu.memory_space<vmem>>, vector<32x256xbf16>,
    %cst_107 = arith.constant 0.000000e+00 : bf16
    %206 = vector.broadcast %cst_107 : bf16 to vector<32x16xbf16>
    %207 = vector.extract_strided_slice %199 {offsets = [0, 0], sizes = [32, 240], strides = [1, 1]} : vector<32x256xbf16> to vector<32x240xbf16>
    %208 = tpu.concatenate %206, %207 in 1 : vector<32x16xbf16>, vector<32x240xbf16> -> vector<32x256xbf16>
    %c32_108 = arith.constant 32 : index
    %c0_109 = arith.constant 0 : index
    %209 = vector.load %arg6[%c32_108, %c0_109] : memref<512x256xbf16, #tpu.memory_space<vmem>>, vector<32x256xbf16>
    tpu.vector_store %arg6[%c32_108, %c0_109], %208 {strides = array<i32>} : memref<512x256xbf16, #tpu.memory_space<vmem>>, vector<32x256xbf16>,
    %cst_110 = arith.constant 0.000000e+00 : bf16
    %210 = vector.broadcast %cst_110 : bf16 to vector<32x15xbf16>
    %211 = vector.extract_strided_slice %199 {offsets = [0, 0], sizes = [32, 241], strides = [1, 1]} : vector<32x256xbf16> to vector<32x241xbf16>
    %212 = tpu.concatenate %210, %211 in 1 : vector<32x15xbf16>, vector<32x241xbf16> -> vector<32x256xbf16>
    %213 = vector.broadcast %1 : vector<1x256xbf16> to vector<32x256xbf16>
    %214 = arith.mulf %212, %213 : vector<32x256xbf16>
    %c64_111 = arith.constant 64 : index
    %c0_112 = arith.constant 0 : index
    %215 = vector.load %arg6[%c64_111, %c0_112] : memref<512x256xbf16, #tpu.memory_space<vmem>>, vector<32x256xbf16>
    tpu.vector_store %arg6[%c64_111, %c0_112], %214 {strides = array<i32>} : memref<512x256xbf16, #tpu.memory_space<vmem>>, vector<32x256xbf16>,
    %cst_113 = arith.constant 0.000000e+00 : bf16
    %216 = vector.broadcast %cst_113 : bf16 to vector<32x14xbf16>
    %217 = vector.extract_strided_slice %199 {offsets = [0, 0], sizes = [32, 242], strides = [1, 1]} : vector<32x256xbf16> to vector<32x242xbf16>
    %218 = tpu.concatenate %216, %217 in 1 : vector<32x14xbf16>, vector<32x242xbf16> -> vector<32x256xbf16>
    %219 = vector.broadcast %2 : vector<1x256xbf16> to vector<32x256xbf16>
    %220 = arith.mulf %218, %219 : vector<32x256xbf16>
    %c96_114 = arith.constant 96 : index
    %c0_115 = arith.constant 0 : index
    %221 = vector.load %arg6[%c96_114, %c0_115] : memref<512x256xbf16, #tpu.memory_space<vmem>>, vector<32x256xbf16>
    tpu.vector_store %arg6[%c96_114, %c0_115], %220 {strides = array<i32>} : memref<512x256xbf16, #tpu.memory_space<vmem>>, vector<32x256xbf16>,
    %cst_116 = arith.constant 0.000000e+00 : bf16
    %222 = vector.broadcast %cst_116 : bf16 to vector<32x1xbf16>
    %223 = vector.extract_strided_slice %199 {offsets = [0, 0], sizes = [32, 255], strides = [1, 1]} : vector<32x256xbf16> to vector<32x255xbf16>
    %224 = tpu.concatenate %222, %223 in 1 : vector<32x1xbf16>, vector<32x255xbf16> -> vector<32x256xbf16>
    %225 = vector.broadcast %0 : vector<1x256xbf16> to vector<32x256xbf16>
    %226 = arith.mulf %224, %225 : vector<32x256xbf16>
    %c128_117 = arith.constant 128 : index
    %c0_118 = arith.constant 0 : index
    %227 = vector.load %arg6[%c128_117, %c0_118] : memref<512x256xbf16, #tpu.memory_space<vmem>>, vector<32x256xbf16>
    tpu.vector_store %arg6[%c128_117, %c0_118], %226 {strides = array<i32>} : memref<512x256xbf16, #tpu.memory_space<vmem>>, vector<32x256xbf16>,
    %c160_119 = arith.constant 160 : index
    %c0_120 = arith.constant 0 : index
    %228 = vector.load %arg6[%c160_119, %c0_120] : memref<512x256xbf16, #tpu.memory_space<vmem>>, vector<32x256xbf16>
    tpu.vector_store %arg6[%c160_119, %c0_120], %199 {strides = array<i32>} : memref<512x256xbf16, #tpu.memory_space<vmem>>, vector<32x256xbf16>,
    %cst_121 = arith.constant 0.000000e+00 : bf16
    %229 = vector.broadcast %cst_121 : bf16 to vector<32x1xbf16>
    %230 = vector.extract_strided_slice %199 {offsets = [0, 1], sizes = [32, 255], strides = [1, 1]} : vector<32x256xbf16> to vector<32x255xbf16>
    %231 = tpu.concatenate %230, %229 in 1 : vector<32x255xbf16>, vector<32x1xbf16> -> vector<32x256xbf16>
    %232 = vector.broadcast %1 : vector<1x256xbf16> to vector<32x256xbf16>
    %233 = arith.mulf %231, %232 : vector<32x256xbf16>
    %c192_122 = arith.constant 192 : index
    %c0_123 = arith.constant 0 : index
    %234 = vector.load %arg6[%c192_122, %c0_123] : memref<512x256xbf16, #tpu.memory_space<vmem>>, vector<32x256xbf16>
    tpu.vector_store %arg6[%c192_122, %c0_123], %233 {strides = array<i32>} : memref<512x256xbf16, #tpu.memory_space<vmem>>, vector<32x256xbf16>,
    %cst_124 = arith.constant 0.000000e+00 : bf16
    %235 = vector.broadcast %cst_124 : bf16 to vector<32x2xbf16>
    %236 = vector.extract_strided_slice %199 {offsets = [0, 2], sizes = [32, 254], strides = [1, 1]} : vector<32x256xbf16> to vector<32x254xbf16>
    %237 = tpu.concatenate %236, %235 in 1 : vector<32x254xbf16>, vector<32x2xbf16> -> vector<32x256xbf16>
    %238 = vector.broadcast %2 : vector<1x256xbf16> to vector<32x256xbf16>
    %239 = arith.mulf %237, %238 : vector<32x256xbf16>
    %c224_125 = arith.constant 224 : index
    %c0_126 = arith.constant 0 : index
    %240 = vector.load %arg6[%c224_125, %c0_126] : memref<512x256xbf16, #tpu.memory_space<vmem>>, vector<32x256xbf16>
    tpu.vector_store %arg6[%c224_125, %c0_126], %239 {strides = array<i32>} : memref<512x256xbf16, #tpu.memory_space<vmem>>, vector<32x256xbf16>,
    %cst_127 = arith.constant 0.000000e+00 : bf16
    %241 = vector.broadcast %cst_127 : bf16 to vector<32x15xbf16>
    %242 = vector.extract_strided_slice %199 {offsets = [0, 15], sizes = [32, 241], strides = [1, 1]} : vector<32x256xbf16> to vector<32x241xbf16>
    %243 = tpu.concatenate %242, %241 in 1 : vector<32x241xbf16>, vector<32x15xbf16> -> vector<32x256xbf16>
    %244 = vector.broadcast %0 : vector<1x256xbf16> to vector<32x256xbf16>
    %245 = arith.mulf %243, %244 : vector<32x256xbf16>
    %c256_128 = arith.constant 256 : index
    %c0_129 = arith.constant 0 : index
    %246 = vector.load %arg6[%c256_128, %c0_129] : memref<512x256xbf16, #tpu.memory_space<vmem>>, vector<32x256xbf16>
    tpu.vector_store %arg6[%c256_128, %c0_129], %245 {strides = array<i32>} : memref<512x256xbf16, #tpu.memory_space<vmem>>, vector<32x256xbf16>,
    %cst_130 = arith.constant 0.000000e+00 : bf16
    %247 = vector.broadcast %cst_130 : bf16 to vector<32x16xbf16>
    %248 = vector.extract_strided_slice %199 {offsets = [0, 16], sizes = [32, 240], strides = [1, 1]} : vector<32x256xbf16> to vector<32x240xbf16>
    %249 = tpu.concatenate %248, %247 in 1 : vector<32x240xbf16>, vector<32x16xbf16> -> vector<32x256xbf16>
    %c288_131 = arith.constant 288 : index
    %c0_132 = arith.constant 0 : index
    %250 = vector.load %arg6[%c288_131, %c0_132] : memref<512x256xbf16, #tpu.memory_space<vmem>>, vector<32x256xbf16>
    tpu.vector_store %arg6[%c288_131, %c0_132], %249 {strides = array<i32>} : memref<512x256xbf16, #tpu.memory_space<vmem>>, vector<32x256xbf16>,
    %cst_133 = arith.constant 0.000000e+00 : bf16
    %251 = vector.broadcast %cst_133 : bf16 to vector<32x17xbf16>
    %252 = vector.extract_strided_slice %199 {offsets = [0, 17], sizes = [32, 239], strides = [1, 1]} : vector<32x256xbf16> to vector<32x239xbf16>
    %253 = tpu.concatenate %252, %251 in 1 : vector<32x239xbf16>, vector<32x17xbf16> -> vector<32x256xbf16>
    %254 = vector.broadcast %1 : vector<1x256xbf16> to vector<32x256xbf16>
    %255 = arith.mulf %253, %254 : vector<32x256xbf16>
    %c320_134 = arith.constant 320 : index
    %c0_135 = arith.constant 0 : index
    %256 = vector.load %arg6[%c320_134, %c0_135] : memref<512x256xbf16, #tpu.memory_space<vmem>>, vector<32x256xbf16>
    tpu.vector_store %arg6[%c320_134, %c0_135], %255 {strides = array<i32>} : memref<512x256xbf16, #tpu.memory_space<vmem>>, vector<32x256xbf16>,
    %cst_136 = arith.constant 0.000000e+00 : bf16
    %257 = vector.broadcast %cst_136 : bf16 to vector<32x18xbf16>
    %258 = vector.extract_strided_slice %199 {offsets = [0, 18], sizes = [32, 238], strides = [1, 1]} : vector<32x256xbf16> to vector<32x238xbf16>
    %259 = tpu.concatenate %258, %257 in 1 : vector<32x238xbf16>, vector<32x18xbf16> -> vector<32x256xbf16>
    %260 = vector.broadcast %2 : vector<1x256xbf16> to vector<32x256xbf16>
    %261 = arith.mulf %259, %260 : vector<32x256xbf16>
    %c352_137 = arith.constant 352 : index
    %c0_138 = arith.constant 0 : index
    %262 = vector.load %arg6[%c352_137, %c0_138] : memref<512x256xbf16, #tpu.memory_space<vmem>>, vector<32x256xbf16>
    tpu.vector_store %arg6[%c352_137, %c0_138], %261 {strides = array<i32>} : memref<512x256xbf16, #tpu.memory_space<vmem>>, vector<32x256xbf16>,
    %cst_139 = arith.constant 0.000000e+00 : bf16
    %263 = vector.broadcast %cst_139 : bf16 to vector<32x31xbf16>
    %264 = vector.extract_strided_slice %199 {offsets = [0, 31], sizes = [32, 225], strides = [1, 1]} : vector<32x256xbf16> to vector<32x225xbf16>
    %265 = tpu.concatenate %264, %263 in 1 : vector<32x225xbf16>, vector<32x31xbf16> -> vector<32x256xbf16>
    %266 = vector.broadcast %0 : vector<1x256xbf16> to vector<32x256xbf16>
    %267 = arith.mulf %265, %266 : vector<32x256xbf16>
    %c384_140 = arith.constant 384 : index
    %c0_141 = arith.constant 0 : index
    %268 = vector.load %arg6[%c384_140, %c0_141] : memref<512x256xbf16, #tpu.memory_space<vmem>>, vector<32x256xbf16>
    tpu.vector_store %arg6[%c384_140, %c0_141], %267 {strides = array<i32>} : memref<512x256xbf16, #tpu.memory_space<vmem>>, vector<32x256xbf16>,
    %cst_142 = arith.constant 0.000000e+00 : bf16
    %269 = vector.broadcast %cst_142 : bf16 to vector<32x32xbf16>
    %270 = vector.extract_strided_slice %199 {offsets = [0, 32], sizes = [32, 224], strides = [1, 1]} : vector<32x256xbf16> to vector<32x224xbf16>
    %271 = tpu.concatenate %270, %269 in 1 : vector<32x224xbf16>, vector<32x32xbf16> -> vector<32x256xbf16>
    %c416_143 = arith.constant 416 : index
    %c0_144 = arith.constant 0 : index
    %272 = vector.load %arg6[%c416_143, %c0_144] : memref<512x256xbf16, #tpu.memory_space<vmem>>, vector<32x256xbf16>
    tpu.vector_store %arg6[%c416_143, %c0_144], %271 {strides = array<i32>} : memref<512x256xbf16, #tpu.memory_space<vmem>>, vector<32x256xbf16>,
    %cst_145 = arith.constant 0.000000e+00 : bf16
    %273 = vector.broadcast %cst_145 : bf16 to vector<32x33xbf16>
    %274 = vector.extract_strided_slice %199 {offsets = [0, 33], sizes = [32, 223], strides = [1, 1]} : vector<32x256xbf16> to vector<32x223xbf16>
    %275 = tpu.concatenate %274, %273 in 1 : vector<32x223xbf16>, vector<32x33xbf16> -> vector<32x256xbf16>
    %276 = vector.broadcast %1 : vector<1x256xbf16> to vector<32x256xbf16>
    %277 = arith.mulf %275, %276 : vector<32x256xbf16>
    %c448_146 = arith.constant 448 : index
    %c0_147 = arith.constant 0 : index
    %278 = vector.load %arg6[%c448_146, %c0_147] : memref<512x256xbf16, #tpu.memory_space<vmem>>, vector<32x256xbf16>
    tpu.vector_store %arg6[%c448_146, %c0_147], %277 {strides = array<i32>} : memref<512x256xbf16, #tpu.memory_space<vmem>>, vector<32x256xbf16>,
    %cst_148 = arith.constant 0.000000e+00 : bf16
    %279 = vector.broadcast %cst_148 : bf16 to vector<32x34xbf16>
    %280 = vector.extract_strided_slice %199 {offsets = [0, 34], sizes = [32, 222], strides = [1, 1]} : vector<32x256xbf16> to vector<32x222xbf16>
    %281 = tpu.concatenate %280, %279 in 1 : vector<32x222xbf16>, vector<32x34xbf16> -> vector<32x256xbf16>
    %282 = vector.broadcast %2 : vector<1x256xbf16> to vector<32x256xbf16>
    %283 = arith.mulf %281, %282 : vector<32x256xbf16>
    %c480_149 = arith.constant 480 : index
    %c0_150 = arith.constant 0 : index
    %284 = vector.load %arg6[%c480_149, %c0_150] : memref<512x256xbf16, #tpu.memory_space<vmem>>, vector<32x256xbf16>
    tpu.vector_store %arg6[%c480_149, %c0_150], %283 {strides = array<i32>} : memref<512x256xbf16, #tpu.memory_space<vmem>>, vector<32x256xbf16>,
    %c2_151 = arith.constant 2 : index
    %c0_152 = arith.constant 0 : index
    %c0_153 = arith.constant 0 : index
    %285 = vector.load %arg2[%c2_151, %c0_152, %c0_153] : memref<5x32x512xbf16, #tpu.memory_space<vmem>>, vector<1x32x512xbf16>
    %286 = vector.shape_cast %285 : vector<1x32x512xbf16> to vector<32x512xbf16>
    %c0_154 = arith.constant 0 : index
    %c0_155 = arith.constant 0 : index
    %287 = vector.load %arg6[%c0_154, %c0_155] : memref<512x256xbf16, #tpu.memory_space<vmem>>, vector<512x256xbf16>
    %cst_156 = arith.constant dense<0.000000e+00> : vector<32x256xf32>
    %288 = tpu.matmul %286, %287, %cst_156 {dimension_numbers = #tpu.dot_dimension_numbers<[1], [0], [0], [1], [0, 0, 1, 1], [], []>} : vector<32x512xbf16>, vector<512x256xbf16>, vector<32x256xf32> -> vector<32x256xf32>
    %c2_157 = arith.constant 2 : index
    %c0_158 = arith.constant 0 : index
    %c0_159 = arith.constant 0 : index
    %289 = vector.load %arg3[%c2_157, %c0_158, %c0_159] : memref<5x32x1xf32, #tpu.memory_space<vmem>>, vector<1x32x1xf32>
    %290 = vector.shape_cast %289 : vector<1x32x1xf32> to vector<32x1xf32>
    %291 = vector.broadcast %290 : vector<32x1xf32> to vector<32x256xf32>
    %292 = arith.addf %288, %291 : vector<32x256xf32>
    %cst_160 = arith.constant 0.000000e+00 : f32
    %293 = vector.broadcast %cst_160 : f32 to vector<32x256xf32>
    %294 = arith.maximumf %292, %293 : vector<32x256xf32>
    %295 = arith.truncf %294 : vector<32x256xf32> to vector<32x256xbf16>
    %cst_161 = arith.constant 0.000000e+00 : bf16
    %296 = vector.broadcast %cst_161 : bf16 to vector<32x17xbf16>
    %297 = vector.extract_strided_slice %295 {offsets = [0, 0], sizes = [32, 239], strides = [1, 1]} : vector<32x256xbf16> to vector<32x239xbf16>
    %298 = tpu.concatenate %296, %297 in 1 : vector<32x17xbf16>, vector<32x239xbf16> -> vector<32x256xbf16>
    %299 = vector.broadcast %0 : vector<1x256xbf16> to vector<32x256xbf16>
    %300 = arith.mulf %298, %299 : vector<32x256xbf16>
    %c0_162 = arith.constant 0 : index
    %c0_163 = arith.constant 0 : index
    %301 = vector.load %arg6[%c0_162, %c0_163] : memref<512x256xbf16, #tpu.memory_space<vmem>>, vector<32x256xbf16>
    tpu.vector_store %arg6[%c0_162, %c0_163], %300 {strides = array<i32>} : memref<512x256xbf16, #tpu.memory_space<vmem>>, vector<32x256xbf16>,
    %cst_164 = arith.constant 0.000000e+00 : bf16
    %302 = vector.broadcast %cst_164 : bf16 to vector<32x16xbf16>
    %303 = vector.extract_strided_slice %295 {offsets = [0, 0], sizes = [32, 240], strides = [1, 1]} : vector<32x256xbf16> to vector<32x240xbf16>
    %304 = tpu.concatenate %302, %303 in 1 : vector<32x16xbf16>, vector<32x240xbf16> -> vector<32x256xbf16>
    %c32_165 = arith.constant 32 : index
    %c0_166 = arith.constant 0 : index
    %305 = vector.load %arg6[%c32_165, %c0_166] : memref<512x256xbf16, #tpu.memory_space<vmem>>, vector<32x256xbf16>
    tpu.vector_store %arg6[%c32_165, %c0_166], %304 {strides = array<i32>} : memref<512x256xbf16, #tpu.memory_space<vmem>>, vector<32x256xbf16>,
    %cst_167 = arith.constant 0.000000e+00 : bf16
    %306 = vector.broadcast %cst_167 : bf16 to vector<32x15xbf16>
    %307 = vector.extract_strided_slice %295 {offsets = [0, 0], sizes = [32, 241], strides = [1, 1]} : vector<32x256xbf16> to vector<32x241xbf16>
    %308 = tpu.concatenate %306, %307 in 1 : vector<32x15xbf16>, vector<32x241xbf16> -> vector<32x256xbf16>
    %309 = vector.broadcast %1 : vector<1x256xbf16> to vector<32x256xbf16>
    %310 = arith.mulf %308, %309 : vector<32x256xbf16>
    %c64_168 = arith.constant 64 : index
    %c0_169 = arith.constant 0 : index
    %311 = vector.load %arg6[%c64_168, %c0_169] : memref<512x256xbf16, #tpu.memory_space<vmem>>, vector<32x256xbf16>
    tpu.vector_store %arg6[%c64_168, %c0_169], %310 {strides = array<i32>} : memref<512x256xbf16, #tpu.memory_space<vmem>>, vector<32x256xbf16>,
    %cst_170 = arith.constant 0.000000e+00 : bf16
    %312 = vector.broadcast %cst_170 : bf16 to vector<32x14xbf16>
    %313 = vector.extract_strided_slice %295 {offsets = [0, 0], sizes = [32, 242], strides = [1, 1]} : vector<32x256xbf16> to vector<32x242xbf16>
    %314 = tpu.concatenate %312, %313 in 1 : vector<32x14xbf16>, vector<32x242xbf16> -> vector<32x256xbf16>
    %315 = vector.broadcast %2 : vector<1x256xbf16> to vector<32x256xbf16>
    %316 = arith.mulf %314, %315 : vector<32x256xbf16>
    %c96_171 = arith.constant 96 : index
    %c0_172 = arith.constant 0 : index
    %317 = vector.load %arg6[%c96_171, %c0_172] : memref<512x256xbf16, #tpu.memory_space<vmem>>, vector<32x256xbf16>
    tpu.vector_store %arg6[%c96_171, %c0_172], %316 {strides = array<i32>} : memref<512x256xbf16, #tpu.memory_space<vmem>>, vector<32x256xbf16>,
    %cst_173 = arith.constant 0.000000e+00 : bf16
    %318 = vector.broadcast %cst_173 : bf16 to vector<32x1xbf16>
    %319 = vector.extract_strided_slice %295 {offsets = [0, 0], sizes = [32, 255], strides = [1, 1]} : vector<32x256xbf16> to vector<32x255xbf16>
    %320 = tpu.concatenate %318, %319 in 1 : vector<32x1xbf16>, vector<32x255xbf16> -> vector<32x256xbf16>
    %321 = vector.broadcast %0 : vector<1x256xbf16> to vector<32x256xbf16>
    %322 = arith.mulf %320, %321 : vector<32x256xbf16>
    %c128_174 = arith.constant 128 : index
    %c0_175 = arith.constant 0 : index
    %323 = vector.load %arg6[%c128_174, %c0_175] : memref<512x256xbf16, #tpu.memory_space<vmem>>, vector<32x256xbf16>
    tpu.vector_store %arg6[%c128_174, %c0_175], %322 {strides = array<i32>} : memref<512x256xbf16, #tpu.memory_space<vmem>>, vector<32x256xbf16>,
    %c160_176 = arith.constant 160 : index
    %c0_177 = arith.constant 0 : index
    %324 = vector.load %arg6[%c160_176, %c0_177] : memref<512x256xbf16, #tpu.memory_space<vmem>>, vector<32x256xbf16>
    tpu.vector_store %arg6[%c160_176, %c0_177], %295 {strides = array<i32>} : memref<512x256xbf16, #tpu.memory_space<vmem>>, vector<32x256xbf16>,
    %cst_178 = arith.constant 0.000000e+00 : bf16
    %325 = vector.broadcast %cst_178 : bf16 to vector<32x1xbf16>
    %326 = vector.extract_strided_slice %295 {offsets = [0, 1], sizes = [32, 255], strides = [1, 1]} : vector<32x256xbf16> to vector<32x255xbf16>
    %327 = tpu.concatenate %326, %325 in 1 : vector<32x255xbf16>, vector<32x1xbf16> -> vector<32x256xbf16>
    %328 = vector.broadcast %1 : vector<1x256xbf16> to vector<32x256xbf16>
    %329 = arith.mulf %327, %328 : vector<32x256xbf16>
    %c192_179 = arith.constant 192 : index
    %c0_180 = arith.constant 0 : index
    %330 = vector.load %arg6[%c192_179, %c0_180] : memref<512x256xbf16, #tpu.memory_space<vmem>>, vector<32x256xbf16>
    tpu.vector_store %arg6[%c192_179, %c0_180], %329 {strides = array<i32>} : memref<512x256xbf16, #tpu.memory_space<vmem>>, vector<32x256xbf16>,
    %cst_181 = arith.constant 0.000000e+00 : bf16
    %331 = vector.broadcast %cst_181 : bf16 to vector<32x2xbf16>
    %332 = vector.extract_strided_slice %295 {offsets = [0, 2], sizes = [32, 254], strides = [1, 1]} : vector<32x256xbf16> to vector<32x254xbf16>
    %333 = tpu.concatenate %332, %331 in 1 : vector<32x254xbf16>, vector<32x2xbf16> -> vector<32x256xbf16>
    %334 = vector.broadcast %2 : vector<1x256xbf16> to vector<32x256xbf16>
    %335 = arith.mulf %333, %334 : vector<32x256xbf16>
    %c224_182 = arith.constant 224 : index
    %c0_183 = arith.constant 0 : index
    %336 = vector.load %arg6[%c224_182, %c0_183] : memref<512x256xbf16, #tpu.memory_space<vmem>>, vector<32x256xbf16>
    tpu.vector_store %arg6[%c224_182, %c0_183], %335 {strides = array<i32>} : memref<512x256xbf16, #tpu.memory_space<vmem>>, vector<32x256xbf16>,
    %cst_184 = arith.constant 0.000000e+00 : bf16
    %337 = vector.broadcast %cst_184 : bf16 to vector<32x15xbf16>
    %338 = vector.extract_strided_slice %295 {offsets = [0, 15], sizes = [32, 241], strides = [1, 1]} : vector<32x256xbf16> to vector<32x241xbf16>
    %339 = tpu.concatenate %338, %337 in 1 : vector<32x241xbf16>, vector<32x15xbf16> -> vector<32x256xbf16>
    %340 = vector.broadcast %0 : vector<1x256xbf16> to vector<32x256xbf16>
    %341 = arith.mulf %339, %340 : vector<32x256xbf16>
    %c256_185 = arith.constant 256 : index
    %c0_186 = arith.constant 0 : index
    %342 = vector.load %arg6[%c256_185, %c0_186] : memref<512x256xbf16, #tpu.memory_space<vmem>>, vector<32x256xbf16>
    tpu.vector_store %arg6[%c256_185, %c0_186], %341 {strides = array<i32>} : memref<512x256xbf16, #tpu.memory_space<vmem>>, vector<32x256xbf16>,
    %cst_187 = arith.constant 0.000000e+00 : bf16
    %343 = vector.broadcast %cst_187 : bf16 to vector<32x16xbf16>
    %344 = vector.extract_strided_slice %295 {offsets = [0, 16], sizes = [32, 240], strides = [1, 1]} : vector<32x256xbf16> to vector<32x240xbf16>
    %345 = tpu.concatenate %344, %343 in 1 : vector<32x240xbf16>, vector<32x16xbf16> -> vector<32x256xbf16>
    %c288_188 = arith.constant 288 : index
    %c0_189 = arith.constant 0 : index
    %346 = vector.load %arg6[%c288_188, %c0_189] : memref<512x256xbf16, #tpu.memory_space<vmem>>, vector<32x256xbf16>
    tpu.vector_store %arg6[%c288_188, %c0_189], %345 {strides = array<i32>} : memref<512x256xbf16, #tpu.memory_space<vmem>>, vector<32x256xbf16>,
    %cst_190 = arith.constant 0.000000e+00 : bf16
    %347 = vector.broadcast %cst_190 : bf16 to vector<32x17xbf16>
    %348 = vector.extract_strided_slice %295 {offsets = [0, 17], sizes = [32, 239], strides = [1, 1]} : vector<32x256xbf16> to vector<32x239xbf16>
    %349 = tpu.concatenate %348, %347 in 1 : vector<32x239xbf16>, vector<32x17xbf16> -> vector<32x256xbf16>
    %350 = vector.broadcast %1 : vector<1x256xbf16> to vector<32x256xbf16>
    %351 = arith.mulf %349, %350 : vector<32x256xbf16>
    %c320_191 = arith.constant 320 : index
    %c0_192 = arith.constant 0 : index
    %352 = vector.load %arg6[%c320_191, %c0_192] : memref<512x256xbf16, #tpu.memory_space<vmem>>, vector<32x256xbf16>
    tpu.vector_store %arg6[%c320_191, %c0_192], %351 {strides = array<i32>} : memref<512x256xbf16, #tpu.memory_space<vmem>>, vector<32x256xbf16>,
    %cst_193 = arith.constant 0.000000e+00 : bf16
    %353 = vector.broadcast %cst_193 : bf16 to vector<32x18xbf16>
    %354 = vector.extract_strided_slice %295 {offsets = [0, 18], sizes = [32, 238], strides = [1, 1]} : vector<32x256xbf16> to vector<32x238xbf16>
    %355 = tpu.concatenate %354, %353 in 1 : vector<32x238xbf16>, vector<32x18xbf16> -> vector<32x256xbf16>
    %356 = vector.broadcast %2 : vector<1x256xbf16> to vector<32x256xbf16>
    %357 = arith.mulf %355, %356 : vector<32x256xbf16>
    %c352_194 = arith.constant 352 : index
    %c0_195 = arith.constant 0 : index
    %358 = vector.load %arg6[%c352_194, %c0_195] : memref<512x256xbf16, #tpu.memory_space<vmem>>, vector<32x256xbf16>
    tpu.vector_store %arg6[%c352_194, %c0_195], %357 {strides = array<i32>} : memref<512x256xbf16, #tpu.memory_space<vmem>>, vector<32x256xbf16>,
    %cst_196 = arith.constant 0.000000e+00 : bf16
    %359 = vector.broadcast %cst_196 : bf16 to vector<32x31xbf16>
    %360 = vector.extract_strided_slice %295 {offsets = [0, 31], sizes = [32, 225], strides = [1, 1]} : vector<32x256xbf16> to vector<32x225xbf16>
    %361 = tpu.concatenate %360, %359 in 1 : vector<32x225xbf16>, vector<32x31xbf16> -> vector<32x256xbf16>
    %362 = vector.broadcast %0 : vector<1x256xbf16> to vector<32x256xbf16>
    %363 = arith.mulf %361, %362 : vector<32x256xbf16>
    %c384_197 = arith.constant 384 : index
    %c0_198 = arith.constant 0 : index
    %364 = vector.load %arg6[%c384_197, %c0_198] : memref<512x256xbf16, #tpu.memory_space<vmem>>, vector<32x256xbf16>
    tpu.vector_store %arg6[%c384_197, %c0_198], %363 {strides = array<i32>} : memref<512x256xbf16, #tpu.memory_space<vmem>>, vector<32x256xbf16>,
    %cst_199 = arith.constant 0.000000e+00 : bf16
    %365 = vector.broadcast %cst_199 : bf16 to vector<32x32xbf16>
    %366 = vector.extract_strided_slice %295 {offsets = [0, 32], sizes = [32, 224], strides = [1, 1]} : vector<32x256xbf16> to vector<32x224xbf16>
    %367 = tpu.concatenate %366, %365 in 1 : vector<32x224xbf16>, vector<32x32xbf16> -> vector<32x256xbf16>
    %c416_200 = arith.constant 416 : index
    %c0_201 = arith.constant 0 : index
    %368 = vector.load %arg6[%c416_200, %c0_201] : memref<512x256xbf16, #tpu.memory_space<vmem>>, vector<32x256xbf16>
    tpu.vector_store %arg6[%c416_200, %c0_201], %367 {strides = array<i32>} : memref<512x256xbf16, #tpu.memory_space<vmem>>, vector<32x256xbf16>,
    %cst_202 = arith.constant 0.000000e+00 : bf16
    %369 = vector.broadcast %cst_202 : bf16 to vector<32x33xbf16>
    %370 = vector.extract_strided_slice %295 {offsets = [0, 33], sizes = [32, 223], strides = [1, 1]} : vector<32x256xbf16> to vector<32x223xbf16>
    %371 = tpu.concatenate %370, %369 in 1 : vector<32x223xbf16>, vector<32x33xbf16> -> vector<32x256xbf16>
    %372 = vector.broadcast %1 : vector<1x256xbf16> to vector<32x256xbf16>
    %373 = arith.mulf %371, %372 : vector<32x256xbf16>
    %c448_203 = arith.constant 448 : index
    %c0_204 = arith.constant 0 : index
    %374 = vector.load %arg6[%c448_203, %c0_204] : memref<512x256xbf16, #tpu.memory_space<vmem>>, vector<32x256xbf16>
    tpu.vector_store %arg6[%c448_203, %c0_204], %373 {strides = array<i32>} : memref<512x256xbf16, #tpu.memory_space<vmem>>, vector<32x256xbf16>,
    %cst_205 = arith.constant 0.000000e+00 : bf16
    %375 = vector.broadcast %cst_205 : bf16 to vector<32x34xbf16>
    %376 = vector.extract_strided_slice %295 {offsets = [0, 34], sizes = [32, 222], strides = [1, 1]} : vector<32x256xbf16> to vector<32x222xbf16>
    %377 = tpu.concatenate %376, %375 in 1 : vector<32x222xbf16>, vector<32x34xbf16> -> vector<32x256xbf16>
    %378 = vector.broadcast %2 : vector<1x256xbf16> to vector<32x256xbf16>
    %379 = arith.mulf %377, %378 : vector<32x256xbf16>
    %c480_206 = arith.constant 480 : index
    %c0_207 = arith.constant 0 : index
    %380 = vector.load %arg6[%c480_206, %c0_207] : memref<512x256xbf16, #tpu.memory_space<vmem>>, vector<32x256xbf16>
    tpu.vector_store %arg6[%c480_206, %c0_207], %379 {strides = array<i32>} : memref<512x256xbf16, #tpu.memory_space<vmem>>, vector<32x256xbf16>,
    %c3_208 = arith.constant 3 : index
    %c0_209 = arith.constant 0 : index
    %c0_210 = arith.constant 0 : index
    %381 = vector.load %arg2[%c3_208, %c0_209, %c0_210] : memref<5x32x512xbf16, #tpu.memory_space<vmem>>, vector<1x32x512xbf16>
    %382 = vector.shape_cast %381 : vector<1x32x512xbf16> to vector<32x512xbf16>
    %c0_211 = arith.constant 0 : index
    %c0_212 = arith.constant 0 : index
    %383 = vector.load %arg6[%c0_211, %c0_212] : memref<512x256xbf16, #tpu.memory_space<vmem>>, vector<512x256xbf16>
    %cst_213 = arith.constant dense<0.000000e+00> : vector<32x256xf32>
    %384 = tpu.matmul %382, %383, %cst_213 {dimension_numbers = #tpu.dot_dimension_numbers<[1], [0], [0], [1], [0, 0, 1, 1], [], []>} : vector<32x512xbf16>, vector<512x256xbf16>, vector<32x256xf32> -> vector<32x256xf32>
    %c3_214 = arith.constant 3 : index
    %c0_215 = arith.constant 0 : index
    %c0_216 = arith.constant 0 : index
    %385 = vector.load %arg3[%c3_214, %c0_215, %c0_216] : memref<5x32x1xf32, #tpu.memory_space<vmem>>, vector<1x32x1xf32>
    %386 = vector.shape_cast %385 : vector<1x32x1xf32> to vector<32x1xf32>
    %387 = vector.broadcast %386 : vector<32x1xf32> to vector<32x256xf32>
    %388 = arith.addf %384, %387 : vector<32x256xf32>
    %cst_217 = arith.constant 0.000000e+00 : f32
    %389 = vector.broadcast %cst_217 : f32 to vector<32x256xf32>
    %390 = arith.maximumf %388, %389 : vector<32x256xf32>
    %391 = arith.truncf %390 : vector<32x256xf32> to vector<32x256xbf16>
    %cst_218 = arith.constant 0.000000e+00 : bf16
    %392 = vector.broadcast %cst_218 : bf16 to vector<32x17xbf16>
    %393 = vector.extract_strided_slice %391 {offsets = [0, 0], sizes = [32, 239], strides = [1, 1]} : vector<32x256xbf16> to vector<32x239xbf16>
    %394 = tpu.concatenate %392, %393 in 1 : vector<32x17xbf16>, vector<32x239xbf16> -> vector<32x256xbf16>
    %395 = vector.broadcast %0 : vector<1x256xbf16> to vector<32x256xbf16>
    %396 = arith.mulf %394, %395 : vector<32x256xbf16>
    %c0_219 = arith.constant 0 : index
    %c0_220 = arith.constant 0 : index
    %397 = vector.load %arg6[%c0_219, %c0_220] : memref<512x256xbf16, #tpu.memory_space<vmem>>, vector<32x256xbf16>
    tpu.vector_store %arg6[%c0_219, %c0_220], %396 {strides = array<i32>} : memref<512x256xbf16, #tpu.memory_space<vmem>>, vector<32x256xbf16>,
    %cst_221 = arith.constant 0.000000e+00 : bf16
    %398 = vector.broadcast %cst_221 : bf16 to vector<32x16xbf16>
    %399 = vector.extract_strided_slice %391 {offsets = [0, 0], sizes = [32, 240], strides = [1, 1]} : vector<32x256xbf16> to vector<32x240xbf16>
    %400 = tpu.concatenate %398, %399 in 1 : vector<32x16xbf16>, vector<32x240xbf16> -> vector<32x256xbf16>
    %c32_222 = arith.constant 32 : index
    %c0_223 = arith.constant 0 : index
    %401 = vector.load %arg6[%c32_222, %c0_223] : memref<512x256xbf16, #tpu.memory_space<vmem>>, vector<32x256xbf16>
    tpu.vector_store %arg6[%c32_222, %c0_223], %400 {strides = array<i32>} : memref<512x256xbf16, #tpu.memory_space<vmem>>, vector<32x256xbf16>,
    %cst_224 = arith.constant 0.000000e+00 : bf16
    %402 = vector.broadcast %cst_224 : bf16 to vector<32x15xbf16>
    %403 = vector.extract_strided_slice %391 {offsets = [0, 0], sizes = [32, 241], strides = [1, 1]} : vector<32x256xbf16> to vector<32x241xbf16>
    %404 = tpu.concatenate %402, %403 in 1 : vector<32x15xbf16>, vector<32x241xbf16> -> vector<32x256xbf16>
    %405 = vector.broadcast %1 : vector<1x256xbf16> to vector<32x256xbf16>
    %406 = arith.mulf %404, %405 : vector<32x256xbf16>
    %c64_225 = arith.constant 64 : index
    %c0_226 = arith.constant 0 : index
    %407 = vector.load %arg6[%c64_225, %c0_226] : memref<512x256xbf16, #tpu.memory_space<vmem>>, vector<32x256xbf16>
    tpu.vector_store %arg6[%c64_225, %c0_226], %406 {strides = array<i32>} : memref<512x256xbf16, #tpu.memory_space<vmem>>, vector<32x256xbf16>,
    %cst_227 = arith.constant 0.000000e+00 : bf16
    %408 = vector.broadcast %cst_227 : bf16 to vector<32x14xbf16>
    %409 = vector.extract_strided_slice %391 {offsets = [0, 0], sizes = [32, 242], strides = [1, 1]} : vector<32x256xbf16> to vector<32x242xbf16>
    %410 = tpu.concatenate %408, %409 in 1 : vector<32x14xbf16>, vector<32x242xbf16> -> vector<32x256xbf16>
    %411 = vector.broadcast %2 : vector<1x256xbf16> to vector<32x256xbf16>
    %412 = arith.mulf %410, %411 : vector<32x256xbf16>
    %c96_228 = arith.constant 96 : index
    %c0_229 = arith.constant 0 : index
    %413 = vector.load %arg6[%c96_228, %c0_229] : memref<512x256xbf16, #tpu.memory_space<vmem>>, vector<32x256xbf16>
    tpu.vector_store %arg6[%c96_228, %c0_229], %412 {strides = array<i32>} : memref<512x256xbf16, #tpu.memory_space<vmem>>, vector<32x256xbf16>,
    %cst_230 = arith.constant 0.000000e+00 : bf16
    %414 = vector.broadcast %cst_230 : bf16 to vector<32x1xbf16>
    %415 = vector.extract_strided_slice %391 {offsets = [0, 0], sizes = [32, 255], strides = [1, 1]} : vector<32x256xbf16> to vector<32x255xbf16>
    %416 = tpu.concatenate %414, %415 in 1 : vector<32x1xbf16>, vector<32x255xbf16> -> vector<32x256xbf16>
    %417 = vector.broadcast %0 : vector<1x256xbf16> to vector<32x256xbf16>
    %418 = arith.mulf %416, %417 : vector<32x256xbf16>
    %c128_231 = arith.constant 128 : index
    %c0_232 = arith.constant 0 : index
    %419 = vector.load %arg6[%c128_231, %c0_232] : memref<512x256xbf16, #tpu.memory_space<vmem>>, vector<32x256xbf16>
    tpu.vector_store %arg6[%c128_231, %c0_232], %418 {strides = array<i32>} : memref<512x256xbf16, #tpu.memory_space<vmem>>, vector<32x256xbf16>,
    %c160_233 = arith.constant 160 : index
    %c0_234 = arith.constant 0 : index
    %420 = vector.load %arg6[%c160_233, %c0_234] : memref<512x256xbf16, #tpu.memory_space<vmem>>, vector<32x256xbf16>
    tpu.vector_store %arg6[%c160_233, %c0_234], %391 {strides = array<i32>} : memref<512x256xbf16, #tpu.memory_space<vmem>>, vector<32x256xbf16>,
    %cst_235 = arith.constant 0.000000e+00 : bf16
    %421 = vector.broadcast %cst_235 : bf16 to vector<32x1xbf16>
    %422 = vector.extract_strided_slice %391 {offsets = [0, 1], sizes = [32, 255], strides = [1, 1]} : vector<32x256xbf16> to vector<32x255xbf16>
    %423 = tpu.concatenate %422, %421 in 1 : vector<32x255xbf16>, vector<32x1xbf16> -> vector<32x256xbf16>
    %424 = vector.broadcast %1 : vector<1x256xbf16> to vector<32x256xbf16>
    %425 = arith.mulf %423, %424 : vector<32x256xbf16>
    %c192_236 = arith.constant 192 : index
    %c0_237 = arith.constant 0 : index
    %426 = vector.load %arg6[%c192_236, %c0_237] : memref<512x256xbf16, #tpu.memory_space<vmem>>, vector<32x256xbf16>
    tpu.vector_store %arg6[%c192_236, %c0_237], %425 {strides = array<i32>} : memref<512x256xbf16, #tpu.memory_space<vmem>>, vector<32x256xbf16>,
    %cst_238 = arith.constant 0.000000e+00 : bf16
    %427 = vector.broadcast %cst_238 : bf16 to vector<32x2xbf16>
    %428 = vector.extract_strided_slice %391 {offsets = [0, 2], sizes = [32, 254], strides = [1, 1]} : vector<32x256xbf16> to vector<32x254xbf16>
    %429 = tpu.concatenate %428, %427 in 1 : vector<32x254xbf16>, vector<32x2xbf16> -> vector<32x256xbf16>
    %430 = vector.broadcast %2 : vector<1x256xbf16> to vector<32x256xbf16>
    %431 = arith.mulf %429, %430 : vector<32x256xbf16>
    %c224_239 = arith.constant 224 : index
    %c0_240 = arith.constant 0 : index
    %432 = vector.load %arg6[%c224_239, %c0_240] : memref<512x256xbf16, #tpu.memory_space<vmem>>, vector<32x256xbf16>
    tpu.vector_store %arg6[%c224_239, %c0_240], %431 {strides = array<i32>} : memref<512x256xbf16, #tpu.memory_space<vmem>>, vector<32x256xbf16>,
    %cst_241 = arith.constant 0.000000e+00 : bf16
    %433 = vector.broadcast %cst_241 : bf16 to vector<32x15xbf16>
    %434 = vector.extract_strided_slice %391 {offsets = [0, 15], sizes = [32, 241], strides = [1, 1]} : vector<32x256xbf16> to vector<32x241xbf16>
    %435 = tpu.concatenate %434, %433 in 1 : vector<32x241xbf16>, vector<32x15xbf16> -> vector<32x256xbf16>
    %436 = vector.broadcast %0 : vector<1x256xbf16> to vector<32x256xbf16>
    %437 = arith.mulf %435, %436 : vector<32x256xbf16>
    %c256_242 = arith.constant 256 : index
    %c0_243 = arith.constant 0 : index
    %438 = vector.load %arg6[%c256_242, %c0_243] : memref<512x256xbf16, #tpu.memory_space<vmem>>, vector<32x256xbf16>
    tpu.vector_store %arg6[%c256_242, %c0_243], %437 {strides = array<i32>} : memref<512x256xbf16, #tpu.memory_space<vmem>>, vector<32x256xbf16>,
    %cst_244 = arith.constant 0.000000e+00 : bf16
    %439 = vector.broadcast %cst_244 : bf16 to vector<32x16xbf16>
    %440 = vector.extract_strided_slice %391 {offsets = [0, 16], sizes = [32, 240], strides = [1, 1]} : vector<32x256xbf16> to vector<32x240xbf16>
    %441 = tpu.concatenate %440, %439 in 1 : vector<32x240xbf16>, vector<32x16xbf16> -> vector<32x256xbf16>
    %c288_245 = arith.constant 288 : index
    %c0_246 = arith.constant 0 : index
    %442 = vector.load %arg6[%c288_245, %c0_246] : memref<512x256xbf16, #tpu.memory_space<vmem>>, vector<32x256xbf16>
    tpu.vector_store %arg6[%c288_245, %c0_246], %441 {strides = array<i32>} : memref<512x256xbf16, #tpu.memory_space<vmem>>, vector<32x256xbf16>,
    %cst_247 = arith.constant 0.000000e+00 : bf16
    %443 = vector.broadcast %cst_247 : bf16 to vector<32x17xbf16>
    %444 = vector.extract_strided_slice %391 {offsets = [0, 17], sizes = [32, 239], strides = [1, 1]} : vector<32x256xbf16> to vector<32x239xbf16>
    %445 = tpu.concatenate %444, %443 in 1 : vector<32x239xbf16>, vector<32x17xbf16> -> vector<32x256xbf16>
    %446 = vector.broadcast %1 : vector<1x256xbf16> to vector<32x256xbf16>
    %447 = arith.mulf %445, %446 : vector<32x256xbf16>
    %c320_248 = arith.constant 320 : index
    %c0_249 = arith.constant 0 : index
    %448 = vector.load %arg6[%c320_248, %c0_249] : memref<512x256xbf16, #tpu.memory_space<vmem>>, vector<32x256xbf16>
    tpu.vector_store %arg6[%c320_248, %c0_249], %447 {strides = array<i32>} : memref<512x256xbf16, #tpu.memory_space<vmem>>, vector<32x256xbf16>,
    %cst_250 = arith.constant 0.000000e+00 : bf16
    %449 = vector.broadcast %cst_250 : bf16 to vector<32x18xbf16>
    %450 = vector.extract_strided_slice %391 {offsets = [0, 18], sizes = [32, 238], strides = [1, 1]} : vector<32x256xbf16> to vector<32x238xbf16>
    %451 = tpu.concatenate %450, %449 in 1 : vector<32x238xbf16>, vector<32x18xbf16> -> vector<32x256xbf16>
    %452 = vector.broadcast %2 : vector<1x256xbf16> to vector<32x256xbf16>
    %453 = arith.mulf %451, %452 : vector<32x256xbf16>
    %c352_251 = arith.constant 352 : index
    %c0_252 = arith.constant 0 : index
    %454 = vector.load %arg6[%c352_251, %c0_252] : memref<512x256xbf16, #tpu.memory_space<vmem>>, vector<32x256xbf16>
    tpu.vector_store %arg6[%c352_251, %c0_252], %453 {strides = array<i32>} : memref<512x256xbf16, #tpu.memory_space<vmem>>, vector<32x256xbf16>,
    %cst_253 = arith.constant 0.000000e+00 : bf16
    %455 = vector.broadcast %cst_253 : bf16 to vector<32x31xbf16>
    %456 = vector.extract_strided_slice %391 {offsets = [0, 31], sizes = [32, 225], strides = [1, 1]} : vector<32x256xbf16> to vector<32x225xbf16>
    %457 = tpu.concatenate %456, %455 in 1 : vector<32x225xbf16>, vector<32x31xbf16> -> vector<32x256xbf16>
    %458 = vector.broadcast %0 : vector<1x256xbf16> to vector<32x256xbf16>
    %459 = arith.mulf %457, %458 : vector<32x256xbf16>
    %c384_254 = arith.constant 384 : index
    %c0_255 = arith.constant 0 : index
    %460 = vector.load %arg6[%c384_254, %c0_255] : memref<512x256xbf16, #tpu.memory_space<vmem>>, vector<32x256xbf16>
    tpu.vector_store %arg6[%c384_254, %c0_255], %459 {strides = array<i32>} : memref<512x256xbf16, #tpu.memory_space<vmem>>, vector<32x256xbf16>,
    %cst_256 = arith.constant 0.000000e+00 : bf16
    %461 = vector.broadcast %cst_256 : bf16 to vector<32x32xbf16>
    %462 = vector.extract_strided_slice %391 {offsets = [0, 32], sizes = [32, 224], strides = [1, 1]} : vector<32x256xbf16> to vector<32x224xbf16>
    %463 = tpu.concatenate %462, %461 in 1 : vector<32x224xbf16>, vector<32x32xbf16> -> vector<32x256xbf16>
    %c416_257 = arith.constant 416 : index
    %c0_258 = arith.constant 0 : index
    %464 = vector.load %arg6[%c416_257, %c0_258] : memref<512x256xbf16, #tpu.memory_space<vmem>>, vector<32x256xbf16>
    tpu.vector_store %arg6[%c416_257, %c0_258], %463 {strides = array<i32>} : memref<512x256xbf16, #tpu.memory_space<vmem>>, vector<32x256xbf16>,
    %cst_259 = arith.constant 0.000000e+00 : bf16
    %465 = vector.broadcast %cst_259 : bf16 to vector<32x33xbf16>
    %466 = vector.extract_strided_slice %391 {offsets = [0, 33], sizes = [32, 223], strides = [1, 1]} : vector<32x256xbf16> to vector<32x223xbf16>
    %467 = tpu.concatenate %466, %465 in 1 : vector<32x223xbf16>, vector<32x33xbf16> -> vector<32x256xbf16>
    %468 = vector.broadcast %1 : vector<1x256xbf16> to vector<32x256xbf16>
    %469 = arith.mulf %467, %468 : vector<32x256xbf16>
    %c448_260 = arith.constant 448 : index
    %c0_261 = arith.constant 0 : index
    %470 = vector.load %arg6[%c448_260, %c0_261] : memref<512x256xbf16, #tpu.memory_space<vmem>>, vector<32x256xbf16>
    tpu.vector_store %arg6[%c448_260, %c0_261], %469 {strides = array<i32>} : memref<512x256xbf16, #tpu.memory_space<vmem>>, vector<32x256xbf16>,
    %cst_262 = arith.constant 0.000000e+00 : bf16
    %471 = vector.broadcast %cst_262 : bf16 to vector<32x34xbf16>
    %472 = vector.extract_strided_slice %391 {offsets = [0, 34], sizes = [32, 222], strides = [1, 1]} : vector<32x256xbf16> to vector<32x222xbf16>
    %473 = tpu.concatenate %472, %471 in 1 : vector<32x222xbf16>, vector<32x34xbf16> -> vector<32x256xbf16>
    %474 = vector.broadcast %2 : vector<1x256xbf16> to vector<32x256xbf16>
    %475 = arith.mulf %473, %474 : vector<32x256xbf16>
    %c480_263 = arith.constant 480 : index
    %c0_264 = arith.constant 0 : index
    %476 = vector.load %arg6[%c480_263, %c0_264] : memref<512x256xbf16, #tpu.memory_space<vmem>>, vector<32x256xbf16>
    tpu.vector_store %arg6[%c480_263, %c0_264], %475 {strides = array<i32>} : memref<512x256xbf16, #tpu.memory_space<vmem>>, vector<32x256xbf16>,
    %c4 = arith.constant 4 : index
    %c0_265 = arith.constant 0 : index
    %c0_266 = arith.constant 0 : index
    %477 = vector.load %arg2[%c4, %c0_265, %c0_266] : memref<5x32x512xbf16, #tpu.memory_space<vmem>>, vector<1x32x512xbf16>
    %478 = vector.shape_cast %477 : vector<1x32x512xbf16> to vector<32x512xbf16>
    %c0_267 = arith.constant 0 : index
    %c0_268 = arith.constant 0 : index
    %479 = vector.load %arg6[%c0_267, %c0_268] : memref<512x256xbf16, #tpu.memory_space<vmem>>, vector<512x256xbf16>
    %cst_269 = arith.constant dense<0.000000e+00> : vector<32x256xf32>
    %480 = tpu.matmul %478, %479, %cst_269 {dimension_numbers = #tpu.dot_dimension_numbers<[1], [0], [0], [1], [0, 0, 1, 1], [], []>} : vector<32x512xbf16>, vector<512x256xbf16>, vector<32x256xf32> -> vector<32x256xf32>
    %c4_270 = arith.constant 4 : index
    %c0_271 = arith.constant 0 : index
    %c0_272 = arith.constant 0 : index
    %481 = vector.load %arg3[%c4_270, %c0_271, %c0_272] : memref<5x32x1xf32, #tpu.memory_space<vmem>>, vector<1x32x1xf32>
    %482 = vector.shape_cast %481 : vector<1x32x1xf32> to vector<32x1xf32>
    %483 = vector.broadcast %482 : vector<32x1xf32> to vector<32x256xf32>
    %484 = arith.addf %480, %483 : vector<32x256xf32>
    %485 = arith.negf %484 : vector<32x256xf32>
    %486 = math.exp %485 : vector<32x256xf32>
    %cst_273 = arith.constant 1.000000e+00 : f32
    %487 = vector.broadcast %cst_273 : f32 to vector<32x256xf32>
    %488 = arith.addf %487, %486 : vector<32x256xf32>
    %489 = arith.divf %487, %488 : vector<32x256xf32>
    %490 = vector.extract_strided_slice %489 {offsets = [0, 0], sizes = [4, 256], strides = [1, 1]} : vector<32x256xf32> to vector<4x256xf32>
    %c0_274 = arith.constant 0 : index
    %c0_275 = arith.constant 0 : index
    %c0_276 = arith.constant 0 : index
    %491 = vector.load %arg5[%c0_274, %c0_275, %c0_276] : memref<1x4x256xf32, #tpu.memory_space<vmem>>, vector<1x4x256xf32>
    %492 = vector.shape_cast %491 : vector<1x4x256xf32> to vector<4x256xf32>
    %493 = vector.shape_cast %490 : vector<4x256xf32> to vector<1x4x256xf32>
    tpu.vector_store %arg5[%c0_274, %c0_275, %c0_276], %493 {strides = array<i32>} : memref<1x4x256xf32, #tpu.memory_space<vmem>>, vector<1x4x256xf32>,
    return
  }
  func.func @transform_0(%arg0: i32) -> (i32, i32, i32) {
    %c0_i32 = arith.constant 0 : i32
    %c0_i32_0 = arith.constant 0 : i32
    %c0_i32_1 = arith.constant 0 : i32
    return %arg0, %c0_i32, %c0_i32_0 : i32, i32, i32
  }
  func.func @transform_1(%arg0: i32) -> (i32, i32, i32) {
    %c0_i32 = arith.constant 0 : i32
    %c0_i32_0 = arith.constant 0 : i32
    %c0_i32_1 = arith.constant 0 : i32
    %c0_i32_2 = arith.constant 0 : i32
    return %c0_i32, %c0_i32_0, %c0_i32_1 : i32, i32, i32
  }
  func.func @transform_2(%arg0: i32) -> (i32, i32, i32) {
    %c0_i32 = arith.constant 0 : i32
    %c0_i32_0 = arith.constant 0 : i32
    %c0_i32_1 = arith.constant 0 : i32
    %c0_i32_2 = arith.constant 0 : i32
    return %c0_i32, %c0_i32_0, %c0_i32_1 : i32, i32, i32
  }
  func.func @transform_3(%arg0: i32) -> (i32, i32) {
    %c0_i32 = arith.constant 0 : i32
    %c0_i32_0 = arith.constant 0 : i32
    %c0_i32_1 = arith.constant 0 : i32
    return %c0_i32, %c0_i32_0 : i32, i32
  }
  func.func @transform_4(%arg0: i32) -> (i32, i32, i32) {
    %c0_i32 = arith.constant 0 : i32
    %c0_i32_0 = arith.constant 0 : i32
    %c0_i32_1 = arith.constant 0 : i32
    return %arg0, %c0_i32, %c0_i32_0 : i32, i32, i32
  }
}

</mosaic_0001>

<llo_original>
// kernel: generator_forward.1
$region0: #{generator_forward.1}
  #allocation0 [shape = 'u32[]', space=smem, size = 0x4, offset = 0x4, fixed_abs, tag = 'smem constant byte address 0x4 - core index']
  #allocation1 [shape = 'u32[144,128]{1,0:T(1,128)}', space=vmem, size = 0x12000, scoped, tag = 'internal scratch']
  #allocation2 [shape = 'bf16[512,256]{1,0:T(16,128)(2,1)}', space=vmem, size = 0x40000, scoped, tag = 'scratch operand']
  %s0 = inlined_call_operand.vmem [shape: f32[2,4,256], index: 0, kind: input, shape index: {}]
  %s1 = inlined_call_operand.vmem [shape: bf16[5,32,512], index: 1, kind: input, shape index: {}]
  %s2 = inlined_call_operand.vmem [shape: f32[5,32,1], index: 2, kind: input, shape index: {}]
  %s3 = inlined_call_operand.vmem [shape: bf16[4,256], index: 3, kind: input, shape index: {}]
  %s4 = inlined_call_operand.vmem [shape: f32[2,4,256], index: 4, kind: output, shape index: {}]
  %s5 = sld [smem:[#allocation0]]
  $region49: #{generator_forward.1} parent=0
    _
  %s7 = ssub.s32 1, %s5
  %s8 = scalar_select 0, %s7, %s5
  loop: start=0, step=1, limit=4
  $region2: #{generator_forward.1} parent=0 // loop_pre_header
    _
  $region3: #{generator_forward.1} parent=0 // loop_header
    %s10 = sphi 0, %s14
    %p11 = scmp.ge.s32.totalorder %s10, 4
    %s20 = sphi 0, %s22
    %s23 = sphi 0, %s20
    %s24 = sphi 0, %s23
    %s40 = sphi 0, %s24
    %s44 = sphi 0, %s44
    %s46 = sphi 0, %s44
    %s47 = sphi 0, %s46
    %s61 = sphi 0, %s47
    %s65 = sphi 0, %s65
    %s67 = sphi 0, %s65
    %s68 = sphi 0, %s67
    %s82 = sphi 0, %s68
    %s86 = sphi 0, %s86
    %s88 = sphi 0, %s86
    %s89 = sphi 0, %s88
    %s103 = sphi 0, %s89
    %s109 = sphi 0, %s111
    %s112 = sphi 0, %s109
    %s113 = sphi 0, %s112
    %s129 = sphi 0, %s113
  $region4: #{generator_forward.1} parent=0 // loop_header_branch
    %13 = sbr.rel (%p11) target = $region8
  $region5: #{generator_forward.1} parent=0 // loop_body
    %s15 = ssub.s32 %s10, 1
    %s16 = ssub.s32 %s10, 2
    %s17 = sadd.s32 %s10, 1
    %s18 = ssub.s32 %s10, %s17
    %p19 = scmp.eq.s32.totalorder %s18, 0
    %s21 = sadd.s32 %s20, 1
    %s22 = scalar_select %p19, %s20, %s21
    %p25 = pneg %p19
    %p26 = scmp.eq.s32.totalorder %s10, 1
    %p27 = por %p25, %p26
    %p28 = scmp.ne.s32.totalorder %s20, %s23
    %p29 = scmp.eq.s32.totalorder %s10, 0
    %p30 = por %p28, %p29
    %p31 = scmp.ne.s32.totalorder %s20, %s23
    %p32 = scmp.eq.s32.totalorder %s15, 1
    %p33 = por %p31, %p32
    %p34 = scmp.ne.s32.totalorder %s23, %s24
    %p35 = scmp.eq.s32.totalorder %s15, 0
    %p36 = por %p34, %p35
    %p37 = scmp.ne.s32.totalorder %s23, %s24
    %p38 = scmp.eq.s32.totalorder %s16, 1
    %p39 = por %p37, %p38
    %p41 = scmp.ne.s32.totalorder %s24, %s40
    %p42 = scmp.eq.s32.totalorder %s16, 0
    %p43 = por %p41, %p42
    %s45 = sadd.s32 %s44, 1
    %p48 = scmp.eq.s32.totalorder %s10, 1
    %p49 = scmp.ne.s32.totalorder %s44, %s46
    %p50 = scmp.eq.s32.totalorder %s10, 0
    %p51 = por %p49, %p50
    %p52 = scmp.ne.s32.totalorder %s44, %s46
    %p53 = scmp.eq.s32.totalorder %s15, 1
    %p54 = por %p52, %p53
    %p55 = scmp.ne.s32.totalorder %s46, %s47
    %p56 = scmp.eq.s32.totalorder %s15, 0
    %p57 = por %p55, %p56
    %p58 = scmp.ne.s32.totalorder %s46, %s47
    %p59 = scmp.eq.s32.totalorder %s16, 1
    %p60 = por %p58, %p59
    %p62 = scmp.ne.s32.totalorder %s47, %s61
    %p63 = scmp.eq.s32.totalorder %s16, 0
    %p64 = por %p62, %p63
    %s66 = sadd.s32 %s65, 1
    %p69 = scmp.eq.s32.totalorder %s10, 1
    %p70 = scmp.ne.s32.totalorder %s65, %s67
    %p71 = scmp.eq.s32.totalorder %s10, 0
    %p72 = por %p70, %p71
    %p73 = scmp.ne.s32.totalorder %s65, %s67
    %p74 = scmp.eq.s32.totalorder %s15, 1
    %p75 = por %p73, %p74
    %p76 = scmp.ne.s32.totalorder %s67, %s68
    %p77 = scmp.eq.s32.totalorder %s15, 0
    %p78 = por %p76, %p77
    %p79 = scmp.ne.s32.totalorder %s67, %s68
    %p80 = scmp.eq.s32.totalorder %s16, 1
    %p81 = por %p79, %p80
    %p83 = scmp.ne.s32.totalorder %s68, %s82
    %p84 = scmp.eq.s32.totalorder %s16, 0
    %p85 = por %p83, %p84
    %s87 = sadd.s32 %s86, 1
    %p90 = scmp.eq.s32.totalorder %s10, 1
    %p91 = scmp.ne.s32.totalorder %s86, %s88
    %p92 = scmp.eq.s32.totalorder %s10, 0
    %p93 = por %p91, %p92
    %p94 = scmp.ne.s32.totalorder %s86, %s88
    %p95 = scmp.eq.s32.totalorder %s15, 1
    %p96 = por %p94, %p95
    %p97 = scmp.ne.s32.totalorder %s88, %s89
    %p98 = scmp.eq.s32.totalorder %s15, 0
    %p99 = por %p97, %p98
    %p100 = scmp.ne.s32.totalorder %s88, %s89
    %p101 = scmp.eq.s32.totalorder %s16, 1
    %p102 = por %p100, %p101
    %p104 = scmp.ne.s32.totalorder %s89, %s103
    %p105 = scmp.eq.s32.totalorder %s16, 0
    %p106 = por %p104, %p105
    %s107 = ssub.s32 %s10, %s17
    %p108 = scmp.eq.s32.totalorder %s107, 0
    %s110 = sadd.s32 %s109, 1
    %s111 = scalar_select %p108, %s109, %s110
    %p114 = pneg %p108
    %p115 = scmp.eq.s32.totalorder %s10, 1
    %p116 = por %p114, %p115
    %p117 = scmp.ne.s32.totalorder %s109, %s112
    %p118 = scmp.eq.s32.totalorder %s10, 0
    %p119 = por %p117, %p118
    %p120 = scmp.ne.s32.totalorder %s109, %s112
    %p121 = scmp.eq.s32.totalorder %s15, 1
    %p122 = por %p120, %p121
    %p123 = scmp.ne.s32.totalorder %s112, %s113
    %p124 = scmp.eq.s32.totalorder %s15, 0
    %p125 = por %p123, %p124
    %p126 = scmp.ne.s32.totalorder %s112, %s113
    %p127 = scmp.eq.s32.totalorder %s16, 1
    %p128 = por %p126, %p127
    %p130 = scmp.ne.s32.totalorder %s113, %s129
    %p131 = scmp.eq.s32.totalorder %s16, 0
    %p132 = por %p130, %p131
    %p133 = scmp.le.s32.totalorder 1, %s10
    %p134 = scmp.lt.s32.totalorder %s10, 3
    %p135 = pnand %p133, %p134
    %p136 = pneg %p135
    // Predicated region
    $region9: #{generator_forward.1} parent=5 // pred_check
      _
    $region10: #{generator_forward.1} parent=5 // pred_check_branch
      %138 = sbr.rel (%p135) target = $region12
    $region11: #{generator_forward.1} parent=5 // pred_region
      %s139 = ssub.s32 %s10, 1
      // Predicated region
      $region13: #{generator_forward.1} parent=11 // pred_check
        %p140 = pneg %p57
      $region14: #{generator_forward.1} parent=11 // pred_check_branch
        %142 = sbr.rel (%p140) target = $region16
      $region15: #{generator_forward.1} parent=11 // pred_region
        _
      $region16: #{generator_forward.1} parent=11 // pred_fallthru
        _
      // Predicated region
      $region17: #{generator_forward.1} parent=11 // pred_check
        %p143 = pneg %p78
      $region18: #{generator_forward.1} parent=11 // pred_check_branch
        %145 = sbr.rel (%p143) target = $region20
      $region19: #{generator_forward.1} parent=11 // pred_region
        _
      $region20: #{generator_forward.1} parent=11 // pred_fallthru
        _
      // Predicated region
      $region21: #{generator_forward.1} parent=11 // pred_check
        %p146 = pneg %p99
      $region22: #{generator_forward.1} parent=11 // pred_check_branch
        %148 = sbr.rel (%p146) target = $region24
      $region23: #{generator_forward.1} parent=11 // pred_region
        _
      $region24: #{generator_forward.1} parent=11 // pred_fallthru
        _
    $region12: #{generator_forward.1} parent=5 // pred_fallthru
      _
    %p149 = scmp.lt.s32.totalorder %s10, 2
    // Predicated region
    $region25: #{generator_forward.1} parent=5 // pred_check
      %p150 = pneg %p149
    $region26: #{generator_forward.1} parent=5 // pred_check_branch
      %152 = sbr.rel (%p150) target = $region28
    $region27: #{generator_forward.1} parent=5 // pred_region
      // Predicated region
      $region29: #{generator_forward.1} parent=27 // pred_check
        %p153 = pneg %p30
      $region30: #{generator_forward.1} parent=27 // pred_check_branch
        %155 = sbr.rel (%p153) target = $region32
      $region31: #{generator_forward.1} parent=27 // pred_region
        %p156 = scmp.lt.s32.totalorder %s10, 1
        %s157 = scalar_select %p156, %s10, 1
        %s158 = smul.addr %s157, 2
        %s159 = smul.addr %s158, 4
        %s160 = scalar_lea.vmem %s0, %s159
      $region32: #{generator_forward.1} parent=27 // pred_fallthru
        _
    $region28: #{generator_forward.1} parent=5 // pred_fallthru
      _
    %p161 = scmp.le.s32.totalorder 1, %s10
    %p162 = scmp.lt.s32.totalorder %s10, 3
    %p163 = pnand %p161, %p162
    %p164 = pneg %p163
    // Predicated region
    $region33: #{generator_forward.1} parent=5 // pred_check
      _
    $region34: #{generator_forward.1} parent=5 // pred_check_branch
      %166 = sbr.rel (%p163) target = $region36
    $region35: #{generator_forward.1} parent=5 // pred_region
      %s167 = ssub.s32 %s10, 1
      %p168 = scmp.lt.s32.totalorder %s15, 1
      %s169 = scalar_select %p168, %s15, 1
      %s170 = smul.addr %s169, 2
      %s171 = smul.addr %s170, 4
      %s172 = scalar_lea.vmem %s0, %s171
      %p173 = pneg %p36
      %p174 = pneg %p33
      %p175 = pneg %p57
      %p176 = pneg %p54
      %p177 = pneg %p78
      %p178 = pneg %p75
      %p179 = pneg %p99
      %p180 = pneg %p96
      %p181 = pneg %p125
      %p182 = pneg %p122
      %p183 = scmp.lt.s32.totalorder %s15, 1
      %s184 = scalar_select %p183, %s15, 1
      %s185 = smul.addr %s184, 2
      %s186 = smul.addr %s185, 4
      %s187 = scalar_lea.vmem %s4, %s186
      %p188 = scmp.lt.s32.totalorder %s15, 1
      %s189 = scalar_select %p188, %s15, 1
      %s190 = smul.addr %s189, 2
      %s191 = smul.addr %s190, 4
      %s192 = scalar_lea.vmem %s0, %s191
      %p193 = scmp.lt.s32.totalorder %s15, 1
      %s194 = scalar_select %p193, %s15, 1
      %s195 = smul.addr %s194, 2
      %s196 = smul.addr %s195, 4
      %s197 = scalar_lea.vmem %s4, %s196
      %v199 = vld [vmem:[%s3] sm:$0x5]
      %v200 = vld [vmem:[%s3] sm:$0xa]
      %v201 = vld [vmem:[%s192] sm:$0xff]
      %v203 = vcombine.high %v201, %v201
      %vm205 = vcmask 1043456
      %v206 = vsel %vm205, %v201, 0.0
      %v207 = vsel %vm205, %v203, 0.0
      %v208 = vpack.c.bf16 0.0, %v206
      %v209 = vpack.c.bf16 0.0, %v207
      %v210 = vpack.c.bf16 0.0, 0.0
      %214 = vrot.lane.b32.xlu0 %v208, 17
      %v215 = vpop.permute.xlu0 %214
      %216 = vrot.lane.b32.xlu0 %v209, 17
      %v217 = vpop.permute.xlu0 %216
      %218 = vrot.lane.b32.xlu0 %v210, 17
      %v219 = vpop.permute.xlu0 %218
      %vm220 = vcmask 138240
      %v221 = vsel %vm220, %v215, %v217
      %vm224 = vcmask 138240
      %v227 = vsel %vm224, 0, %v215
      %v230 = vsel %vm224, 0, %v219
      %v234 = vunpack.c.l.s4 1983009808
      %v235 = vunpack.c.0.s8 %v234
      %v236 = vlaneseq
      %v237 = vshrl.u32 %v236, 7
      %v238 = vsub.s32 %v235, %v237
      %v239 = vrot.slane %v199, %v238
      %v240 = vcombine.high %v239, %v239
      %v242 = vpack.i.b16 %v239, %v239
      %v244 = vlaneseq
      %v245 = vshrl.u32 %v244, 7
      %v246 = vsub.s32 0, %v245
      %v247 = vrot.slane %v242, %v246
      %v249 = vpack.i.b16 %v240, %v240
      %v251 = vlaneseq
      %v252 = vshrl.u32 %v251, 7
      %v253 = vsub.s32 0, %v252
      %v254 = vrot.slane %v249, %v253
      %v255 = vmul.bf16 %v227, %v247
      %v256 = vmul.bf16 %v221, %v254
      %v257 = vmul.bf16 %v230, %v247
      %v258 = vmul.bf16 %v219, %v254
      %259 = vst [vmem:[#allocation2] sm:$0xff] %v255
      %260 = vst [vmem:[#allocation2 + $0x8] sm:$0xff] %v256
      %261 = vst [vmem:[#allocation2 + $0x10] sm:$0xff] %v257
      %262 = vst [vmem:[#allocation2 + $0x18] sm:$0xff] %v258
      %263 = vrot.lane.b32.xlu0 %v208, 16
      %v264 = vpop.permute.xlu0 %263
      %265 = vrot.lane.b32.xlu0 %v209, 16
      %v266 = vpop.permute.xlu0 %265
      %267 = vrot.lane.b32.xlu0 %v210, 16
      %v268 = vpop.permute.xlu0 %267
      %vm269 = vcmask 130048
      %v270 = vsel %vm269, %v264, %v266
      %vm273 = vcmask 130048
      %v275 = vsel %vm273, 0, %v264
      %v278 = vsel %vm273, 0, %v268
      %280 = vst [vmem:[#allocation2 + $0x20] sm:$0xff] %v275
      %281 = vst [vmem:[#allocation2 + $0x28] sm:$0xff] %v270
      %282 = vst [vmem:[#allocation2 + $0x30] sm:$0xff] %v278
      %283 = vst [vmem:[#allocation2 + $0x38] sm:$0xff] %v268
      %284 = vrot.lane.b32.xlu0 %v208, 15
      %v285 = vpop.permute.xlu0 %284
      %286 = vrot.lane.b32.xlu0 %v209, 15
      %v287 = vpop.permute.xlu0 %286
      %288 = vrot.lane.b32.xlu0 %v210, 15
      %v289 = vpop.permute.xlu0 %288
      %vm290 = vcmask 121856
      %v291 = vsel %vm290, %v285, %v287
      %vm294 = vcmask 121856
      %v296 = vsel %vm294, 0, %v285
      %v299 = vsel %vm294, 0, %v289
      %v303 = vunpack.c.l.s4 1983009808
      %v304 = vunpack.c.0.s8 %v303
      %v305 = vlaneseq
      %v306 = vshrl.u32 %v305, 7
      %v307 = vsub.s32 %v304, %v306
      %v308 = vrot.slane %v200, %v307
      %v309 = vcombine.high %v308, %v308
      %v311 = vpack.i.b16 %v308, %v308
      %v313 = vlaneseq
      %v314 = vshrl.u32 %v313, 7
      %v315 = vsub.s32 1, %v314
      %v316 = vrot.slane %v311, %v315
      %v318 = vpack.i.b16 %v309, %v309
      %v320 = vlaneseq
      %v321 = vshrl.u32 %v320, 7
      %v322 = vsub.s32 1, %v321
      %v323 = vrot.slane %v318, %v322
      %v324 = vmul.bf16 %v296, %v316
      %v325 = vmul.bf16 %v291, %v323
      %v326 = vmul.bf16 %v299, %v316
      %v327 = vmul.bf16 %v289, %v323
      %328 = vst [vmem:[#allocation2 + $0x40] sm:$0xff] %v324
      %329 = vst [vmem:[#allocation2 + $0x48] sm:$0xff] %v325
      %330 = vst [vmem:[#allocation2 + $0x50] sm:$0xff] %v326
      %331 = vst [vmem:[#allocation2 + $0x58] sm:$0xff] %v327
      %332 = vrot.lane.b32.xlu0 %v208, 14
      %v333 = vpop.permute.xlu0 %332
      %334 = vrot.lane.b32.xlu0 %v209, 14
      %v335 = vpop.permute.xlu0 %334
      %336 = vrot.lane.b32.xlu0 %v210, 14
      %v337 = vpop.permute.xlu0 %336
      %vm338 = vcmask 113664
      %v339 = vsel %vm338, %v333, %v335
      %vm342 = vcmask 113664
      %v344 = vsel %vm342, 0, %v333
      %v347 = vsel %vm342, 0, %v337
      %v349 = vshrl.u32 %v308, 16
      %v350 = vpack.i.b16 %v349, %v349
      %v352 = vlaneseq
      %v353 = vshrl.u32 %v352, 7
      %v354 = vsub.s32 1, %v353
      %v355 = vrot.slane %v350, %v354
      %v356 = vshrl.u32 %v309, 16
      %v357 = vpack.i.b16 %v356, %v356
      %v359 = vlaneseq
      %v360 = vshrl.u32 %v359, 7
      %v361 = vsub.s32 1, %v360
      %v362 = vrot.slane %v357, %v361
      %v363 = vmul.bf16 %v344, %v355
      %v364 = vmul.bf16 %v339, %v362
      %v365 = vmul.bf16 %v347, %v355
      %v366 = vmul.bf16 %v337, %v362
      %367 = vst [vmem:[#allocation2 + $0x60] sm:$0xff] %v363
      %368 = vst [vmem:[#allocation2 + $0x68] sm:$0xff] %v364
      %369 = vst [vmem:[#allocation2 + $0x70] sm:$0xff] %v365
      %370 = vst [vmem:[#allocation2 + $0x78] sm:$0xff] %v366
      %371 = vrot.lane.b32.xlu0 %v208, 1
      %v372 = vpop.permute.xlu0 %371
      %373 = vrot.lane.b32.xlu0 %v209, 1
      %v374 = vpop.permute.xlu0 %373
      %375 = vrot.lane.b32.xlu0 %v210, 1
      %v376 = vpop.permute.xlu0 %375
      %vm377 = vcmask 7168
      %v378 = vsel %vm377, %v372, %v374
      %vm381 = vcmask 7168
      %v383 = vsel %vm381, 0, %v372
      %v386 = vsel %vm381, 0, %v376
      %v388 = vmul.bf16 %v383, %v247
      %v389 = vmul.bf16 %v378, %v254
      %v390 = vmul.bf16 %v386, %v247
      %v391 = vmul.bf16 %v376, %v254
      %392 = vst [vmem:[#allocation2 + $0x80] sm:$0xff] %v388
      %393 = vst [vmem:[#allocation2 + $0x88] sm:$0xff] %v389
      %394 = vst [vmem:[#allocation2 + $0x90] sm:$0xff] %v390
      %395 = vst [vmem:[#allocation2 + $0x98] sm:$0xff] %v391
      %396 = vst [vmem:[#allocation2 + $0xa0] sm:$0xff] %v208
      %397 = vst [vmem:[#allocation2 + $0xa8] sm:$0xff] %v209
      %398 = vst [vmem:[#allocation2 + $0xb0] sm:$0xff] %v210
      %399 = vst [vmem:[#allocation2 + $0xb8] sm:$0xff] %v210
      %400 = vrot.lane.b32.xlu0 %v208, 127
      %v401 = vpop.permute.xlu0 %400
      %402 = vrot.lane.b32.xlu0 %v209, 127
      %v403 = vpop.permute.xlu0 %402
      %404 = vrot.lane.b32.xlu0 %v210, 127
      %v405 = vpop.permute.xlu0 %404
      %vm406 = vcmask 1039360
      %v407 = vsel %vm406, %v401, %v403
      %vm410 = vcmask 1039360
      %v412 = vsel %vm410, %v403, 0
      %v415 = vsel %vm410, %v405, 0
      %v417 = vmul.bf16 %v407, %v316
      %v418 = vmul.bf16 %v412, %v323
      %v419 = vmul.bf16 %v405, %v316
      %v420 = vmul.bf16 %v415, %v323
      %421 = vst [vmem:[#allocation2 + $0xc0] sm:$0xff] %v417
      %422 = vst [vmem:[#allocation2 + $0xc8] sm:$0xff] %v418
      %423 = vst [vmem:[#allocation2 + $0xd0] sm:$0xff] %v419
      %424 = vst [vmem:[#allocation2 + $0xd8] sm:$0xff] %v420
      %425 = vrot.lane.b32.xlu0 %v208, 126
      %v426 = vpop.permute.xlu0 %425
      %427 = vrot.lane.b32.xlu0 %v209, 126
      %v428 = vpop.permute.xlu0 %427
      %429 = vrot.lane.b32.xlu0 %v210, 126
      %v430 = vpop.permute.xlu0 %429
      %vm431 = vcmask 1031168
      %v432 = vsel %vm431, %v426, %v428
      %vm435 = vcmask 1031168
      %v437 = vsel %vm435, %v428, 0
      %v440 = vsel %vm435, %v430, 0
      %v442 = vmul.bf16 %v432, %v355
      %v443 = vmul.bf16 %v437, %v362
      %v444 = vmul.bf16 %v430, %v355
      %v445 = vmul.bf16 %v440, %v362
      %446 = vst [vmem:[#allocation2 + $0xe0] sm:$0xff] %v442
      %447 = vst [vmem:[#allocation2 + $0xe8] sm:$0xff] %v443
      %448 = vst [vmem:[#allocation2 + $0xf0] sm:$0xff] %v444
      %449 = vst [vmem:[#allocation2 + $0xf8] sm:$0xff] %v445
      %450 = vrot.lane.b32.xlu0 %v208, 113
      %v451 = vpop.permute.xlu0 %450
      %452 = vrot.lane.b32.xlu0 %v209, 113
      %v453 = vpop.permute.xlu0 %452
      %454 = vrot.lane.b32.xlu0 %v210, 113
      %v455 = vpop.permute.xlu0 %454
      %vm456 = vcmask 924672
      %v457 = vsel %vm456, %v451, %v453
      %vm460 = vcmask 924672
      %v462 = vsel %vm460, %v453, 0
      %v465 = vsel %vm460, %v455, 0
      %v467 = vmul.bf16 %v457, %v247
      %v468 = vmul.bf16 %v462, %v254
      %v469 = vmul.bf16 %v455, %v247
      %v470 = vmul.bf16 %v465, %v254
      %471 = vst [vmem:[#allocation2 + $0x100] sm:$0xff] %v467
      %472 = vst [vmem:[#allocation2 + $0x108] sm:$0xff] %v468
      %473 = vst [vmem:[#allocation2 + $0x110] sm:$0xff] %v469
      %474 = vst [vmem:[#allocation2 + $0x118] sm:$0xff] %v470
      %475 = vrot.lane.b32.xlu0 %v208, 112
      %v476 = vpop.permute.xlu0 %475
      %477 = vrot.lane.b32.xlu0 %v209, 112
      %v478 = vpop.permute.xlu0 %477
      %479 = vrot.lane.b32.xlu0 %v210, 112
      %v480 = vpop.permute.xlu0 %479
      %vm481 = vcmask 916480
      %v482 = vsel %vm481, %v476, %v478
      %vm485 = vcmask 916480
      %v487 = vsel %vm485, %v478, 0
      %v490 = vsel %vm485, %v480, 0
      %492 = vst [vmem:[#allocation2 + $0x120] sm:$0xff] %v482
      %493 = vst [vmem:[#allocation2 + $0x128] sm:$0xff] %v487
      %494 = vst [vmem:[#allocation2 + $0x130] sm:$0xff] %v480
      %495 = vst [vmem:[#allocation2 + $0x138] sm:$0xff] %v490
      %496 = vrot.lane.b32.xlu0 %v208, 111
      %v497 = vpop.permute.xlu0 %496
      %498 = vrot.lane.b32.xlu0 %v209, 111
      %v499 = vpop.permute.xlu0 %498
      %500 = vrot.lane.b32.xlu0 %v210, 111
      %v501 = vpop.permute.xlu0 %500
      %vm502 = vcmask 908288
      %v503 = vsel %vm502, %v497, %v499
      %vm506 = vcmask 908288
      %v508 = vsel %vm506, %v499, 0
      %v511 = vsel %vm506, %v501, 0
      %v513 = vmul.bf16 %v503, %v316
      %v514 = vmul.bf16 %v508, %v323
      %v515 = vmul.bf16 %v501, %v316
      %v516 = vmul.bf16 %v511, %v323
      %517 = vst [vmem:[#allocation2 + $0x140] sm:$0xff] %v513
      %518 = vst [vmem:[#allocation2 + $0x148] sm:$0xff] %v514
      %519 = vst [vmem:[#allocation2 + $0x150] sm:$0xff] %v515
      %520 = vst [vmem:[#allocation2 + $0x158] sm:$0xff] %v516
      %521 = vrot.lane.b32.xlu0 %v208, 110
      %v522 = vpop.permute.xlu0 %521
      %523 = vrot.lane.b32.xlu0 %v209, 110
      %v524 = vpop.permute.xlu0 %523
      %525 = vrot.lane.b32.xlu0 %v210, 110
      %v526 = vpop.permute.xlu0 %525
      %vm527 = vcmask 900096
      %v528 = vsel %vm527, %v522, %v524
      %vm531 = vcmask 900096
      %v533 = vsel %vm531, %v524, 0
      %v536 = vsel %vm531, %v526, 0
      %v538 = vmul.bf16 %v528, %v355
      %v539 = vmul.bf16 %v533, %v362
      %v540 = vmul.bf16 %v526, %v355
      %v541 = vmul.bf16 %v536, %v362
      %542 = vst [vmem:[#allocation2 + $0x160] sm:$0xff] %v538
      %543 = vst [vmem:[#allocation2 + $0x168] sm:$0xff] %v539
      %544 = vst [vmem:[#allocation2 + $0x170] sm:$0xff] %v540
      %545 = vst [vmem:[#allocation2 + $0x178] sm:$0xff] %v541
      %546 = vrot.lane.b32.xlu0 %v208, 97
      %v547 = vpop.permute.xlu0 %546
      %548 = vrot.lane.b32.xlu0 %v209, 97
      %v549 = vpop.permute.xlu0 %548
      %550 = vrot.lane.b32.xlu0 %v210, 97
      %v551 = vpop.permute.xlu0 %550
      %vm552 = vcmask 793600
      %v553 = vsel %vm552, %v547, %v549
      %vm556 = vcmask 793600
      %v558 = vsel %vm556, %v549, 0
      %v561 = vsel %vm556, %v551, 0
      %v563 = vmul.bf16 %v553, %v247
      %v564 = vmul.bf16 %v558, %v254
      %v565 = vmul.bf16 %v551, %v247
      %v566 = vmul.bf16 %v561, %v254
      %567 = vst [vmem:[#allocation2 + $0x180] sm:$0xff] %v563
      %568 = vst [vmem:[#allocation2 + $0x188] sm:$0xff] %v564
      %569 = vst [vmem:[#allocation2 + $0x190] sm:$0xff] %v565
      %570 = vst [vmem:[#allocation2 + $0x198] sm:$0xff] %v566
      %571 = vrot.lane.b32.xlu0 %v208, 96
      %v572 = vpop.permute.xlu0 %571
      %573 = vrot.lane.b32.xlu0 %v209, 96
      %v574 = vpop.permute.xlu0 %573
      %575 = vrot.lane.b32.xlu0 %v210, 96
      %v576 = vpop.permute.xlu0 %575
      %vm577 = vcmask 785408
      %v578 = vsel %vm577, %v572, %v574
      %vm581 = vcmask 785408
      %v583 = vsel %vm581, %v574, 0
      %v586 = vsel %vm581, %v576, 0
      %588 = vst [vmem:[#allocation2 + $0x1a0] sm:$0xff] %v578
      %589 = vst [vmem:[#allocation2 + $0x1a8] sm:$0xff] %v583
      %590 = vst [vmem:[#allocation2 + $0x1b0] sm:$0xff] %v576
      %591 = vst [vmem:[#allocation2 + $0x1b8] sm:$0xff] %v586
      %592 = vrot.lane.b32.xlu0 %v208, 95
      %v593 = vpop.permute.xlu0 %592
      %594 = vrot.lane.b32.xlu0 %v209, 95
      %v595 = vpop.permute.xlu0 %594
      %596 = vrot.lane.b32.xlu0 %v210, 95
      %v597 = vpop.permute.xlu0 %596
      %vm598 = vcmask 777216
      %v599 = vsel %vm598, %v593, %v595
      %vm602 = vcmask 777216
      %v604 = vsel %vm602, %v595, 0
      %v607 = vsel %vm602, %v597, 0
      %v609 = vmul.bf16 %v599, %v316
      %v610 = vmul.bf16 %v604, %v323
      %v611 = vmul.bf16 %v597, %v316
      %v612 = vmul.bf16 %v607, %v323
      %613 = vst [vmem:[#allocation2 + $0x1c0] sm:$0xff] %v609
      %614 = vst [vmem:[#allocation2 + $0x1c8] sm:$0xff] %v610
      %615 = vst [vmem:[#allocation2 + $0x1d0] sm:$0xff] %v611
      %616 = vst [vmem:[#allocation2 + $0x1d8] sm:$0xff] %v612
      %617 = vrot.lane.b32.xlu0 %v208, 94
      %v618 = vpop.permute.xlu0 %617
      %619 = vrot.lane.b32.xlu0 %v209, 94
      %v620 = vpop.permute.xlu0 %619
      %621 = vrot.lane.b32.xlu0 %v210, 94
      %v622 = vpop.permute.xlu0 %621
      %vm623 = vcmask 769024
      %v624 = vsel %vm623, %v618, %v620
      %vm627 = vcmask 769024
      %v629 = vsel %vm627, %v620, 0
      %v632 = vsel %vm627, %v622, 0
      %v634 = vmul.bf16 %v624, %v355
      %v635 = vmul.bf16 %v629, %v362
      %v636 = vmul.bf16 %v622, %v355
      %v637 = vmul.bf16 %v632, %v362
      %638 = vst [vmem:[#allocation2 + $0x1e0] sm:$0xff] %v634
      %639 = vst [vmem:[#allocation2 + $0x1e8] sm:$0xff] %v635
      %640 = vst [vmem:[#allocation2 + $0x1f0] sm:$0xff] %v636
      %641 = vst [vmem:[#allocation2 + $0x1f8] sm:$0xff] %v637
      %v642 = vld [vmem:[%s1] sm:$0xff]
      %v643 = vld [vmem:[%s1 + $0x8] sm:$0xff]
      %v644 = vld [vmem:[%s1 + $0x10] sm:$0xff]
      %v645 = vld [vmem:[%s1 + $0x18] sm:$0xff]
      %v646 = vld [vmem:[%s1 + $0x20] sm:$0xff]
      %v647 = vld [vmem:[%s1 + $0x28] sm:$0xff]
      %v648 = vld [vmem:[%s1 + $0x30] sm:$0xff]
      %v649 = vld [vmem:[%s1 + $0x38] sm:$0xff]
      %v650 = vld [vmem:[#allocation2] sm:$0xff]
      %v651 = vld [vmem:[#allocation2 + $0x8] sm:$0xff]
      %v652 = vld [vmem:[#allocation2 + $0x10] sm:$0xff]
      %v653 = vld [vmem:[#allocation2 + $0x18] sm:$0xff]
      %v654 = vld [vmem:[#allocation2 + $0x20] sm:$0xff]
      %v655 = vld [vmem:[#allocation2 + $0x28] sm:$0xff]
      %v656 = vld [vmem:[#allocation2 + $0x30] sm:$0xff]
      %v657 = vld [vmem:[#allocation2 + $0x38] sm:$0xff]
      %v658 = vld [vmem:[#allocation2 + $0x40] sm:$0xff]
      %v659 = vld [vmem:[#allocation2 + $0x48] sm:$0xff]
      %v660 = vld [vmem:[#allocation2 + $0x50] sm:$0xff]
      %v661 = vld [vmem:[#allocation2 + $0x58] sm:$0xff]
      %v662 = vld [vmem:[#allocation2 + $0x60] sm:$0xff]
      %v663 = vld [vmem:[#allocation2 + $0x68] sm:$0xff]
      %v664 = vld [vmem:[#allocation2 + $0x70] sm:$0xff]
      %v665 = vld [vmem:[#allocation2 + $0x78] sm:$0xff]
      %v666 = vld [vmem:[#allocation2 + $0x80] sm:$0xff]
      %v667 = vld [vmem:[#allocation2 + $0x88] sm:$0xff]
      %v668 = vld [vmem:[#allocation2 + $0x90] sm:$0xff]
      %v669 = vld [vmem:[#allocation2 + $0x98] sm:$0xff]
      %v670 = vld [vmem:[#allocation2 + $0xa0] sm:$0xff]
      %v671 = vld [vmem:[#allocation2 + $0xa8] sm:$0xff]
      %v672 = vld [vmem:[#allocation2 + $0xb0] sm:$0xff]
      %v673 = vld [vmem:[#allocation2 + $0xb8] sm:$0xff]
      %v674 = vld [vmem:[#allocation2 + $0xc0] sm:$0xff]
      %v675 = vld [vmem:[#allocation2 + $0xc8] sm:$0xff]
      %v676 = vld [vmem:[#allocation2 + $0xd0] sm:$0xff]
      %v677 = vld [vmem:[#allocation2 + $0xd8] sm:$0xff]
      %v678 = vld [vmem:[#allocation2 + $0xe0] sm:$0xff]
      %v679 = vld [vmem:[#allocation2 + $0xe8] sm:$0xff]
      %v680 = vld [vmem:[#allocation2 + $0xf0] sm:$0xff]
      %v681 = vld [vmem:[#allocation2 + $0xf8] sm:$0xff]
      %v682 = vld [vmem:[#allocation2 + $0x100] sm:$0xff]
      %v683 = vld [vmem:[#allocation2 + $0x108] sm:$0xff]
      %v684 = vld [vmem:[#allocation2 + $0x110] sm:$0xff]
      %v685 = vld [vmem:[#allocation2 + $0x118] sm:$0xff]
      %v686 = vld [vmem:[#allocation2 + $0x120] sm:$0xff]
      %v687 = vld [vmem:[#allocation2 + $0x128] sm:$0xff]
      %v688 = vld [vmem:[#allocation2 + $0x130] sm:$0xff]
      %v689 = vld [vmem:[#allocation2 + $0x138] sm:$0xff]
      %v690 = vld [vmem:[#allocation2 + $0x140] sm:$0xff]
      %v691 = vld [vmem:[#allocation2 + $0x148] sm:$0xff]
      %v692 = vld [vmem:[#allocation2 + $0x150] sm:$0xff]
      %v693 = vld [vmem:[#allocation2 + $0x158] sm:$0xff]
      %v694 = vld [vmem:[#allocation2 + $0x160] sm:$0xff]
      %v695 = vld [vmem:[#allocation2 + $0x168] sm:$0xff]
      %v696 = vld [vmem:[#allocation2 + $0x170] sm:$0xff]
      %v697 = vld [vmem:[#allocation2 + $0x178] sm:$0xff]
      %v698 = vld [vmem:[#allocation2 + $0x180] sm:$0xff]
      %v699 = vld [vmem:[#allocation2 + $0x188] sm:$0xff]
      %v700 = vld [vmem:[#allocation2 + $0x190] sm:$0xff]
      %v701 = vld [vmem:[#allocation2 + $0x198] sm:$0xff]
      %v702 = vld [vmem:[#allocation2 + $0x1a0] sm:$0xff]
      %v703 = vld [vmem:[#allocation2 + $0x1a8] sm:$0xff]
      %v704 = vld [vmem:[#allocation2 + $0x1b0] sm:$0xff]
      %v705 = vld [vmem:[#allocation2 + $0x1b8] sm:$0xff]
      %v706 = vld [vmem:[#allocation2 + $0x1c0] sm:$0xff]
      %v707 = vld [vmem:[#allocation2 + $0x1c8] sm:$0xff]
      %v708 = vld [vmem:[#allocation2 + $0x1d0] sm:$0xff]
      %v709 = vld [vmem:[#allocation2 + $0x1d8] sm:$0xff]
      %v710 = vld [vmem:[#allocation2 + $0x1e0] sm:$0xff]
      %v711 = vld [vmem:[#allocation2 + $0x1e8] sm:$0xff]
      %v712 = vld [vmem:[#allocation2 + $0x1f0] sm:$0xff]
      %v713 = vld [vmem:[#allocation2 + $0x1f8] sm:$0xff]
      %v714 = vld [vmem:[%s2] sm:$0xff]
      %v715 = vld [vmem:[%s2 + $0x8] sm:$0xff]
      %v716 = vld [vmem:[%s2 + $0x10] sm:$0xff]
      %v717 = vld [vmem:[%s2 + $0x18] sm:$0xff]
      %719 = vset.pattern.permute.xlu0 0
      %720 = vperm.xlu0 %719, %v714
      %v721 = vpop.permute.xlu0 %720
      %724 = vset.pattern.permute.xlu0 0
      %725 = vperm.xlu0 %724, %v715
      %v726 = vpop.permute.xlu0 %725
      %729 = vset.pattern.permute.xlu0 0
      %730 = vperm.xlu0 %729, %v716
      %v731 = vpop.permute.xlu0 %730
      %734 = vset.pattern.permute.xlu0 0
      %735 = vperm.xlu0 %734, %v717
      %v736 = vpop.permute.xlu0 %735
      %v746 = vunpack.c.l.b16 %v642
      %v747 = vunpack.c.h.b16 %v642
      %v748 = vunpack.c.l.b16 %v643
      %v749 = vunpack.c.h.b16 %v643
      %v750 = vunpack.c.l.b16 %v644
      %v751 = vunpack.c.h.b16 %v644
      %v752 = vunpack.c.l.b16 %v645
      %v753 = vunpack.c.h.b16 %v645
      %v754 = vunpack.c.l.b16 %v646
      %v755 = vunpack.c.h.b16 %v646
      %v756 = vunpack.c.l.b16 %v647
      %v757 = vunpack.c.h.b16 %v647
      %v758 = vunpack.c.l.b16 %v648
      %v759 = vunpack.c.h.b16 %v648
      %v760 = vunpack.c.l.b16 %v649
      %v761 = vunpack.c.h.b16 %v649
      %v762 = vpack.c.b16 %v750, %v746
      %v763 = vpack.c.b16 %v751, %v747
      %v764 = vpack.c.b16 %v752, %v748
      %v765 = vpack.c.b16 %v753, %v749
      %v766 = vpack.c.b16 %v758, %v754
      %v767 = vpack.c.b16 %v759, %v755
      %v768 = vpack.c.b16 %v760, %v756
      %v769 = vpack.c.b16 %v761, %v757
      %778 = vmatprep.subr.bf16.mxu0 %v651
      %779 = vmatpush1.bf16.msra.mxu0 %v650
      %780 = vmatprep.subr.bf16.mxu0 %v653
      %781 = vmatpush1.bf16.msra.mxu0 %v652
      %782 = vmatprep.subr.bf16.mxu0 %v655
      %783 = vmatpush1.bf16.msra.mxu0 %v654
      %784 = vmatprep.subr.bf16.mxu0 %v657
      %785 = vmatpush1.bf16.msra.mxu0 %v656
      %786 = vmatprep.subr.bf16.mxu0 %v659
      %787 = vmatpush1.bf16.msra.mxu0 %v658
      %788 = vmatprep.subr.bf16.mxu0 %v661
      %789 = vmatpush1.bf16.msra.mxu0 %v660
      %790 = vmatprep.subr.bf16.mxu0 %v663
      %791 = vmatpush1.bf16.msra.mxu0 %v662
      %792 = vmatprep.subr.bf16.mxu0 %v665
      %793 = vmatpush1.bf16.msra.mxu0 %v664
      %794 = vmatprep.subr.bf16.mxu0 %v667
      %795 = vmatpush1.bf16.msra.mxu0 %v666
      %796 = vmatprep.subr.bf16.mxu0 %v669
      %797 = vmatpush1.bf16.msra.mxu0 %v668
      %798 = vmatprep.subr.bf16.mxu0 %v671
      %799 = vmatpush1.bf16.msra.mxu0 %v670
      %800 = vmatprep.subr.bf16.mxu0 %v673
      %801 = vmatpush1.bf16.msra.mxu0 %v672
      %802 = vmatprep.subr.bf16.mxu0 %v675
      %803 = vmatpush1.bf16.msra.mxu0 %v674
      %804 = vmatprep.subr.bf16.mxu0 %v677
      %805 = vmatpush1.bf16.msra.mxu0 %v676
      %806 = vmatprep.subr.bf16.mxu0 %v679
      %807 = vmatpush1.bf16.msra.mxu0 %v678
      %808 = vmatprep.subr.bf16.mxu0 %v681
      %809 = vmatpush1.bf16.msra.mxu0 %v680
      %810 = vmatprep.mubr.bf16.mxu0 %v763
      %811 = vmatmul.mubr.bf16.gmra.mrb[0].mxu0 %v762
      %v812 = vpop.f32.mrb[0].mxu0
      %v813 = vadd.f32 %v721, %v812
      %v814 = vpop.f32.mrb[0].mxu0
      %v815 = vadd.f32 %v721, %v814
      %v816 = vpop.f32.mrb[0].mxu0
      %v817 = vadd.f32 %v726, %v816
      %v818 = vpop.f32.mrb[0].mxu0
      %v819 = vadd.f32 %v726, %v818
      %820 = vmatprep.mubr.bf16.mxu0 %v767
      %821 = vmatmul.mubr.bf16.gmra.mrb[0].mxu0 %v766
      %v822 = vpop.f32.mrb[0].mxu0
      %v823 = vadd.f32 %v731, %v822
      %v824 = vpop.f32.mrb[0].mxu0
      %v825 = vadd.f32 %v731, %v824
      %v826 = vpop.f32.mrb[0].mxu0
      %v827 = vadd.f32 %v736, %v826
      %v828 = vpop.f32.mrb[0].mxu0
      %v829 = vadd.f32 %v736, %v828
      %830 = vdwg.mxu0
      %831 = vmatprep.subr.bf16.mxu0 %v683
      %832 = vmatpush1.bf16.msra.mxu0 %v682
      %833 = vmatprep.subr.bf16.mxu0 %v685
      %834 = vmatpush1.bf16.msra.mxu0 %v684
      %835 = vmatprep.subr.bf16.mxu0 %v687
      %836 = vmatpush1.bf16.msra.mxu0 %v686
      %837 = vmatprep.subr.bf16.mxu0 %v689
      %838 = vmatpush1.bf16.msra.mxu0 %v688
      %839 = vmatprep.subr.bf16.mxu0 %v691
      %840 = vmatpush1.bf16.msra.mxu0 %v690
      %841 = vmatprep.subr.bf16.mxu0 %v693
      %842 = vmatpush1.bf16.msra.mxu0 %v692
      %843 = vmatprep.subr.bf16.mxu0 %v695
      %844 = vmatpush1.bf16.msra.mxu0 %v694
      %845 = vmatprep.subr.bf16.mxu0 %v697
      %846 = vmatpush1.bf16.msra.mxu0 %v696
      %847 = vmatprep.subr.bf16.mxu0 %v699
      %848 = vmatpush1.bf16.msra.mxu0 %v698
      %849 = vmatprep.subr.bf16.mxu0 %v701
      %850 = vmatpush1.bf16.msra.mxu0 %v700
      %851 = vmatprep.subr.bf16.mxu0 %v703
      %852 = vmatpush1.bf16.msra.mxu0 %v702
      %853 = vmatprep.subr.bf16.mxu0 %v705
      %854 = vmatpush1.bf16.msra.mxu0 %v704
      %855 = vmatprep.subr.bf16.mxu0 %v707
      %856 = vmatpush1.bf16.msra.mxu0 %v706
      %857 = vmatprep.subr.bf16.mxu0 %v709
      %858 = vmatpush1.bf16.msra.mxu0 %v708
      %859 = vmatprep.subr.bf16.mxu0 %v711
      %860 = vmatpush1.bf16.msra.mxu0 %v710
      %861 = vmatprep.subr.bf16.mxu0 %v713
      %862 = vmatpush1.bf16.msra.mxu0 %v712
      %863 = vmatprep.mubr.bf16.mxu0 %v765
      %864 = vmatmul.mubr.bf16.gmra.mrb[0].mxu0 %v764
      %v865 = vpop.f32.mrb[0].mxu0
      %v866 = vadd.f32 %v813, %v865
      %v867 = vpop.f32.mrb[0].mxu0
      %v868 = vadd.f32 %v815, %v867
      %v869 = vpop.f32.mrb[0].mxu0
      %v870 = vadd.f32 %v817, %v869
      %v871 = vpop.f32.mrb[0].mxu0
      %v872 = vadd.f32 %v819, %v871
      %873 = vmatprep.mubr.bf16.mxu0 %v769
      %874 = vmatmul.mubr.bf16.gmra.mrb[0].mxu0 %v768
      %v875 = vpop.f32.mrb[0].mxu0
      %v876 = vadd.f32 %v823, %v875
      %v877 = vpop.f32.mrb[0].mxu0
      %v878 = vadd.f32 %v825, %v877
      %v879 = vpop.f32.mrb[0].mxu0
      %v880 = vadd.f32 %v827, %v879
      %v881 = vpop.f32.mrb[0].mxu0
      %v882 = vadd.f32 %v829, %v881
      %883 = vdwg.mxu0
      %v884 = vmax.f32 %v866, 0.0
      %v885 = vmax.f32 %v868, 0.0
      %v886 = vmax.f32 %v870, 0.0
      %v887 = vmax.f32 %v872, 0.0
      %v888 = vmax.f32 %v876, 0.0
      %v889 = vmax.f32 %v878, 0.0
      %v890 = vmax.f32 %v880, 0.0
      %v891 = vmax.f32 %v882, 0.0
      %v892 = vpack.c.bf16 %v886, %v884
      %v893 = vpack.c.bf16 %v887, %v885
      %v894 = vpack.c.bf16 %v890, %v888
      %v895 = vpack.c.bf16 %v891, %v889
      %900 = vrot.lane.b32.xlu0 %v892, 17
      %v901 = vpop.permute.xlu0 %900
      %902 = vrot.lane.b32.xlu0 %v893, 17
      %v903 = vpop.permute.xlu0 %902
      %904 = vrot.lane.b32.xlu0 %v894, 17
      %v905 = vpop.permute.xlu0 %904
      %906 = vrot.lane.b32.xlu0 %v895, 17
      %v907 = vpop.permute.xlu0 %906
      %v908 = vsel %vm220, %v901, %v903
      %v909 = vsel %vm220, %v905, %v907
      %v913 = vsel %vm224, 0, %v901
      %v916 = vsel %vm224, 0, %v905
      %v918 = vmul.bf16 %v913, %v247
      %v919 = vmul.bf16 %v908, %v254
      %v920 = vmul.bf16 %v916, %v247
      %v921 = vmul.bf16 %v909, %v254
      %922 = vst [vmem:[#allocation2] sm:$0xff] %v918
      %923 = vst [vmem:[#allocation2 + $0x8] sm:$0xff] %v919
      %924 = vst [vmem:[#allocation2 + $0x10] sm:$0xff] %v920
      %925 = vst [vmem:[#allocation2 + $0x18] sm:$0xff] %v921
      %926 = vrot.lane.b32.xlu0 %v892, 16
      %v927 = vpop.permute.xlu0 %926
      %928 = vrot.lane.b32.xlu0 %v893, 16
      %v929 = vpop.permute.xlu0 %928
      %930 = vrot.lane.b32.xlu0 %v894, 16
      %v931 = vpop.permute.xlu0 %930
      %932 = vrot.lane.b32.xlu0 %v895, 16
      %v933 = vpop.permute.xlu0 %932
      %v934 = vsel %vm269, %v927, %v929
      %v935 = vsel %vm269, %v931, %v933
      %v939 = vsel %vm273, 0, %v927
      %v942 = vsel %vm273, 0, %v931
      %944 = vst [vmem:[#allocation2 + $0x20] sm:$0xff] %v939
      %945 = vst [vmem:[#allocation2 + $0x28] sm:$0xff] %v934
      %946 = vst [vmem:[#allocation2 + $0x30] sm:$0xff] %v942
      %947 = vst [vmem:[#allocation2 + $0x38] sm:$0xff] %v935
      %948 = vrot.lane.b32.xlu0 %v892, 15
      %v949 = vpop.permute.xlu0 %948
      %950 = vrot.lane.b32.xlu0 %v893, 15
      %v951 = vpop.permute.xlu0 %950
      %952 = vrot.lane.b32.xlu0 %v894, 15
      %v953 = vpop.permute.xlu0 %952
      %954 = vrot.lane.b32.xlu0 %v895, 15
      %v955 = vpop.permute.xlu0 %954
      %v956 = vsel %vm290, %v949, %v951
      %v957 = vsel %vm290, %v953, %v955
      %v961 = vsel %vm294, 0, %v949
      %v964 = vsel %vm294, 0, %v953
      %v966 = vmul.bf16 %v961, %v316
      %v967 = vmul.bf16 %v956, %v323
      %v968 = vmul.bf16 %v964, %v316
      %v969 = vmul.bf16 %v957, %v323
      %970 = vst [vmem:[#allocation2 + $0x40] sm:$0xff] %v966
      %971 = vst [vmem:[#allocation2 + $0x48] sm:$0xff] %v967
      %972 = vst [vmem:[#allocation2 + $0x50] sm:$0xff] %v968
      %973 = vst [vmem:[#allocation2 + $0x58] sm:$0xff] %v969
      %974 = vrot.lane.b32.xlu0 %v892, 14
      %v975 = vpop.permute.xlu0 %974
      %976 = vrot.lane.b32.xlu0 %v893, 14
      %v977 = vpop.permute.xlu0 %976
      %978 = vrot.lane.b32.xlu0 %v894, 14
      %v979 = vpop.permute.xlu0 %978
      %980 = vrot.lane.b32.xlu0 %v895, 14
      %v981 = vpop.permute.xlu0 %980
      %v982 = vsel %vm338, %v975, %v977
      %v983 = vsel %vm338, %v979, %v981
      %v987 = vsel %vm342, 0, %v975
      %v990 = vsel %vm342, 0, %v979
      %v992 = vmul.bf16 %v987, %v355
      %v993 = vmul.bf16 %v982, %v362
      %v994 = vmul.bf16 %v990, %v355
      %v995 = vmul.bf16 %v983, %v362
      %996 = vst [vmem:[#allocation2 + $0x60] sm:$0xff] %v992
      %997 = vst [vmem:[#allocation2 + $0x68] sm:$0xff] %v993
      %998 = vst [vmem:[#allocation2 + $0x70] sm:$0xff] %v994
      %999 = vst [vmem:[#allocation2 + $0x78] sm:$0xff] %v995
      %1000 = vrot.lane.b32.xlu0 %v892, 1
      %v1001 = vpop.permute.xlu0 %1000
      %1002 = vrot.lane.b32.xlu0 %v893, 1
      %v1003 = vpop.permute.xlu0 %1002
      %1004 = vrot.lane.b32.xlu0 %v894, 1
      %v1005 = vpop.permute.xlu0 %1004
      %1006 = vrot.lane.b32.xlu0 %v895, 1
      %v1007 = vpop.permute.xlu0 %1006
      %v1008 = vsel %vm377, %v1001, %v1003
      %v1009 = vsel %vm377, %v1005, %v1007
      %v1013 = vsel %vm381, 0, %v1001
      %v1016 = vsel %vm381, 0, %v1005
      %v1018 = vmul.bf16 %v1013, %v247
      %v1019 = vmul.bf16 %v1008, %v254
      %v1020 = vmul.bf16 %v1016, %v247
      %v1021 = vmul.bf16 %v1009, %v254
      %1022 = vst [vmem:[#allocation2 + $0x80] sm:$0xff] %v1018
      %1023 = vst [vmem:[#allocation2 + $0x88] sm:$0xff] %v1019
      %1024 = vst [vmem:[#allocation2 + $0x90] sm:$0xff] %v1020
      %1025 = vst [vmem:[#allocation2 + $0x98] sm:$0xff] %v1021
      %1026 = vst [vmem:[#allocation2 + $0xa0] sm:$0xff] %v892
      %1027 = vst [vmem:[#allocation2 + $0xa8] sm:$0xff] %v893
      %1028 = vst [vmem:[#allocation2 + $0xb0] sm:$0xff] %v894
      %1029 = vst [vmem:[#allocation2 + $0xb8] sm:$0xff] %v895
      %1030 = vrot.lane.b32.xlu0 %v892, 127
      %v1031 = vpop.permute.xlu0 %1030
      %1032 = vrot.lane.b32.xlu0 %v893, 127
      %v1033 = vpop.permute.xlu0 %1032
      %1034 = vrot.lane.b32.xlu0 %v894, 127
      %v1035 = vpop.permute.xlu0 %1034
      %1036 = vrot.lane.b32.xlu0 %v895, 127
      %v1037 = vpop.permute.xlu0 %1036
      %v1038 = vsel %vm406, %v1031, %v1033
      %v1039 = vsel %vm406, %v1035, %v1037
      %v1043 = vsel %vm410, %v1033, 0
      %v1046 = vsel %vm410, %v1037, 0
      %v1048 = vmul.bf16 %v1038, %v316
      %v1049 = vmul.bf16 %v1043, %v323
      %v1050 = vmul.bf16 %v1039, %v316
      %v1051 = vmul.bf16 %v1046, %v323
      %1052 = vst [vmem:[#allocation2 + $0xc0] sm:$0xff] %v1048
      %1053 = vst [vmem:[#allocation2 + $0xc8] sm:$0xff] %v1049
      %1054 = vst [vmem:[#allocation2 + $0xd0] sm:$0xff] %v1050
      %1055 = vst [vmem:[#allocation2 + $0xd8] sm:$0xff] %v1051
      %1056 = vrot.lane.b32.xlu0 %v892, 126
      %v1057 = vpop.permute.xlu0 %1056
      %1058 = vrot.lane.b32.xlu0 %v893, 126
      %v1059 = vpop.permute.xlu0 %1058
      %1060 = vrot.lane.b32.xlu0 %v894, 126
      %v1061 = vpop.permute.xlu0 %1060
      %1062 = vrot.lane.b32.xlu0 %v895, 126
      %v1063 = vpop.permute.xlu0 %1062
      %v1064 = vsel %vm431, %v1057, %v1059
      %v1065 = vsel %vm431, %v1061, %v1063
      %v1069 = vsel %vm435, %v1059, 0
      %v1072 = vsel %vm435, %v1063, 0
      %v1074 = vmul.bf16 %v1064, %v355
      %v1075 = vmul.bf16 %v1069, %v362
      %v1076 = vmul.bf16 %v1065, %v355
      %v1077 = vmul.bf16 %v1072, %v362
      %1078 = vst [vmem:[#allocation2 + $0xe0] sm:$0xff] %v1074
      %1079 = vst [vmem:[#allocation2 + $0xe8] sm:$0xff] %v1075
      %1080 = vst [vmem:[#allocation2 + $0xf0] sm:$0xff] %v1076
      %1081 = vst [vmem:[#allocation2 + $0xf8] sm:$0xff] %v1077
      %1082 = vrot.lane.b32.xlu0 %v892, 113
      %v1083 = vpop.permute.xlu0 %1082
      %1084 = vrot.lane.b32.xlu0 %v893, 113
      %v1085 = vpop.permute.xlu0 %1084
      %1086 = vrot.lane.b32.xlu0 %v894, 113
      %v1087 = vpop.permute.xlu0 %1086
      %1088 = vrot.lane.b32.xlu0 %v895, 113
      %v1089 = vpop.permute.xlu0 %1088
      %v1090 = vsel %vm456, %v1083, %v1085
      %v1091 = vsel %vm456, %v1087, %v1089
      %v1095 = vsel %vm460, %v1085, 0
      %v1098 = vsel %vm460, %v1089, 0
      %v1100 = vmul.bf16 %v1090, %v247
      %v1101 = vmul.bf16 %v1095, %v254
      %v1102 = vmul.bf16 %v1091, %v247
      %v1103 = vmul.bf16 %v1098, %v254
      %1104 = vst [vmem:[#allocation2 + $0x100] sm:$0xff] %v1100
      %1105 = vst [vmem:[#allocation2 + $0x108] sm:$0xff] %v1101
      %1106 = vst [vmem:[#allocation2 + $0x110] sm:$0xff] %v1102
      %1107 = vst [vmem:[#allocation2 + $0x118] sm:$0xff] %v1103
      %1108 = vrot.lane.b32.xlu0 %v892, 112
      %v1109 = vpop.permute.xlu0 %1108
      %1110 = vrot.lane.b32.xlu0 %v893, 112
      %v1111 = vpop.permute.xlu0 %1110
      %1112 = vrot.lane.b32.xlu0 %v894, 112
      %v1113 = vpop.permute.xlu0 %1112
      %1114 = vrot.lane.b32.xlu0 %v895, 112
      %v1115 = vpop.permute.xlu0 %1114
      %v1116 = vsel %vm481, %v1109, %v1111
      %v1117 = vsel %vm481, %v1113, %v1115
      %v1121 = vsel %vm485, %v1111, 0
      %v1124 = vsel %vm485, %v1115, 0
      %1126 = vst [vmem:[#allocation2 + $0x120] sm:$0xff] %v1116
      %1127 = vst [vmem:[#allocation2 + $0x128] sm:$0xff] %v1121
      %1128 = vst [vmem:[#allocation2 + $0x130] sm:$0xff] %v1117
      %1129 = vst [vmem:[#allocation2 + $0x138] sm:$0xff] %v1124
      %1130 = vrot.lane.b32.xlu0 %v892, 111
      %v1131 = vpop.permute.xlu0 %1130
      %1132 = vrot.lane.b32.xlu0 %v893, 111
      %v1133 = vpop.permute.xlu0 %1132
      %1134 = vrot.lane.b32.xlu0 %v894, 111
      %v1135 = vpop.permute.xlu0 %1134
      %1136 = vrot.lane.b32.xlu0 %v895, 111
      %v1137 = vpop.permute.xlu0 %1136
      %v1138 = vsel %vm502, %v1131, %v1133
      %v1139 = vsel %vm502, %v1135, %v1137
      %v1143 = vsel %vm506, %v1133, 0
      %v1146 = vsel %vm506, %v1137, 0
      %v1148 = vmul.bf16 %v1138, %v316
      %v1149 = vmul.bf16 %v1143, %v323
      %v1150 = vmul.bf16 %v1139, %v316
      %v1151 = vmul.bf16 %v1146, %v323
      %1152 = vst [vmem:[#allocation2 + $0x140] sm:$0xff] %v1148
      %1153 = vst [vmem:[#allocation2 + $0x148] sm:$0xff] %v1149
      %1154 = vst [vmem:[#allocation2 + $0x150] sm:$0xff] %v1150
      %1155 = vst [vmem:[#allocation2 + $0x158] sm:$0xff] %v1151
      %1156 = vrot.lane.b32.xlu0 %v892, 110
      %v1157 = vpop.permute.xlu0 %1156
      %1158 = vrot.lane.b32.xlu0 %v893, 110
      %v1159 = vpop.permute.xlu0 %1158
      %1160 = vrot.lane.b32.xlu0 %v894, 110
      %v1161 = vpop.permute.xlu0 %1160
      %1162 = vrot.lane.b32.xlu0 %v895, 110
      %v1163 = vpop.permute.xlu0 %1162
      %v1164 = vsel %vm527, %v1157, %v1159
      %v1165 = vsel %vm527, %v1161, %v1163
      %v1169 = vsel %vm531, %v1159, 0
      %v1172 = vsel %vm531, %v1163, 0
      %v1174 = vmul.bf16 %v1164, %v355
      %v1175 = vmul.bf16 %v1169, %v362
      %v1176 = vmul.bf16 %v1165, %v355
      %v1177 = vmul.bf16 %v1172, %v362
      %1178 = vst [vmem:[#allocation2 + $0x160] sm:$0xff] %v1174
      %1179 = vst [vmem:[#allocation2 + $0x168] sm:$0xff] %v1175
      %1180 = vst [vmem:[#allocation2 + $0x170] sm:$0xff] %v1176
      %1181 = vst [vmem:[#allocation2 + $0x178] sm:$0xff] %v1177
      %1182 = vrot.lane.b32.xlu0 %v892, 97
      %v1183 = vpop.permute.xlu0 %1182
      %1184 = vrot.lane.b32.xlu0 %v893, 97
      %v1185 = vpop.permute.xlu0 %1184
      %1186 = vrot.lane.b32.xlu0 %v894, 97
      %v1187 = vpop.permute.xlu0 %1186
      %1188 = vrot.lane.b32.xlu0 %v895, 97
      %v1189 = vpop.permute.xlu0 %1188
      %v1190 = vsel %vm552, %v1183, %v1185
      %v1191 = vsel %vm552, %v1187, %v1189
      %v1195 = vsel %vm556, %v1185, 0
      %v1198 = vsel %vm556, %v1189, 0
      %v1200 = vmul.bf16 %v1190, %v247
      %v1201 = vmul.bf16 %v1195, %v254
      %v1202 = vmul.bf16 %v1191, %v247
      %v1203 = vmul.bf16 %v1198, %v254
      %1204 = vst [vmem:[#allocation2 + $0x180] sm:$0xff] %v1200
      %1205 = vst [vmem:[#allocation2 + $0x188] sm:$0xff] %v1201
      %1206 = vst [vmem:[#allocation2 + $0x190] sm:$0xff] %v1202
      %1207 = vst [vmem:[#allocation2 + $0x198] sm:$0xff] %v1203
      %1208 = vrot.lane.b32.xlu0 %v892, 96
      %v1209 = vpop.permute.xlu0 %1208
      %1210 = vrot.lane.b32.xlu0 %v893, 96
      %v1211 = vpop.permute.xlu0 %1210
      %1212 = vrot.lane.b32.xlu0 %v894, 96
      %v1213 = vpop.permute.xlu0 %1212
      %1214 = vrot.lane.b32.xlu0 %v895, 96
      %v1215 = vpop.permute.xlu0 %1214
      %v1216 = vsel %vm577, %v1209, %v1211
      %v1217 = vsel %vm577, %v1213, %v1215
      %v1221 = vsel %vm581, %v1211, 0
      %v1224 = vsel %vm581, %v1215, 0
      %1226 = vst [vmem:[#allocation2 + $0x1a0] sm:$0xff] %v1216
      %1227 = vst [vmem:[#allocation2 + $0x1a8] sm:$0xff] %v1221
      %1228 = vst [vmem:[#allocation2 + $0x1b0] sm:$0xff] %v1217
      %1229 = vst [vmem:[#allocation2 + $0x1b8] sm:$0xff] %v1224
      %1230 = vrot.lane.b32.xlu0 %v892, 95
      %v1231 = vpop.permute.xlu0 %1230
      %1232 = vrot.lane.b32.xlu0 %v893, 95
      %v1233 = vpop.permute.xlu0 %1232
      %1234 = vrot.lane.b32.xlu0 %v894, 95
      %v1235 = vpop.permute.xlu0 %1234
      %1236 = vrot.lane.b32.xlu0 %v895, 95
      %v1237 = vpop.permute.xlu0 %1236
      %v1238 = vsel %vm598, %v1231, %v1233
      %v1239 = vsel %vm598, %v1235, %v1237
      %v1243 = vsel %vm602, %v1233, 0
      %v1246 = vsel %vm602, %v1237, 0
      %v1248 = vmul.bf16 %v1238, %v316
      %v1249 = vmul.bf16 %v1243, %v323
      %v1250 = vmul.bf16 %v1239, %v316
      %v1251 = vmul.bf16 %v1246, %v323
      %1252 = vst [vmem:[#allocation2 + $0x1c0] sm:$0xff] %v1248
      %1253 = vst [vmem:[#allocation2 + $0x1c8] sm:$0xff] %v1249
      %1254 = vst [vmem:[#allocation2 + $0x1d0] sm:$0xff] %v1250
      %1255 = vst [vmem:[#allocation2 + $0x1d8] sm:$0xff] %v1251
      %1256 = vrot.lane.b32.xlu0 %v892, 94
      %v1257 = vpop.permute.xlu0 %1256
      %1258 = vrot.lane.b32.xlu0 %v893, 94
      %v1259 = vpop.permute.xlu0 %1258
      %1260 = vrot.lane.b32.xlu0 %v894, 94
      %v1261 = vpop.permute.xlu0 %1260
      %1262 = vrot.lane.b32.xlu0 %v895, 94
      %v1263 = vpop.permute.xlu0 %1262
      %v1264 = vsel %vm623, %v1257, %v1259
      %v1265 = vsel %vm623, %v1261, %v1263
      %v1269 = vsel %vm627, %v1259, 0
      %v1272 = vsel %vm627, %v1263, 0
      %v1274 = vmul.bf16 %v1264, %v355
      %v1275 = vmul.bf16 %v1269, %v362
      %v1276 = vmul.bf16 %v1265, %v355
      %v1277 = vmul.bf16 %v1272, %v362
      %1278 = vst [vmem:[#allocation2 + $0x1e0] sm:$0xff] %v1274
      %1279 = vst [vmem:[#allocation2 + $0x1e8] sm:$0xff] %v1275
      %1280 = vst [vmem:[#allocation2 + $0x1f0] sm:$0xff] %v1276
      %1281 = vst [vmem:[#allocation2 + $0x1f8] sm:$0xff] %v1277
      %s1282 = scalar_lea.vmem %s1, 64
      %v1283 = vld [vmem:[%s1282] sm:$0xff]
      %v1284 = vld [vmem:[%s1282 + $0x8] sm:$0xff]
      %v1285 = vld [vmem:[%s1282 + $0x10] sm:$0xff]
      %v1286 = vld [vmem:[%s1282 + $0x18] sm:$0xff]
      %v1287 = vld [vmem:[%s1282 + $0x20] sm:$0xff]
      %v1288 = vld [vmem:[%s1282 + $0x28] sm:$0xff]
      %v1289 = vld [vmem:[%s1282 + $0x30] sm:$0xff]
      %v1290 = vld [vmem:[%s1282 + $0x38] sm:$0xff]
      %v1291 = vld [vmem:[#allocation2] sm:$0xff]
      %v1292 = vld [vmem:[#allocation2 + $0x8] sm:$0xff]
      %v1293 = vld [vmem:[#allocation2 + $0x10] sm:$0xff]
      %v1294 = vld [vmem:[#allocation2 + $0x18] sm:$0xff]
      %v1295 = vld [vmem:[#allocation2 + $0x20] sm:$0xff]
      %v1296 = vld [vmem:[#allocation2 + $0x28] sm:$0xff]
      %v1297 = vld [vmem:[#allocation2 + $0x30] sm:$0xff]
      %v1298 = vld [vmem:[#allocation2 + $0x38] sm:$0xff]
      %v1299 = vld [vmem:[#allocation2 + $0x40] sm:$0xff]
      %v1300 = vld [vmem:[#allocation2 + $0x48] sm:$0xff]
      %v1301 = vld [vmem:[#allocation2 + $0x50] sm:$0xff]
      %v1302 = vld [vmem:[#allocation2 + $0x58] sm:$0xff]
      %v1303 = vld [vmem:[#allocation2 + $0x60] sm:$0xff]
      %v1304 = vld [vmem:[#allocation2 + $0x68] sm:$0xff]
      %v1305 = vld [vmem:[#allocation2 + $0x70] sm:$0xff]
      %v1306 = vld [vmem:[#allocation2 + $0x78] sm:$0xff]
      %v1307 = vld [vmem:[#allocation2 + $0x80] sm:$0xff]
      %v1308 = vld [vmem:[#allocation2 + $0x88] sm:$0xff]
      %v1309 = vld [vmem:[#allocation2 + $0x90] sm:$0xff]
      %v1310 = vld [vmem:[#allocation2 + $0x98] sm:$0xff]
      %v1311 = vld [vmem:[#allocation2 + $0xa0] sm:$0xff]
      %v1312 = vld [vmem:[#allocation2 + $0xa8] sm:$0xff]
      %v1313 = vld [vmem:[#allocation2 + $0xb0] sm:$0xff]
      %v1314 = vld [vmem:[#allocation2 + $0xb8] sm:$0xff]
      %v1315 = vld [vmem:[#allocation2 + $0xc0] sm:$0xff]
      %v1316 = vld [vmem:[#allocation2 + $0xc8] sm:$0xff]
      %v1317 = vld [vmem:[#allocation2 + $0xd0] sm:$0xff]
      %v1318 = vld [vmem:[#allocation2 + $0xd8] sm:$0xff]
      %v1319 = vld [vmem:[#allocation2 + $0xe0] sm:$0xff]
      %v1320 = vld [vmem:[#allocation2 + $0xe8] sm:$0xff]
      %v1321 = vld [vmem:[#allocation2 + $0xf0] sm:$0xff]
      %v1322 = vld [vmem:[#allocation2 + $0xf8] sm:$0xff]
      %v1323 = vld [vmem:[#allocation2 + $0x100] sm:$0xff]
      %v1324 = vld [vmem:[#allocation2 + $0x108] sm:$0xff]
      %v1325 = vld [vmem:[#allocation2 + $0x110] sm:$0xff]
      %v1326 = vld [vmem:[#allocation2 + $0x118] sm:$0xff]
      %v1327 = vld [vmem:[#allocation2 + $0x120] sm:$0xff]
      %v1328 = vld [vmem:[#allocation2 + $0x128] sm:$0xff]
      %v1329 = vld [vmem:[#allocation2 + $0x130] sm:$0xff]
      %v1330 = vld [vmem:[#allocation2 + $0x138] sm:$0xff]
      %v1331 = vld [vmem:[#allocation2 + $0x140] sm:$0xff]
      %v1332 = vld [vmem:[#allocation2 + $0x148] sm:$0xff]
      %v1333 = vld [vmem:[#allocation2 + $0x150] sm:$0xff]
      %v1334 = vld [vmem:[#allocation2 + $0x158] sm:$0xff]
      %v1335 = vld [vmem:[#allocation2 + $0x160] sm:$0xff]
      %v1336 = vld [vmem:[#allocation2 + $0x168] sm:$0xff]
      %v1337 = vld [vmem:[#allocation2 + $0x170] sm:$0xff]
      %v1338 = vld [vmem:[#allocation2 + $0x178] sm:$0xff]
      %v1339 = vld [vmem:[#allocation2 + $0x180] sm:$0xff]
      %v1340 = vld [vmem:[#allocation2 + $0x188] sm:$0xff]
      %v1341 = vld [vmem:[#allocation2 + $0x190] sm:$0xff]
      %v1342 = vld [vmem:[#allocation2 + $0x198] sm:$0xff]
      %v1343 = vld [vmem:[#allocation2 + $0x1a0] sm:$0xff]
      %v1344 = vld [vmem:[#allocation2 + $0x1a8] sm:$0xff]
      %v1345 = vld [vmem:[#allocation2 + $0x1b0] sm:$0xff]
      %v1346 = vld [vmem:[#allocation2 + $0x1b8] sm:$0xff]
      %v1347 = vld [vmem:[#allocation2 + $0x1c0] sm:$0xff]
      %v1348 = vld [vmem:[#allocation2 + $0x1c8] sm:$0xff]
      %v1349 = vld [vmem:[#allocation2 + $0x1d0] sm:$0xff]
      %v1350 = vld [vmem:[#allocation2 + $0x1d8] sm:$0xff]
      %v1351 = vld [vmem:[#allocation2 + $0x1e0] sm:$0xff]
      %v1352 = vld [vmem:[#allocation2 + $0x1e8] sm:$0xff]
      %v1353 = vld [vmem:[#allocation2 + $0x1f0] sm:$0xff]
      %v1354 = vld [vmem:[#allocation2 + $0x1f8] sm:$0xff]
      %s1355 = scalar_lea.vmem %s2, 32
      %v1356 = vld [vmem:[%s1355] sm:$0xff]
      %v1357 = vld [vmem:[%s1355 + $0x8] sm:$0xff]
      %v1358 = vld [vmem:[%s1355 + $0x10] sm:$0xff]
      %v1359 = vld [vmem:[%s1355 + $0x18] sm:$0xff]
      %1361 = vset.pattern.permute.xlu0 0
      %1362 = vperm.xlu0 %1361, %v1356
      %v1363 = vpop.permute.xlu0 %1362
      %1366 = vset.pattern.permute.xlu0 0
      %1367 = vperm.xlu0 %1366, %v1357
      %v1368 = vpop.permute.xlu0 %1367
      %1371 = vset.pattern.permute.xlu0 0
      %1372 = vperm.xlu0 %1371, %v1358
      %v1373 = vpop.permute.xlu0 %1372
      %1376 = vset.pattern.permute.xlu0 0
      %1377 = vperm.xlu0 %1376, %v1359
      %v1378 = vpop.permute.xlu0 %1377
      %v1388 = vunpack.c.l.b16 %v1283
      %v1389 = vunpack.c.h.b16 %v1283
      %v1390 = vunpack.c.l.b16 %v1284
      %v1391 = vunpack.c.h.b16 %v1284
      %v1392 = vunpack.c.l.b16 %v1285
      %v1393 = vunpack.c.h.b16 %v1285
      %v1394 = vunpack.c.l.b16 %v1286
      %v1395 = vunpack.c.h.b16 %v1286
      %v1396 = vunpack.c.l.b16 %v1287
      %v1397 = vunpack.c.h.b16 %v1287
      %v1398 = vunpack.c.l.b16 %v1288
      %v1399 = vunpack.c.h.b16 %v1288
      %v1400 = vunpack.c.l.b16 %v1289
      %v1401 = vunpack.c.h.b16 %v1289
      %v1402 = vunpack.c.l.b16 %v1290
      %v1403 = vunpack.c.h.b16 %v1290
      %v1404 = vpack.c.b16 %v1392, %v1388
      %v1405 = vpack.c.b16 %v1393, %v1389
      %v1406 = vpack.c.b16 %v1394, %v1390
      %v1407 = vpack.c.b16 %v1395, %v1391
      %v1408 = vpack.c.b16 %v1400, %v1396
      %v1409 = vpack.c.b16 %v1401, %v1397
      %v1410 = vpack.c.b16 %v1402, %v1398
      %v1411 = vpack.c.b16 %v1403, %v1399
      %1420 = vmatprep.subr.bf16.mxu0 %v1292
      %1421 = vmatpush1.bf16.msra.mxu0 %v1291
      %1422 = vmatprep.subr.bf16.mxu0 %v1294
      %1423 = vmatpush1.bf16.msra.mxu0 %v1293
      %1424 = vmatprep.subr.bf16.mxu0 %v1296
      %1425 = vmatpush1.bf16.msra.mxu0 %v1295
      %1426 = vmatprep.subr.bf16.mxu0 %v1298
      %1427 = vmatpush1.bf16.msra.mxu0 %v1297
      %1428 = vmatprep.subr.bf16.mxu0 %v1300
      %1429 = vmatpush1.bf16.msra.mxu0 %v1299
      %1430 = vmatprep.subr.bf16.mxu0 %v1302
      %1431 = vmatpush1.bf16.msra.mxu0 %v1301
      %1432 = vmatprep.subr.bf16.mxu0 %v1304
      %1433 = vmatpush1.bf16.msra.mxu0 %v1303
      %1434 = vmatprep.subr.bf16.mxu0 %v1306
      %1435 = vmatpush1.bf16.msra.mxu0 %v1305
      %1436 = vmatprep.subr.bf16.mxu0 %v1308
      %1437 = vmatpush1.bf16.msra.mxu0 %v1307
      %1438 = vmatprep.subr.bf16.mxu0 %v1310
      %1439 = vmatpush1.bf16.msra.mxu0 %v1309
      %1440 = vmatprep.subr.bf16.mxu0 %v1312
      %1441 = vmatpush1.bf16.msra.mxu0 %v1311
      %1442 = vmatprep.subr.bf16.mxu0 %v1314
      %1443 = vmatpush1.bf16.msra.mxu0 %v1313
      %1444 = vmatprep.subr.bf16.mxu0 %v1316
      %1445 = vmatpush1.bf16.msra.mxu0 %v1315
      %1446 = vmatprep.subr.bf16.mxu0 %v1318
      %1447 = vmatpush1.bf16.msra.mxu0 %v1317
      %1448 = vmatprep.subr.bf16.mxu0 %v1320
      %1449 = vmatpush1.bf16.msra.mxu0 %v1319
      %1450 = vmatprep.subr.bf16.mxu0 %v1322
      %1451 = vmatpush1.bf16.msra.mxu0 %v1321
      %1452 = vmatprep.mubr.bf16.mxu0 %v1405
      %1453 = vmatmul.mubr.bf16.gmra.mrb[0].mxu0 %v1404
      %v1454 = vpop.f32.mrb[0].mxu0
      %v1455 = vadd.f32 %v1363, %v1454
      %v1456 = vpop.f32.mrb[0].mxu0
      %v1457 = vadd.f32 %v1363, %v1456
      %v1458 = vpop.f32.mrb[0].mxu0
      %v1459 = vadd.f32 %v1368, %v1458
      %v1460 = vpop.f32.mrb[0].mxu0
      %v1461 = vadd.f32 %v1368, %v1460
      %1462 = vmatprep.mubr.bf16.mxu0 %v1409
      %1463 = vmatmul.mubr.bf16.gmra.mrb[0].mxu0 %v1408
      %v1464 = vpop.f32.mrb[0].mxu0
      %v1465 = vadd.f32 %v1373, %v1464
      %v1466 = vpop.f32.mrb[0].mxu0
      %v1467 = vadd.f32 %v1373, %v1466
      %v1468 = vpop.f32.mrb[0].mxu0
      %v1469 = vadd.f32 %v1378, %v1468
      %v1470 = vpop.f32.mrb[0].mxu0
      %v1471 = vadd.f32 %v1378, %v1470
      %1472 = vdwg.mxu0
      %1473 = vmatprep.subr.bf16.mxu0 %v1324
      %1474 = vmatpush1.bf16.msra.mxu0 %v1323
      %1475 = vmatprep.subr.bf16.mxu0 %v1326
      %1476 = vmatpush1.bf16.msra.mxu0 %v1325
      %1477 = vmatprep.subr.bf16.mxu0 %v1328
      %1478 = vmatpush1.bf16.msra.mxu0 %v1327
      %1479 = vmatprep.subr.bf16.mxu0 %v1330
      %1480 = vmatpush1.bf16.msra.mxu0 %v1329
      %1481 = vmatprep.subr.bf16.mxu0 %v1332
      %1482 = vmatpush1.bf16.msra.mxu0 %v1331
      %1483 = vmatprep.subr.bf16.mxu0 %v1334
      %1484 = vmatpush1.bf16.msra.mxu0 %v1333
      %1485 = vmatprep.subr.bf16.mxu0 %v1336
      %1486 = vmatpush1.bf16.msra.mxu0 %v1335
      %1487 = vmatprep.subr.bf16.mxu0 %v1338
      %1488 = vmatpush1.bf16.msra.mxu0 %v1337
      %1489 = vmatprep.subr.bf16.mxu0 %v1340
      %1490 = vmatpush1.bf16.msra.mxu0 %v1339
      %1491 = vmatprep.subr.bf16.mxu0 %v1342
      %1492 = vmatpush1.bf16.msra.mxu0 %v1341
      %1493 = vmatprep.subr.bf16.mxu0 %v1344
      %1494 = vmatpush1.bf16.msra.mxu0 %v1343
      %1495 = vmatprep.subr.bf16.mxu0 %v1346
      %1496 = vmatpush1.bf16.msra.mxu0 %v1345
      %1497 = vmatprep.subr.bf16.mxu0 %v1348
      %1498 = vmatpush1.bf16.msra.mxu0 %v1347
      %1499 = vmatprep.subr.bf16.mxu0 %v1350
      %1500 = vmatpush1.bf16.msra.mxu0 %v1349
      %1501 = vmatprep.subr.bf16.mxu0 %v1352
      %1502 = vmatpush1.bf16.msra.mxu0 %v1351
      %1503 = vmatprep.subr.bf16.mxu0 %v1354
      %1504 = vmatpush1.bf16.msra.mxu0 %v1353
      %1505 = vmatprep.mubr.bf16.mxu0 %v1407
      %1506 = vmatmul.mubr.bf16.gmra.mrb[0].mxu0 %v1406
      %v1507 = vpop.f32.mrb[0].mxu0
      %v1508 = vadd.f32 %v1455, %v1507
      %v1509 = vpop.f32.mrb[0].mxu0
      %v1510 = vadd.f32 %v1457, %v1509
      %v1511 = vpop.f32.mrb[0].mxu0
      %v1512 = vadd.f32 %v1459, %v1511
      %v1513 = vpop.f32.mrb[0].mxu0
      %v1514 = vadd.f32 %v1461, %v1513
      %1515 = vmatprep.mubr.bf16.mxu0 %v1411
      %1516 = vmatmul.mubr.bf16.gmra.mrb[0].mxu0 %v1410
      %v1517 = vpop.f32.mrb[0].mxu0
      %v1518 = vadd.f32 %v1465, %v1517
      %v1519 = vpop.f32.mrb[0].mxu0
      %v1520 = vadd.f32 %v1467, %v1519
      %v1521 = vpop.f32.mrb[0].mxu0
      %v1522 = vadd.f32 %v1469, %v1521
      %v1523 = vpop.f32.mrb[0].mxu0
      %v1524 = vadd.f32 %v1471, %v1523
      %1525 = vdwg.mxu0
      %v1526 = vmax.f32 %v1508, 0.0
      %v1527 = vmax.f32 %v1510, 0.0
      %v1528 = vmax.f32 %v1512, 0.0
      %v1529 = vmax.f32 %v1514, 0.0
      %v1530 = vmax.f32 %v1518, 0.0
      %v1531 = vmax.f32 %v1520, 0.0
      %v1532 = vmax.f32 %v1522, 0.0
      %v1533 = vmax.f32 %v1524, 0.0
      %v1534 = vpack.c.bf16 %v1528, %v1526
      %v1535 = vpack.c.bf16 %v1529, %v1527
      %v1536 = vpack.c.bf16 %v1532, %v1530
      %v1537 = vpack.c.bf16 %v1533, %v1531
      %1542 = vrot.lane.b32.xlu0 %v1534, 17
      %v1543 = vpop.permute.xlu0 %1542
      %1544 = vrot.lane.b32.xlu0 %v1535, 17
      %v1545 = vpop.permute.xlu0 %1544
      %1546 = vrot.lane.b32.xlu0 %v1536, 17
      %v1547 = vpop.permute.xlu0 %1546
      %1548 = vrot.lane.b32.xlu0 %v1537, 17
      %v1549 = vpop.permute.xlu0 %1548
      %v1550 = vsel %vm220, %v1543, %v1545
      %v1551 = vsel %vm220, %v1547, %v1549
      %v1555 = vsel %vm224, 0, %v1543
      %v1558 = vsel %vm224, 0, %v1547
      %v1560 = vmul.bf16 %v1555, %v247
      %v1561 = vmul.bf16 %v1550, %v254
      %v1562 = vmul.bf16 %v1558, %v247
      %v1563 = vmul.bf16 %v1551, %v254
      %1564 = vst [vmem:[#allocation2] sm:$0xff] %v1560
      %1565 = vst [vmem:[#allocation2 + $0x8] sm:$0xff] %v1561
      %1566 = vst [vmem:[#allocation2 + $0x10] sm:$0xff] %v1562
      %1567 = vst [vmem:[#allocation2 + $0x18] sm:$0xff] %v1563
      %1568 = vrot.lane.b32.xlu0 %v1534, 16
      %v1569 = vpop.permute.xlu0 %1568
      %1570 = vrot.lane.b32.xlu0 %v1535, 16
      %v1571 = vpop.permute.xlu0 %1570
      %1572 = vrot.lane.b32.xlu0 %v1536, 16
      %v1573 = vpop.permute.xlu0 %1572
      %1574 = vrot.lane.b32.xlu0 %v1537, 16
      %v1575 = vpop.permute.xlu0 %1574
      %v1576 = vsel %vm269, %v1569, %v1571
      %v1577 = vsel %vm269, %v1573, %v1575
      %v1581 = vsel %vm273, 0, %v1569
      %v1584 = vsel %vm273, 0, %v1573
      %1586 = vst [vmem:[#allocation2 + $0x20] sm:$0xff] %v1581
      %1587 = vst [vmem:[#allocation2 + $0x28] sm:$0xff] %v1576
      %1588 = vst [vmem:[#allocation2 + $0x30] sm:$0xff] %v1584
      %1589 = vst [vmem:[#allocation2 + $0x38] sm:$0xff] %v1577
      %1590 = vrot.lane.b32.xlu0 %v1534, 15
      %v1591 = vpop.permute.xlu0 %1590
      %1592 = vrot.lane.b32.xlu0 %v1535, 15
      %v1593 = vpop.permute.xlu0 %1592
      %1594 = vrot.lane.b32.xlu0 %v1536, 15
      %v1595 = vpop.permute.xlu0 %1594
      %1596 = vrot.lane.b32.xlu0 %v1537, 15
      %v1597 = vpop.permute.xlu0 %1596
      %v1598 = vsel %vm290, %v1591, %v1593
      %v1599 = vsel %vm290, %v1595, %v1597
      %v1603 = vsel %vm294, 0, %v1591
      %v1606 = vsel %vm294, 0, %v1595
      %v1608 = vmul.bf16 %v1603, %v316
      %v1609 = vmul.bf16 %v1598, %v323
      %v1610 = vmul.bf16 %v1606, %v316
      %v1611 = vmul.bf16 %v1599, %v323
      %1612 = vst [vmem:[#allocation2 + $0x40] sm:$0xff] %v1608
      %1613 = vst [vmem:[#allocation2 + $0x48] sm:$0xff] %v1609
      %1614 = vst [vmem:[#allocation2 + $0x50] sm:$0xff] %v1610
      %1615 = vst [vmem:[#allocation2 + $0x58] sm:$0xff] %v1611
      %1616 = vrot.lane.b32.xlu0 %v1534, 14
      %v1617 = vpop.permute.xlu0 %1616
      %1618 = vrot.lane.b32.xlu0 %v1535, 14
      %v1619 = vpop.permute.xlu0 %1618
      %1620 = vrot.lane.b32.xlu0 %v1536, 14
      %v1621 = vpop.permute.xlu0 %1620
      %1622 = vrot.lane.b32.xlu0 %v1537, 14
      %v1623 = vpop.permute.xlu0 %1622
      %v1624 = vsel %vm338, %v1617, %v1619
      %v1625 = vsel %vm338, %v1621, %v1623
      %v1629 = vsel %vm342, 0, %v1617
      %v1632 = vsel %vm342, 0, %v1621
      %v1634 = vmul.bf16 %v1629, %v355
      %v1635 = vmul.bf16 %v1624, %v362
      %v1636 = vmul.bf16 %v1632, %v355
      %v1637 = vmul.bf16 %v1625, %v362
      %1638 = vst [vmem:[#allocation2 + $0x60] sm:$0xff] %v1634
      %1639 = vst [vmem:[#allocation2 + $0x68] sm:$0xff] %v1635
      %1640 = vst [vmem:[#allocation2 + $0x70] sm:$0xff] %v1636
      %1641 = vst [vmem:[#allocation2 + $0x78] sm:$0xff] %v1637
      %1642 = vrot.lane.b32.xlu0 %v1534, 1
      %v1643 = vpop.permute.xlu0 %1642
      %1644 = vrot.lane.b32.xlu0 %v1535, 1
      %v1645 = vpop.permute.xlu0 %1644
      %1646 = vrot.lane.b32.xlu0 %v1536, 1
      %v1647 = vpop.permute.xlu0 %1646
      %1648 = vrot.lane.b32.xlu0 %v1537, 1
      %v1649 = vpop.permute.xlu0 %1648
      %v1650 = vsel %vm377, %v1643, %v1645
      %v1651 = vsel %vm377, %v1647, %v1649
      %v1655 = vsel %vm381, 0, %v1643
      %v1658 = vsel %vm381, 0, %v1647
      %v1660 = vmul.bf16 %v1655, %v247
      %v1661 = vmul.bf16 %v1650, %v254
      %v1662 = vmul.bf16 %v1658, %v247
      %v1663 = vmul.bf16 %v1651, %v254
      %1664 = vst [vmem:[#allocation2 + $0x80] sm:$0xff] %v1660
      %1665 = vst [vmem:[#allocation2 + $0x88] sm:$0xff] %v1661
      %1666 = vst [vmem:[#allocation2 + $0x90] sm:$0xff] %v1662
      %1667 = vst [vmem:[#allocation2 + $0x98] sm:$0xff] %v1663
      %1668 = vst [vmem:[#allocation2 + $0xa0] sm:$0xff] %v1534
      %1669 = vst [vmem:[#allocation2 + $0xa8] sm:$0xff] %v1535
      %1670 = vst [vmem:[#allocation2 + $0xb0] sm:$0xff] %v1536
      %1671 = vst [vmem:[#allocation2 + $0xb8] sm:$0xff] %v1537
      %1672 = vrot.lane.b32.xlu0 %v1534, 127
      %v1673 = vpop.permute.xlu0 %1672
      %1674 = vrot.lane.b32.xlu0 %v1535, 127
      %v1675 = vpop.permute.xlu0 %1674
      %1676 = vrot.lane.b32.xlu0 %v1536, 127
      %v1677 = vpop.permute.xlu0 %1676
      %1678 = vrot.lane.b32.xlu0 %v1537, 127
      %v1679 = vpop.permute.xlu0 %1678
      %v1680 = vsel %vm406, %v1673, %v1675
      %v1681 = vsel %vm406, %v1677, %v1679
      %v1685 = vsel %vm410, %v1675, 0
      %v1688 = vsel %vm410, %v1679, 0
      %v1690 = vmul.bf16 %v1680, %v316
      %v1691 = vmul.bf16 %v1685, %v323
      %v1692 = vmul.bf16 %v1681, %v316
      %v1693 = vmul.bf16 %v1688, %v323
      %1694 = vst [vmem:[#allocation2 + $0xc0] sm:$0xff] %v1690
      %1695 = vst [vmem:[#allocation2 + $0xc8] sm:$0xff] %v1691
      %1696 = vst [vmem:[#allocation2 + $0xd0] sm:$0xff] %v1692
      %1697 = vst [vmem:[#allocation2 + $0xd8] sm:$0xff] %v1693
      %1698 = vrot.lane.b32.xlu0 %v1534, 126
      %v1699 = vpop.permute.xlu0 %1698
      %1700 = vrot.lane.b32.xlu0 %v1535, 126
      %v1701 = vpop.permute.xlu0 %1700
      %1702 = vrot.lane.b32.xlu0 %v1536, 126
      %v1703 = vpop.permute.xlu0 %1702
      %1704 = vrot.lane.b32.xlu0 %v1537, 126
      %v1705 = vpop.permute.xlu0 %1704
      %v1706 = vsel %vm431, %v1699, %v1701
      %v1707 = vsel %vm431, %v1703, %v1705
      %v1711 = vsel %vm435, %v1701, 0
      %v1714 = vsel %vm435, %v1705, 0
      %v1716 = vmul.bf16 %v1706, %v355
      %v1717 = vmul.bf16 %v1711, %v362
      %v1718 = vmul.bf16 %v1707, %v355
      %v1719 = vmul.bf16 %v1714, %v362
      %1720 = vst [vmem:[#allocation2 + $0xe0] sm:$0xff] %v1716
      %1721 = vst [vmem:[#allocation2 + $0xe8] sm:$0xff] %v1717
      %1722 = vst [vmem:[#allocation2 + $0xf0] sm:$0xff] %v1718
      %1723 = vst [vmem:[#allocation2 + $0xf8] sm:$0xff] %v1719
      %1724 = vrot.lane.b32.xlu0 %v1534, 113
      %v1725 = vpop.permute.xlu0 %1724
      %1726 = vrot.lane.b32.xlu0 %v1535, 113
      %v1727 = vpop.permute.xlu0 %1726
      %1728 = vrot.lane.b32.xlu0 %v1536, 113
      %v1729 = vpop.permute.xlu0 %1728
      %1730 = vrot.lane.b32.xlu0 %v1537, 113
      %v1731 = vpop.permute.xlu0 %1730
      %v1732 = vsel %vm456, %v1725, %v1727
      %v1733 = vsel %vm456, %v1729, %v1731
      %v1737 = vsel %vm460, %v1727, 0
      %v1740 = vsel %vm460, %v1731, 0
      %v1742 = vmul.bf16 %v1732, %v247
      %v1743 = vmul.bf16 %v1737, %v254
      %v1744 = vmul.bf16 %v1733, %v247
      %v1745 = vmul.bf16 %v1740, %v254
      %1746 = vst [vmem:[#allocation2 + $0x100] sm:$0xff] %v1742
      %1747 = vst [vmem:[#allocation2 + $0x108] sm:$0xff] %v1743
      %1748 = vst [vmem:[#allocation2 + $0x110] sm:$0xff] %v1744
      %1749 = vst [vmem:[#allocation2 + $0x118] sm:$0xff] %v1745
      %1750 = vrot.lane.b32.xlu0 %v1534, 112
      %v1751 = vpop.permute.xlu0 %1750
      %1752 = vrot.lane.b32.xlu0 %v1535, 112
      %v1753 = vpop.permute.xlu0 %1752
      %1754 = vrot.lane.b32.xlu0 %v1536, 112
      %v1755 = vpop.permute.xlu0 %1754
      %1756 = vrot.lane.b32.xlu0 %v1537, 112
      %v1757 = vpop.permute.xlu0 %1756
      %v1758 = vsel %vm481, %v1751, %v1753
      %v1759 = vsel %vm481, %v1755, %v1757
      %v1763 = vsel %vm485, %v1753, 0
      %v1766 = vsel %vm485, %v1757, 0
      %1768 = vst [vmem:[#allocation2 + $0x120] sm:$0xff] %v1758
      %1769 = vst [vmem:[#allocation2 + $0x128] sm:$0xff] %v1763
      %1770 = vst [vmem:[#allocation2 + $0x130] sm:$0xff] %v1759
      %1771 = vst [vmem:[#allocation2 + $0x138] sm:$0xff] %v1766
      %1772 = vrot.lane.b32.xlu0 %v1534, 111
      %v1773 = vpop.permute.xlu0 %1772
      %1774 = vrot.lane.b32.xlu0 %v1535, 111
      %v1775 = vpop.permute.xlu0 %1774
      %1776 = vrot.lane.b32.xlu0 %v1536, 111
      %v1777 = vpop.permute.xlu0 %1776
      %1778 = vrot.lane.b32.xlu0 %v1537, 111
      %v1779 = vpop.permute.xlu0 %1778
      %v1780 = vsel %vm502, %v1773, %v1775
      %v1781 = vsel %vm502, %v1777, %v1779
      %v1785 = vsel %vm506, %v1775, 0
      %v1788 = vsel %vm506, %v1779, 0
      %v1790 = vmul.bf16 %v1780, %v316
      %v1791 = vmul.bf16 %v1785, %v323
      %v1792 = vmul.bf16 %v1781, %v316
      %v1793 = vmul.bf16 %v1788, %v323
      %1794 = vst [vmem:[#allocation2 + $0x140] sm:$0xff] %v1790
      %1795 = vst [vmem:[#allocation2 + $0x148] sm:$0xff] %v1791
      %1796 = vst [vmem:[#allocation2 + $0x150] sm:$0xff] %v1792
      %1797 = vst [vmem:[#allocation2 + $0x158] sm:$0xff] %v1793
      %1798 = vrot.lane.b32.xlu0 %v1534, 110
      %v1799 = vpop.permute.xlu0 %1798
      %1800 = vrot.lane.b32.xlu0 %v1535, 110
      %v1801 = vpop.permute.xlu0 %1800
      %1802 = vrot.lane.b32.xlu0 %v1536, 110
      %v1803 = vpop.permute.xlu0 %1802
      %1804 = vrot.lane.b32.xlu0 %v1537, 110
      %v1805 = vpop.permute.xlu0 %1804
      %v1806 = vsel %vm527, %v1799, %v1801
      %v1807 = vsel %vm527, %v1803, %v1805
      %v1811 = vsel %vm531, %v1801, 0
      %v1814 = vsel %vm531, %v1805, 0
      %v1816 = vmul.bf16 %v1806, %v355
      %v1817 = vmul.bf16 %v1811, %v362
      %v1818 = vmul.bf16 %v1807, %v355
      %v1819 = vmul.bf16 %v1814, %v362
      %1820 = vst [vmem:[#allocation2 + $0x160] sm:$0xff] %v1816
      %1821 = vst [vmem:[#allocation2 + $0x168] sm:$0xff] %v1817
      %1822 = vst [vmem:[#allocation2 + $0x170] sm:$0xff] %v1818
      %1823 = vst [vmem:[#allocation2 + $0x178] sm:$0xff] %v1819
      %1824 = vrot.lane.b32.xlu0 %v1534, 97
      %v1825 = vpop.permute.xlu0 %1824
      %1826 = vrot.lane.b32.xlu0 %v1535, 97
      %v1827 = vpop.permute.xlu0 %1826
      %1828 = vrot.lane.b32.xlu0 %v1536, 97
      %v1829 = vpop.permute.xlu0 %1828
      %1830 = vrot.lane.b32.xlu0 %v1537, 97
      %v1831 = vpop.permute.xlu0 %1830
      %v1832 = vsel %vm552, %v1825, %v1827
      %v1833 = vsel %vm552, %v1829, %v1831
      %v1837 = vsel %vm556, %v1827, 0
      %v1840 = vsel %vm556, %v1831, 0
      %v1842 = vmul.bf16 %v1832, %v247
      %v1843 = vmul.bf16 %v1837, %v254
      %v1844 = vmul.bf16 %v1833, %v247
      %v1845 = vmul.bf16 %v1840, %v254
      %1846 = vst [vmem:[#allocation2 + $0x180] sm:$0xff] %v1842
      %1847 = vst [vmem:[#allocation2 + $0x188] sm:$0xff] %v1843
      %1848 = vst [vmem:[#allocation2 + $0x190] sm:$0xff] %v1844
      %1849 = vst [vmem:[#allocation2 + $0x198] sm:$0xff] %v1845
      %1850 = vrot.lane.b32.xlu0 %v1534, 96
      %v1851 = vpop.permute.xlu0 %1850
      %1852 = vrot.lane.b32.xlu0 %v1535, 96
      %v1853 = vpop.permute.xlu0 %1852
      %1854 = vrot.lane.b32.xlu0 %v1536, 96
      %v1855 = vpop.permute.xlu0 %1854
      %1856 = vrot.lane.b32.xlu0 %v1537, 96
      %v1857 = vpop.permute.xlu0 %1856
      %v1858 = vsel %vm577, %v1851, %v1853
      %v1859 = vsel %vm577, %v1855, %v1857
      %v1863 = vsel %vm581, %v1853, 0
      %v1866 = vsel %vm581, %v1857, 0
      %1868 = vst [vmem:[#allocation2 + $0x1a0] sm:$0xff] %v1858
      %1869 = vst [vmem:[#allocation2 + $0x1a8] sm:$0xff] %v1863
      %1870 = vst [vmem:[#allocation2 + $0x1b0] sm:$0xff] %v1859
      %1871 = vst [vmem:[#allocation2 + $0x1b8] sm:$0xff] %v1866
      %1872 = vrot.lane.b32.xlu0 %v1534, 95
      %v1873 = vpop.permute.xlu0 %1872
      %1874 = vrot.lane.b32.xlu0 %v1535, 95
      %v1875 = vpop.permute.xlu0 %1874
      %1876 = vrot.lane.b32.xlu0 %v1536, 95
      %v1877 = vpop.permute.xlu0 %1876
      %1878 = vrot.lane.b32.xlu0 %v1537, 95
      %v1879 = vpop.permute.xlu0 %1878
      %v1880 = vsel %vm598, %v1873, %v1875
      %v1881 = vsel %vm598, %v1877, %v1879
      %v1885 = vsel %vm602, %v1875, 0
      %v1888 = vsel %vm602, %v1879, 0
      %v1890 = vmul.bf16 %v1880, %v316
      %v1891 = vmul.bf16 %v1885, %v323
      %v1892 = vmul.bf16 %v1881, %v316
      %v1893 = vmul.bf16 %v1888, %v323
      %1894 = vst [vmem:[#allocation2 + $0x1c0] sm:$0xff] %v1890
      %1895 = vst [vmem:[#allocation2 + $0x1c8] sm:$0xff] %v1891
      %1896 = vst [vmem:[#allocation2 + $0x1d0] sm:$0xff] %v1892
      %1897 = vst [vmem:[#allocation2 + $0x1d8] sm:$0xff] %v1893
      %1898 = vrot.lane.b32.xlu0 %v1534, 94
      %v1899 = vpop.permute.xlu0 %1898
      %1900 = vrot.lane.b32.xlu0 %v1535, 94
      %v1901 = vpop.permute.xlu0 %1900
      %1902 = vrot.lane.b32.xlu0 %v1536, 94
      %v1903 = vpop.permute.xlu0 %1902
      %1904 = vrot.lane.b32.xlu0 %v1537, 94
      %v1905 = vpop.permute.xlu0 %1904
      %v1906 = vsel %vm623, %v1899, %v1901
      %v1907 = vsel %vm623, %v1903, %v1905
      %v1911 = vsel %vm627, %v1901, 0
      %v1914 = vsel %vm627, %v1905, 0
      %v1916 = vmul.bf16 %v1906, %v355
      %v1917 = vmul.bf16 %v1911, %v362
      %v1918 = vmul.bf16 %v1907, %v355
      %v1919 = vmul.bf16 %v1914, %v362
      %1920 = vst [vmem:[#allocation2 + $0x1e0] sm:$0xff] %v1916
      %1921 = vst [vmem:[#allocation2 + $0x1e8] sm:$0xff] %v1917
      %1922 = vst [vmem:[#allocation2 + $0x1f0] sm:$0xff] %v1918
      %1923 = vst [vmem:[#allocation2 + $0x1f8] sm:$0xff] %v1919
      %s1924 = scalar_lea.vmem %s1, 128
      %v1925 = vld [vmem:[%s1924] sm:$0xff]
      %v1926 = vld [vmem:[%s1924 + $0x8] sm:$0xff]
      %v1927 = vld [vmem:[%s1924 + $0x10] sm:$0xff]
      %v1928 = vld [vmem:[%s1924 + $0x18] sm:$0xff]
      %v1929 = vld [vmem:[%s1924 + $0x20] sm:$0xff]
      %v1930 = vld [vmem:[%s1924 + $0x28] sm:$0xff]
      %v1931 = vld [vmem:[%s1924 + $0x30] sm:$0xff]
      %v1932 = vld [vmem:[%s1924 + $0x38] sm:$0xff]
      %v1933 = vld [vmem:[#allocation2] sm:$0xff]
      %v1934 = vld [vmem:[#allocation2 + $0x8] sm:$0xff]
      %v1935 = vld [vmem:[#allocation2 + $0x10] sm:$0xff]
      %v1936 = vld [vmem:[#allocation2 + $0x18] sm:$0xff]
      %v1937 = vld [vmem:[#allocation2 + $0x20] sm:$0xff]
      %v1938 = vld [vmem:[#allocation2 + $0x28] sm:$0xff]
      %v1939 = vld [vmem:[#allocation2 + $0x30] sm:$0xff]
      %v1940 = vld [vmem:[#allocation2 + $0x38] sm:$0xff]
      %v1941 = vld [vmem:[#allocation2 + $0x40] sm:$0xff]
      %v1942 = vld [vmem:[#allocation2 + $0x48] sm:$0xff]
      %v1943 = vld [vmem:[#allocation2 + $0x50] sm:$0xff]
      %v1944 = vld [vmem:[#allocation2 + $0x58] sm:$0xff]
      %v1945 = vld [vmem:[#allocation2 + $0x60] sm:$0xff]
      %v1946 = vld [vmem:[#allocation2 + $0x68] sm:$0xff]
      %v1947 = vld [vmem:[#allocation2 + $0x70] sm:$0xff]
      %v1948 = vld [vmem:[#allocation2 + $0x78] sm:$0xff]
      %v1949 = vld [vmem:[#allocation2 + $0x80] sm:$0xff]
      %v1950 = vld [vmem:[#allocation2 + $0x88] sm:$0xff]
      %v1951 = vld [vmem:[#allocation2 + $0x90] sm:$0xff]
      %v1952 = vld [vmem:[#allocation2 + $0x98] sm:$0xff]
      %v1953 = vld [vmem:[#allocation2 + $0xa0] sm:$0xff]
      %v1954 = vld [vmem:[#allocation2 + $0xa8] sm:$0xff]
      %v1955 = vld [vmem:[#allocation2 + $0xb0] sm:$0xff]
      %v1956 = vld [vmem:[#allocation2 + $0xb8] sm:$0xff]
      %v1957 = vld [vmem:[#allocation2 + $0xc0] sm:$0xff]
      %v1958 = vld [vmem:[#allocation2 + $0xc8] sm:$0xff]
      %v1959 = vld [vmem:[#allocation2 + $0xd0] sm:$0xff]
      %v1960 = vld [vmem:[#allocation2 + $0xd8] sm:$0xff]
      %v1961 = vld [vmem:[#allocation2 + $0xe0] sm:$0xff]
      %v1962 = vld [vmem:[#allocation2 + $0xe8] sm:$0xff]
      %v1963 = vld [vmem:[#allocation2 + $0xf0] sm:$0xff]
      %v1964 = vld [vmem:[#allocation2 + $0xf8] sm:$0xff]
      %v1965 = vld [vmem:[#allocation2 + $0x100] sm:$0xff]
      %v1966 = vld [vmem:[#allocation2 + $0x108] sm:$0xff]
      %v1967 = vld [vmem:[#allocation2 + $0x110] sm:$0xff]
      %v1968 = vld [vmem:[#allocation2 + $0x118] sm:$0xff]
      %v1969 = vld [vmem:[#allocation2 + $0x120] sm:$0xff]
      %v1970 = vld [vmem:[#allocation2 + $0x128] sm:$0xff]
      %v1971 = vld [vmem:[#allocation2 + $0x130] sm:$0xff]
      %v1972 = vld [vmem:[#allocation2 + $0x138] sm:$0xff]
      %v1973 = vld [vmem:[#allocation2 + $0x140] sm:$0xff]
      %v1974 = vld [vmem:[#allocation2 + $0x148] sm:$0xff]
      %v1975 = vld [vmem:[#allocation2 + $0x150] sm:$0xff]
      %v1976 = vld [vmem:[#allocation2 + $0x158] sm:$0xff]
      %v1977 = vld [vmem:[#allocation2 + $0x160] sm:$0xff]
      %v1978 = vld [vmem:[#allocation2 + $0x168] sm:$0xff]
      %v1979 = vld [vmem:[#allocation2 + $0x170] sm:$0xff]
      %v1980 = vld [vmem:[#allocation2 + $0x178] sm:$0xff]
      %v1981 = vld [vmem:[#allocation2 + $0x180] sm:$0xff]
      %v1982 = vld [vmem:[#allocation2 + $0x188] sm:$0xff]
      %v1983 = vld [vmem:[#allocation2 + $0x190] sm:$0xff]
      %v1984 = vld [vmem:[#allocation2 + $0x198] sm:$0xff]
      %v1985 = vld [vmem:[#allocation2 + $0x1a0] sm:$0xff]
      %v1986 = vld [vmem:[#allocation2 + $0x1a8] sm:$0xff]
      %v1987 = vld [vmem:[#allocation2 + $0x1b0] sm:$0xff]
      %v1988 = vld [vmem:[#allocation2 + $0x1b8] sm:$0xff]
      %v1989 = vld [vmem:[#allocation2 + $0x1c0] sm:$0xff]
      %v1990 = vld [vmem:[#allocation2 + $0x1c8] sm:$0xff]
      %v1991 = vld [vmem:[#allocation2 + $0x1d0] sm:$0xff]
      %v1992 = vld [vmem:[#allocation2 + $0x1d8] sm:$0xff]
      %v1993 = vld [vmem:[#allocation2 + $0x1e0] sm:$0xff]
      %v1994 = vld [vmem:[#allocation2 + $0x1e8] sm:$0xff]
      %v1995 = vld [vmem:[#allocation2 + $0x1f0] sm:$0xff]
      %v1996 = vld [vmem:[#allocation2 + $0x1f8] sm:$0xff]
      %s1997 = scalar_lea.vmem %s2, 64
      %v1998 = vld [vmem:[%s1997] sm:$0xff]
      %v1999 = vld [vmem:[%s1997 + $0x8] sm:$0xff]
      %v2000 = vld [vmem:[%s1997 + $0x10] sm:$0xff]
      %v2001 = vld [vmem:[%s1997 + $0x18] sm:$0xff]
      %2003 = vset.pattern.permute.xlu0 0
      %2004 = vperm.xlu0 %2003, %v1998
      %v2005 = vpop.permute.xlu0 %2004
      %2008 = vset.pattern.permute.xlu0 0
      %2009 = vperm.xlu0 %2008, %v1999
      %v2010 = vpop.permute.xlu0 %2009
      %2013 = vset.pattern.permute.xlu0 0
      %2014 = vperm.xlu0 %2013, %v2000
      %v2015 = vpop.permute.xlu0 %2014
      %2018 = vset.pattern.permute.xlu0 0
      %2019 = vperm.xlu0 %2018, %v2001
      %v2020 = vpop.permute.xlu0 %2019
      %v2030 = vunpack.c.l.b16 %v1925
      %v2031 = vunpack.c.h.b16 %v1925
      %v2032 = vunpack.c.l.b16 %v1926
      %v2033 = vunpack.c.h.b16 %v1926
      %v2034 = vunpack.c.l.b16 %v1927
      %v2035 = vunpack.c.h.b16 %v1927
      %v2036 = vunpack.c.l.b16 %v1928
      %v2037 = vunpack.c.h.b16 %v1928
      %v2038 = vunpack.c.l.b16 %v1929
      %v2039 = vunpack.c.h.b16 %v1929
      %v2040 = vunpack.c.l.b16 %v1930
      %v2041 = vunpack.c.h.b16 %v1930
      %v2042 = vunpack.c.l.b16 %v1931
      %v2043 = vunpack.c.h.b16 %v1931
      %v2044 = vunpack.c.l.b16 %v1932
      %v2045 = vunpack.c.h.b16 %v1932
      %v2046 = vpack.c.b16 %v2034, %v2030
      %v2047 = vpack.c.b16 %v2035, %v2031
      %v2048 = vpack.c.b16 %v2036, %v2032
      %v2049 = vpack.c.b16 %v2037, %v2033
      %v2050 = vpack.c.b16 %v2042, %v2038
      %v2051 = vpack.c.b16 %v2043, %v2039
      %v2052 = vpack.c.b16 %v2044, %v2040
      %v2053 = vpack.c.b16 %v2045, %v2041
      %2062 = vmatprep.subr.bf16.mxu0 %v1934
      %2063 = vmatpush1.bf16.msra.mxu0 %v1933
      %2064 = vmatprep.subr.bf16.mxu0 %v1936
      %2065 = vmatpush1.bf16.msra.mxu0 %v1935
      %2066 = vmatprep.subr.bf16.mxu0 %v1938
      %2067 = vmatpush1.bf16.msra.mxu0 %v1937
      %2068 = vmatprep.subr.bf16.mxu0 %v1940
      %2069 = vmatpush1.bf16.msra.mxu0 %v1939
      %2070 = vmatprep.subr.bf16.mxu0 %v1942
      %2071 = vmatpush1.bf16.msra.mxu0 %v1941
      %2072 = vmatprep.subr.bf16.mxu0 %v1944
      %2073 = vmatpush1.bf16.msra.mxu0 %v1943
      %2074 = vmatprep.subr.bf16.mxu0 %v1946
      %2075 = vmatpush1.bf16.msra.mxu0 %v1945
      %2076 = vmatprep.subr.bf16.mxu0 %v1948
      %2077 = vmatpush1.bf16.msra.mxu0 %v1947
      %2078 = vmatprep.subr.bf16.mxu0 %v1950
      %2079 = vmatpush1.bf16.msra.mxu0 %v1949
      %2080 = vmatprep.subr.bf16.mxu0 %v1952
      %2081 = vmatpush1.bf16.msra.mxu0 %v1951
      %2082 = vmatprep.subr.bf16.mxu0 %v1954
      %2083 = vmatpush1.bf16.msra.mxu0 %v1953
      %2084 = vmatprep.subr.bf16.mxu0 %v1956
      %2085 = vmatpush1.bf16.msra.mxu0 %v1955
      %2086 = vmatprep.subr.bf16.mxu0 %v1958
      %2087 = vmatpush1.bf16.msra.mxu0 %v1957
      %2088 = vmatprep.subr.bf16.mxu0 %v1960
      %2089 = vmatpush1.bf16.msra.mxu0 %v1959
      %2090 = vmatprep.subr.bf16.mxu0 %v1962
      %2091 = vmatpush1.bf16.msra.mxu0 %v1961
      %2092 = vmatprep.subr.bf16.mxu0 %v1964
      %2093 = vmatpush1.bf16.msra.mxu0 %v1963
      %2094 = vmatprep.mubr.bf16.mxu0 %v2047
      %2095 = vmatmul.mubr.bf16.gmra.mrb[0].mxu0 %v2046
      %v2096 = vpop.f32.mrb[0].mxu0
      %v2097 = vadd.f32 %v2005, %v2096
      %v2098 = vpop.f32.mrb[0].mxu0
      %v2099 = vadd.f32 %v2005, %v2098
      %v2100 = vpop.f32.mrb[0].mxu0
      %v2101 = vadd.f32 %v2010, %v2100
      %v2102 = vpop.f32.mrb[0].mxu0
      %v2103 = vadd.f32 %v2010, %v2102
      %2104 = vmatprep.mubr.bf16.mxu0 %v2051
      %2105 = vmatmul.mubr.bf16.gmra.mrb[0].mxu0 %v2050
      %v2106 = vpop.f32.mrb[0].mxu0
      %v2107 = vadd.f32 %v2015, %v2106
      %v2108 = vpop.f32.mrb[0].mxu0
      %v2109 = vadd.f32 %v2015, %v2108
      %v2110 = vpop.f32.mrb[0].mxu0
      %v2111 = vadd.f32 %v2020, %v2110
      %v2112 = vpop.f32.mrb[0].mxu0
      %v2113 = vadd.f32 %v2020, %v2112
      %2114 = vdwg.mxu0
      %2115 = vmatprep.subr.bf16.mxu0 %v1966
      %2116 = vmatpush1.bf16.msra.mxu0 %v1965
      %2117 = vmatprep.subr.bf16.mxu0 %v1968
      %2118 = vmatpush1.bf16.msra.mxu0 %v1967
      %2119 = vmatprep.subr.bf16.mxu0 %v1970
      %2120 = vmatpush1.bf16.msra.mxu0 %v1969
      %2121 = vmatprep.subr.bf16.mxu0 %v1972
      %2122 = vmatpush1.bf16.msra.mxu0 %v1971
      %2123 = vmatprep.subr.bf16.mxu0 %v1974
      %2124 = vmatpush1.bf16.msra.mxu0 %v1973
      %2125 = vmatprep.subr.bf16.mxu0 %v1976
      %2126 = vmatpush1.bf16.msra.mxu0 %v1975
      %2127 = vmatprep.subr.bf16.mxu0 %v1978
      %2128 = vmatpush1.bf16.msra.mxu0 %v1977
      %2129 = vmatprep.subr.bf16.mxu0 %v1980
      %2130 = vmatpush1.bf16.msra.mxu0 %v1979
      %2131 = vmatprep.subr.bf16.mxu0 %v1982
      %2132 = vmatpush1.bf16.msra.mxu0 %v1981
      %2133 = vmatprep.subr.bf16.mxu0 %v1984
      %2134 = vmatpush1.bf16.msra.mxu0 %v1983
      %2135 = vmatprep.subr.bf16.mxu0 %v1986
      %2136 = vmatpush1.bf16.msra.mxu0 %v1985
      %2137 = vmatprep.subr.bf16.mxu0 %v1988
      %2138 = vmatpush1.bf16.msra.mxu0 %v1987
      %2139 = vmatprep.subr.bf16.mxu0 %v1990
      %2140 = vmatpush1.bf16.msra.mxu0 %v1989
      %2141 = vmatprep.subr.bf16.mxu0 %v1992
      %2142 = vmatpush1.bf16.msra.mxu0 %v1991
      %2143 = vmatprep.subr.bf16.mxu0 %v1994
      %2144 = vmatpush1.bf16.msra.mxu0 %v1993
      %2145 = vmatprep.subr.bf16.mxu0 %v1996
      %2146 = vmatpush1.bf16.msra.mxu0 %v1995
      %2147 = vmatprep.mubr.bf16.mxu0 %v2049
      %2148 = vmatmul.mubr.bf16.gmra.mrb[0].mxu0 %v2048
      %v2149 = vpop.f32.mrb[0].mxu0
      %v2150 = vadd.f32 %v2097, %v2149
      %v2151 = vpop.f32.mrb[0].mxu0
      %v2152 = vadd.f32 %v2099, %v2151
      %v2153 = vpop.f32.mrb[0].mxu0
      %v2154 = vadd.f32 %v2101, %v2153
      %v2155 = vpop.f32.mrb[0].mxu0
      %v2156 = vadd.f32 %v2103, %v2155
      %2157 = vmatprep.mubr.bf16.mxu0 %v2053
      %2158 = vmatmul.mubr.bf16.gmra.mrb[0].mxu0 %v2052
      %v2159 = vpop.f32.mrb[0].mxu0
      %v2160 = vadd.f32 %v2107, %v2159
      %v2161 = vpop.f32.mrb[0].mxu0
      %v2162 = vadd.f32 %v2109, %v2161
      %v2163 = vpop.f32.mrb[0].mxu0
      %v2164 = vadd.f32 %v2111, %v2163
      %v2165 = vpop.f32.mrb[0].mxu0
      %v2166 = vadd.f32 %v2113, %v2165
      %2167 = vdwg.mxu0
      %v2168 = vmax.f32 %v2150, 0.0
      %v2169 = vmax.f32 %v2152, 0.0
      %v2170 = vmax.f32 %v2154, 0.0
      %v2171 = vmax.f32 %v2156, 0.0
      %v2172 = vmax.f32 %v2160, 0.0
      %v2173 = vmax.f32 %v2162, 0.0
      %v2174 = vmax.f32 %v2164, 0.0
      %v2175 = vmax.f32 %v2166, 0.0
      %v2176 = vpack.c.bf16 %v2170, %v2168
      %v2177 = vpack.c.bf16 %v2171, %v2169
      %v2178 = vpack.c.bf16 %v2174, %v2172
      %v2179 = vpack.c.bf16 %v2175, %v2173
      %2184 = vrot.lane.b32.xlu0 %v2176, 17
      %v2185 = vpop.permute.xlu0 %2184
      %2186 = vrot.lane.b32.xlu0 %v2177, 17
      %v2187 = vpop.permute.xlu0 %2186
      %2188 = vrot.lane.b32.xlu0 %v2178, 17
      %v2189 = vpop.permute.xlu0 %2188
      %2190 = vrot.lane.b32.xlu0 %v2179, 17
      %v2191 = vpop.permute.xlu0 %2190
      %v2192 = vsel %vm220, %v2185, %v2187
      %v2193 = vsel %vm220, %v2189, %v2191
      %v2197 = vsel %vm224, 0, %v2185
      %v2200 = vsel %vm224, 0, %v2189
      %v2202 = vmul.bf16 %v2197, %v247
      %v2203 = vmul.bf16 %v2192, %v254
      %v2204 = vmul.bf16 %v2200, %v247
      %v2205 = vmul.bf16 %v2193, %v254
      %2206 = vst [vmem:[#allocation2] sm:$0xff] %v2202
      %2207 = vst [vmem:[#allocation2 + $0x8] sm:$0xff] %v2203
      %2208 = vst [vmem:[#allocation2 + $0x10] sm:$0xff] %v2204
      %2209 = vst [vmem:[#allocation2 + $0x18] sm:$0xff] %v2205
      %2210 = vrot.lane.b32.xlu0 %v2176, 16
      %v2211 = vpop.permute.xlu0 %2210
      %2212 = vrot.lane.b32.xlu0 %v2177, 16
      %v2213 = vpop.permute.xlu0 %2212
      %2214 = vrot.lane.b32.xlu0 %v2178, 16
      %v2215 = vpop.permute.xlu0 %2214
      %2216 = vrot.lane.b32.xlu0 %v2179, 16
      %v2217 = vpop.permute.xlu0 %2216
      %v2218 = vsel %vm269, %v2211, %v2213
      %v2219 = vsel %vm269, %v2215, %v2217
      %v2223 = vsel %vm273, 0, %v2211
      %v2226 = vsel %vm273, 0, %v2215
      %2228 = vst [vmem:[#allocation2 + $0x20] sm:$0xff] %v2223
      %2229 = vst [vmem:[#allocation2 + $0x28] sm:$0xff] %v2218
      %2230 = vst [vmem:[#allocation2 + $0x30] sm:$0xff] %v2226
      %2231 = vst [vmem:[#allocation2 + $0x38] sm:$0xff] %v2219
      %2232 = vrot.lane.b32.xlu0 %v2176, 15
      %v2233 = vpop.permute.xlu0 %2232
      %2234 = vrot.lane.b32.xlu0 %v2177, 15
      %v2235 = vpop.permute.xlu0 %2234
      %2236 = vrot.lane.b32.xlu0 %v2178, 15
      %v2237 = vpop.permute.xlu0 %2236
      %2238 = vrot.lane.b32.xlu0 %v2179, 15
      %v2239 = vpop.permute.xlu0 %2238
      %v2240 = vsel %vm290, %v2233, %v2235
      %v2241 = vsel %vm290, %v2237, %v2239
      %v2245 = vsel %vm294, 0, %v2233
      %v2248 = vsel %vm294, 0, %v2237
      %v2250 = vmul.bf16 %v2245, %v316
      %v2251 = vmul.bf16 %v2240, %v323
      %v2252 = vmul.bf16 %v2248, %v316
      %v2253 = vmul.bf16 %v2241, %v323
      %2254 = vst [vmem:[#allocation2 + $0x40] sm:$0xff] %v2250
      %2255 = vst [vmem:[#allocation2 + $0x48] sm:$0xff] %v2251
      %2256 = vst [vmem:[#allocation2 + $0x50] sm:$0xff] %v2252
      %2257 = vst [vmem:[#allocation2 + $0x58] sm:$0xff] %v2253
      %2258 = vrot.lane.b32.xlu0 %v2176, 14
      %v2259 = vpop.permute.xlu0 %2258
      %2260 = vrot.lane.b32.xlu0 %v2177, 14
      %v2261 = vpop.permute.xlu0 %2260
      %2262 = vrot.lane.b32.xlu0 %v2178, 14
      %v2263 = vpop.permute.xlu0 %2262
      %2264 = vrot.lane.b32.xlu0 %v2179, 14
      %v2265 = vpop.permute.xlu0 %2264
      %v2266 = vsel %vm338, %v2259, %v2261
      %v2267 = vsel %vm338, %v2263, %v2265
      %v2271 = vsel %vm342, 0, %v2259
      %v2274 = vsel %vm342, 0, %v2263
      %v2276 = vmul.bf16 %v2271, %v355
      %v2277 = vmul.bf16 %v2266, %v362
      %v2278 = vmul.bf16 %v2274, %v355
      %v2279 = vmul.bf16 %v2267, %v362
      %2280 = vst [vmem:[#allocation2 + $0x60] sm:$0xff] %v2276
      %2281 = vst [vmem:[#allocation2 + $0x68] sm:$0xff] %v2277
      %2282 = vst [vmem:[#allocation2 + $0x70] sm:$0xff] %v2278
      %2283 = vst [vmem:[#allocation2 + $0x78] sm:$0xff] %v2279
      %2284 = vrot.lane.b32.xlu0 %v2176, 1
      %v2285 = vpop.permute.xlu0 %2284
      %2286 = vrot.lane.b32.xlu0 %v2177, 1
      %v2287 = vpop.permute.xlu0 %2286
      %2288 = vrot.lane.b32.xlu0 %v2178, 1
      %v2289 = vpop.permute.xlu0 %2288
      %2290 = vrot.lane.b32.xlu0 %v2179, 1
      %v2291 = vpop.permute.xlu0 %2290
      %v2292 = vsel %vm377, %v2285, %v2287
      %v2293 = vsel %vm377, %v2289, %v2291
      %v2297 = vsel %vm381, 0, %v2285
      %v2300 = vsel %vm381, 0, %v2289
      %v2302 = vmul.bf16 %v2297, %v247
      %v2303 = vmul.bf16 %v2292, %v254
      %v2304 = vmul.bf16 %v2300, %v247
      %v2305 = vmul.bf16 %v2293, %v254
      %2306 = vst [vmem:[#allocation2 + $0x80] sm:$0xff] %v2302
      %2307 = vst [vmem:[#allocation2 + $0x88] sm:$0xff] %v2303
      %2308 = vst [vmem:[#allocation2 + $0x90] sm:$0xff] %v2304
      %2309 = vst [vmem:[#allocation2 + $0x98] sm:$0xff] %v2305
      %2310 = vst [vmem:[#allocation2 + $0xa0] sm:$0xff] %v2176
      %2311 = vst [vmem:[#allocation2 + $0xa8] sm:$0xff] %v2177
      %2312 = vst [vmem:[#allocation2 + $0xb0] sm:$0xff] %v2178
      %2313 = vst [vmem:[#allocation2 + $0xb8] sm:$0xff] %v2179
      %2314 = vrot.lane.b32.xlu0 %v2176, 127
      %v2315 = vpop.permute.xlu0 %2314
      %2316 = vrot.lane.b32.xlu0 %v2177, 127
      %v2317 = vpop.permute.xlu0 %2316
      %2318 = vrot.lane.b32.xlu0 %v2178, 127
      %v2319 = vpop.permute.xlu0 %2318
      %2320 = vrot.lane.b32.xlu0 %v2179, 127
      %v2321 = vpop.permute.xlu0 %2320
      %v2322 = vsel %vm406, %v2315, %v2317
      %v2323 = vsel %vm406, %v2319, %v2321
      %v2327 = vsel %vm410, %v2317, 0
      %v2330 = vsel %vm410, %v2321, 0
      %v2332 = vmul.bf16 %v2322, %v316
      %v2333 = vmul.bf16 %v2327, %v323
      %v2334 = vmul.bf16 %v2323, %v316
      %v2335 = vmul.bf16 %v2330, %v323
      %2336 = vst [vmem:[#allocation2 + $0xc0] sm:$0xff] %v2332
      %2337 = vst [vmem:[#allocation2 + $0xc8] sm:$0xff] %v2333
      %2338 = vst [vmem:[#allocation2 + $0xd0] sm:$0xff] %v2334
      %2339 = vst [vmem:[#allocation2 + $0xd8] sm:$0xff] %v2335
      %2340 = vrot.lane.b32.xlu0 %v2176, 126
      %v2341 = vpop.permute.xlu0 %2340
      %2342 = vrot.lane.b32.xlu0 %v2177, 126
      %v2343 = vpop.permute.xlu0 %2342
      %2344 = vrot.lane.b32.xlu0 %v2178, 126
      %v2345 = vpop.permute.xlu0 %2344
      %2346 = vrot.lane.b32.xlu0 %v2179, 126
      %v2347 = vpop.permute.xlu0 %2346
      %v2348 = vsel %vm431, %v2341, %v2343
      %v2349 = vsel %vm431, %v2345, %v2347
      %v2353 = vsel %vm435, %v2343, 0
      %v2356 = vsel %vm435, %v2347, 0
      %v2358 = vmul.bf16 %v2348, %v355
      %v2359 = vmul.bf16 %v2353, %v362
      %v2360 = vmul.bf16 %v2349, %v355
      %v2361 = vmul.bf16 %v2356, %v362
      %2362 = vst [vmem:[#allocation2 + $0xe0] sm:$0xff] %v2358
      %2363 = vst [vmem:[#allocation2 + $0xe8] sm:$0xff] %v2359
      %2364 = vst [vmem:[#allocation2 + $0xf0] sm:$0xff] %v2360
      %2365 = vst [vmem:[#allocation2 + $0xf8] sm:$0xff] %v2361
      %2366 = vrot.lane.b32.xlu0 %v2176, 113
      %v2367 = vpop.permute.xlu0 %2366
      %2368 = vrot.lane.b32.xlu0 %v2177, 113
      %v2369 = vpop.permute.xlu0 %2368
      %2370 = vrot.lane.b32.xlu0 %v2178, 113
      %v2371 = vpop.permute.xlu0 %2370
      %2372 = vrot.lane.b32.xlu0 %v2179, 113
      %v2373 = vpop.permute.xlu0 %2372
      %v2374 = vsel %vm456, %v2367, %v2369
      %v2375 = vsel %vm456, %v2371, %v2373
      %v2379 = vsel %vm460, %v2369, 0
      %v2382 = vsel %vm460, %v2373, 0
      %v2384 = vmul.bf16 %v2374, %v247
      %v2385 = vmul.bf16 %v2379, %v254
      %v2386 = vmul.bf16 %v2375, %v247
      %v2387 = vmul.bf16 %v2382, %v254
      %2388 = vst [vmem:[#allocation2 + $0x100] sm:$0xff] %v2384
      %2389 = vst [vmem:[#allocation2 + $0x108] sm:$0xff] %v2385
      %2390 = vst [vmem:[#allocation2 + $0x110] sm:$0xff] %v2386
      %2391 = vst [vmem:[#allocation2 + $0x118] sm:$0xff] %v2387
      %2392 = vrot.lane.b32.xlu0 %v2176, 112
      %v2393 = vpop.permute.xlu0 %2392
      %2394 = vrot.lane.b32.xlu0 %v2177, 112
      %v2395 = vpop.permute.xlu0 %2394
      %2396 = vrot.lane.b32.xlu0 %v2178, 112
      %v2397 = vpop.permute.xlu0 %2396
      %2398 = vrot.lane.b32.xlu0 %v2179, 112
      %v2399 = vpop.permute.xlu0 %2398
      %v2400 = vsel %vm481, %v2393, %v2395
      %v2401 = vsel %vm481, %v2397, %v2399
      %v2405 = vsel %vm485, %v2395, 0
      %v2408 = vsel %vm485, %v2399, 0
      %2410 = vst [vmem:[#allocation2 + $0x120] sm:$0xff] %v2400
      %2411 = vst [vmem:[#allocation2 + $0x128] sm:$0xff] %v2405
      %2412 = vst [vmem:[#allocation2 + $0x130] sm:$0xff] %v2401
      %2413 = vst [vmem:[#allocation2 + $0x138] sm:$0xff] %v2408
      %2414 = vrot.lane.b32.xlu0 %v2176, 111
      %v2415 = vpop.permute.xlu0 %2414
      %2416 = vrot.lane.b32.xlu0 %v2177, 111
      %v2417 = vpop.permute.xlu0 %2416
      %2418 = vrot.lane.b32.xlu0 %v2178, 111
      %v2419 = vpop.permute.xlu0 %2418
      %2420 = vrot.lane.b32.xlu0 %v2179, 111
      %v2421 = vpop.permute.xlu0 %2420
      %v2422 = vsel %vm502, %v2415, %v2417
      %v2423 = vsel %vm502, %v2419, %v2421
      %v2427 = vsel %vm506, %v2417, 0
      %v2430 = vsel %vm506, %v2421, 0
      %v2432 = vmul.bf16 %v2422, %v316
      %v2433 = vmul.bf16 %v2427, %v323
      %v2434 = vmul.bf16 %v2423, %v316
      %v2435 = vmul.bf16 %v2430, %v323
      %2436 = vst [vmem:[#allocation2 + $0x140] sm:$0xff] %v2432
      %2437 = vst [vmem:[#allocation2 + $0x148] sm:$0xff] %v2433
      %2438 = vst [vmem:[#allocation2 + $0x150] sm:$0xff] %v2434
      %2439 = vst [vmem:[#allocation2 + $0x158] sm:$0xff] %v2435
      %2440 = vrot.lane.b32.xlu0 %v2176, 110
      %v2441 = vpop.permute.xlu0 %2440
      %2442 = vrot.lane.b32.xlu0 %v2177, 110
      %v2443 = vpop.permute.xlu0 %2442
      %2444 = vrot.lane.b32.xlu0 %v2178, 110
      %v2445 = vpop.permute.xlu0 %2444
      %2446 = vrot.lane.b32.xlu0 %v2179, 110
      %v2447 = vpop.permute.xlu0 %2446
      %v2448 = vsel %vm527, %v2441, %v2443
      %v2449 = vsel %vm527, %v2445, %v2447
      %v2453 = vsel %vm531, %v2443, 0
      %v2456 = vsel %vm531, %v2447, 0
      %v2458 = vmul.bf16 %v2448, %v355
      %v2459 = vmul.bf16 %v2453, %v362
      %v2460 = vmul.bf16 %v2449, %v355
      %v2461 = vmul.bf16 %v2456, %v362
      %2462 = vst [vmem:[#allocation2 + $0x160] sm:$0xff] %v2458
      %2463 = vst [vmem:[#allocation2 + $0x168] sm:$0xff] %v2459
      %2464 = vst [vmem:[#allocation2 + $0x170] sm:$0xff] %v2460
      %2465 = vst [vmem:[#allocation2 + $0x178] sm:$0xff] %v2461
      %2466 = vrot.lane.b32.xlu0 %v2176, 97
      %v2467 = vpop.permute.xlu0 %2466
      %2468 = vrot.lane.b32.xlu0 %v2177, 97
      %v2469 = vpop.permute.xlu0 %2468
      %2470 = vrot.lane.b32.xlu0 %v2178, 97
      %v2471 = vpop.permute.xlu0 %2470
      %2472 = vrot.lane.b32.xlu0 %v2179, 97
      %v2473 = vpop.permute.xlu0 %2472
      %v2474 = vsel %vm552, %v2467, %v2469
      %v2475 = vsel %vm552, %v2471, %v2473
      %v2479 = vsel %vm556, %v2469, 0
      %v2482 = vsel %vm556, %v2473, 0
      %v2484 = vmul.bf16 %v2474, %v247
      %v2485 = vmul.bf16 %v2479, %v254
      %v2486 = vmul.bf16 %v2475, %v247
      %v2487 = vmul.bf16 %v2482, %v254
      %2488 = vst [vmem:[#allocation2 + $0x180] sm:$0xff] %v2484
      %2489 = vst [vmem:[#allocation2 + $0x188] sm:$0xff] %v2485
      %2490 = vst [vmem:[#allocation2 + $0x190] sm:$0xff] %v2486
      %2491 = vst [vmem:[#allocation2 + $0x198] sm:$0xff] %v2487
      %2492 = vrot.lane.b32.xlu0 %v2176, 96
      %v2493 = vpop.permute.xlu0 %2492
      %2494 = vrot.lane.b32.xlu0 %v2177, 96
      %v2495 = vpop.permute.xlu0 %2494
      %2496 = vrot.lane.b32.xlu0 %v2178, 96
      %v2497 = vpop.permute.xlu0 %2496
      %2498 = vrot.lane.b32.xlu0 %v2179, 96
      %v2499 = vpop.permute.xlu0 %2498
      %v2500 = vsel %vm577, %v2493, %v2495
      %v2501 = vsel %vm577, %v2497, %v2499
      %v2505 = vsel %vm581, %v2495, 0
      %v2508 = vsel %vm581, %v2499, 0
      %2510 = vst [vmem:[#allocation2 + $0x1a0] sm:$0xff] %v2500
      %2511 = vst [vmem:[#allocation2 + $0x1a8] sm:$0xff] %v2505
      %2512 = vst [vmem:[#allocation2 + $0x1b0] sm:$0xff] %v2501
      %2513 = vst [vmem:[#allocation2 + $0x1b8] sm:$0xff] %v2508
      %2514 = vrot.lane.b32.xlu0 %v2176, 95
      %v2515 = vpop.permute.xlu0 %2514
      %2516 = vrot.lane.b32.xlu0 %v2177, 95
      %v2517 = vpop.permute.xlu0 %2516
      %2518 = vrot.lane.b32.xlu0 %v2178, 95
      %v2519 = vpop.permute.xlu0 %2518
      %2520 = vrot.lane.b32.xlu0 %v2179, 95
      %v2521 = vpop.permute.xlu0 %2520
      %v2522 = vsel %vm598, %v2515, %v2517
      %v2523 = vsel %vm598, %v2519, %v2521
      %v2527 = vsel %vm602, %v2517, 0
      %v2530 = vsel %vm602, %v2521, 0
      %v2532 = vmul.bf16 %v2522, %v316
      %v2533 = vmul.bf16 %v2527, %v323
      %v2534 = vmul.bf16 %v2523, %v316
      %v2535 = vmul.bf16 %v2530, %v323
      %2536 = vst [vmem:[#allocation2 + $0x1c0] sm:$0xff] %v2532
      %2537 = vst [vmem:[#allocation2 + $0x1c8] sm:$0xff] %v2533
      %2538 = vst [vmem:[#allocation2 + $0x1d0] sm:$0xff] %v2534
      %2539 = vst [vmem:[#allocation2 + $0x1d8] sm:$0xff] %v2535
      %2540 = vrot.lane.b32.xlu0 %v2176, 94
      %v2541 = vpop.permute.xlu0 %2540
      %2542 = vrot.lane.b32.xlu0 %v2177, 94
      %v2543 = vpop.permute.xlu0 %2542
      %2544 = vrot.lane.b32.xlu0 %v2178, 94
      %v2545 = vpop.permute.xlu0 %2544
      %2546 = vrot.lane.b32.xlu0 %v2179, 94
      %v2547 = vpop.permute.xlu0 %2546
      %v2548 = vsel %vm623, %v2541, %v2543
      %v2549 = vsel %vm623, %v2545, %v2547
      %v2553 = vsel %vm627, %v2543, 0
      %v2556 = vsel %vm627, %v2547, 0
      %v2558 = vmul.bf16 %v2548, %v355
      %v2559 = vmul.bf16 %v2553, %v362
      %v2560 = vmul.bf16 %v2549, %v355
      %v2561 = vmul.bf16 %v2556, %v362
      %2562 = vst [vmem:[#allocation2 + $0x1e0] sm:$0xff] %v2558
      %2563 = vst [vmem:[#allocation2 + $0x1e8] sm:$0xff] %v2559
      %2564 = vst [vmem:[#allocation2 + $0x1f0] sm:$0xff] %v2560
      %2565 = vst [vmem:[#allocation2 + $0x1f8] sm:$0xff] %v2561
      %s2566 = scalar_lea.vmem %s1, 192
      %v2567 = vld [vmem:[%s2566] sm:$0xff]
      %v2568 = vld [vmem:[%s2566 + $0x8] sm:$0xff]
      %v2569 = vld [vmem:[%s2566 + $0x10] sm:$0xff]
      %v2570 = vld [vmem:[%s2566 + $0x18] sm:$0xff]
      %v2571 = vld [vmem:[%s2566 + $0x20] sm:$0xff]
      %v2572 = vld [vmem:[%s2566 + $0x28] sm:$0xff]
      %v2573 = vld [vmem:[%s2566 + $0x30] sm:$0xff]
      %v2574 = vld [vmem:[%s2566 + $0x38] sm:$0xff]
      %v2575 = vld [vmem:[#allocation2] sm:$0xff]
      %v2576 = vld [vmem:[#allocation2 + $0x8] sm:$0xff]
      %v2577 = vld [vmem:[#allocation2 + $0x10] sm:$0xff]
      %v2578 = vld [vmem:[#allocation2 + $0x18] sm:$0xff]
      %v2579 = vld [vmem:[#allocation2 + $0x20] sm:$0xff]
      %v2580 = vld [vmem:[#allocation2 + $0x28] sm:$0xff]
      %v2581 = vld [vmem:[#allocation2 + $0x30] sm:$0xff]
      %v2582 = vld [vmem:[#allocation2 + $0x38] sm:$0xff]
      %v2583 = vld [vmem:[#allocation2 + $0x40] sm:$0xff]
      %v2584 = vld [vmem:[#allocation2 + $0x48] sm:$0xff]
      %v2585 = vld [vmem:[#allocation2 + $0x50] sm:$0xff]
      %v2586 = vld [vmem:[#allocation2 + $0x58] sm:$0xff]
      %v2587 = vld [vmem:[#allocation2 + $0x60] sm:$0xff]
      %v2588 = vld [vmem:[#allocation2 + $0x68] sm:$0xff]
      %v2589 = vld [vmem:[#allocation2 + $0x70] sm:$0xff]
      %v2590 = vld [vmem:[#allocation2 + $0x78] sm:$0xff]
      %v2591 = vld [vmem:[#allocation2 + $0x80] sm:$0xff]
      %v2592 = vld [vmem:[#allocation2 + $0x88] sm:$0xff]
      %v2593 = vld [vmem:[#allocation2 + $0x90] sm:$0xff]
      %v2594 = vld [vmem:[#allocation2 + $0x98] sm:$0xff]
      %v2595 = vld [vmem:[#allocation2 + $0xa0] sm:$0xff]
      %v2596 = vld [vmem:[#allocation2 + $0xa8] sm:$0xff]
      %v2597 = vld [vmem:[#allocation2 + $0xb0] sm:$0xff]
      %v2598 = vld [vmem:[#allocation2 + $0xb8] sm:$0xff]
      %v2599 = vld [vmem:[#allocation2 + $0xc0] sm:$0xff]
      %v2600 = vld [vmem:[#allocation2 + $0xc8] sm:$0xff]
      %v2601 = vld [vmem:[#allocation2 + $0xd0] sm:$0xff]
      %v2602 = vld [vmem:[#allocation2 + $0xd8] sm:$0xff]
      %v2603 = vld [vmem:[#allocation2 + $0xe0] sm:$0xff]
      %v2604 = vld [vmem:[#allocation2 + $0xe8] sm:$0xff]
      %v2605 = vld [vmem:[#allocation2 + $0xf0] sm:$0xff]
      %v2606 = vld [vmem:[#allocation2 + $0xf8] sm:$0xff]
      %v2607 = vld [vmem:[#allocation2 + $0x100] sm:$0xff]
      %v2608 = vld [vmem:[#allocation2 + $0x108] sm:$0xff]
      %v2609 = vld [vmem:[#allocation2 + $0x110] sm:$0xff]
      %v2610 = vld [vmem:[#allocation2 + $0x118] sm:$0xff]
      %v2611 = vld [vmem:[#allocation2 + $0x120] sm:$0xff]
      %v2612 = vld [vmem:[#allocation2 + $0x128] sm:$0xff]
      %v2613 = vld [vmem:[#allocation2 + $0x130] sm:$0xff]
      %v2614 = vld [vmem:[#allocation2 + $0x138] sm:$0xff]
      %v2615 = vld [vmem:[#allocation2 + $0x140] sm:$0xff]
      %v2616 = vld [vmem:[#allocation2 + $0x148] sm:$0xff]
      %v2617 = vld [vmem:[#allocation2 + $0x150] sm:$0xff]
      %v2618 = vld [vmem:[#allocation2 + $0x158] sm:$0xff]
      %v2619 = vld [vmem:[#allocation2 + $0x160] sm:$0xff]
      %v2620 = vld [vmem:[#allocation2 + $0x168] sm:$0xff]
      %v2621 = vld [vmem:[#allocation2 + $0x170] sm:$0xff]
      %v2622 = vld [vmem:[#allocation2 + $0x178] sm:$0xff]
      %v2623 = vld [vmem:[#allocation2 + $0x180] sm:$0xff]
      %v2624 = vld [vmem:[#allocation2 + $0x188] sm:$0xff]
      %v2625 = vld [vmem:[#allocation2 + $0x190] sm:$0xff]
      %v2626 = vld [vmem:[#allocation2 + $0x198] sm:$0xff]
      %v2627 = vld [vmem:[#allocation2 + $0x1a0] sm:$0xff]
      %v2628 = vld [vmem:[#allocation2 + $0x1a8] sm:$0xff]
      %v2629 = vld [vmem:[#allocation2 + $0x1b0] sm:$0xff]
      %v2630 = vld [vmem:[#allocation2 + $0x1b8] sm:$0xff]
      %v2631 = vld [vmem:[#allocation2 + $0x1c0] sm:$0xff]
      %v2632 = vld [vmem:[#allocation2 + $0x1c8] sm:$0xff]
      %v2633 = vld [vmem:[#allocation2 + $0x1d0] sm:$0xff]
      %v2634 = vld [vmem:[#allocation2 + $0x1d8] sm:$0xff]
      %v2635 = vld [vmem:[#allocation2 + $0x1e0] sm:$0xff]
      %v2636 = vld [vmem:[#allocation2 + $0x1e8] sm:$0xff]
      %v2637 = vld [vmem:[#allocation2 + $0x1f0] sm:$0xff]
      %v2638 = vld [vmem:[#allocation2 + $0x1f8] sm:$0xff]
      %s2639 = scalar_lea.vmem %s2, 96
      %v2640 = vld [vmem:[%s2639] sm:$0xff]
      %v2641 = vld [vmem:[%s2639 + $0x8] sm:$0xff]
      %v2642 = vld [vmem:[%s2639 + $0x10] sm:$0xff]
      %v2643 = vld [vmem:[%s2639 + $0x18] sm:$0xff]
      %2645 = vset.pattern.permute.xlu0 0
      %2646 = vperm.xlu0 %2645, %v2640
      %v2647 = vpop.permute.xlu0 %2646
      %2650 = vset.pattern.permute.xlu0 0
      %2651 = vperm.xlu0 %2650, %v2641
      %v2652 = vpop.permute.xlu0 %2651
      %2655 = vset.pattern.permute.xlu0 0
      %2656 = vperm.xlu0 %2655, %v2642
      %v2657 = vpop.permute.xlu0 %2656
      %2660 = vset.pattern.permute.xlu0 0
      %2661 = vperm.xlu0 %2660, %v2643
      %v2662 = vpop.permute.xlu0 %2661
      %v2672 = vunpack.c.l.b16 %v2567
      %v2673 = vunpack.c.h.b16 %v2567
      %v2674 = vunpack.c.l.b16 %v2568
      %v2675 = vunpack.c.h.b16 %v2568
      %v2676 = vunpack.c.l.b16 %v2569
      %v2677 = vunpack.c.h.b16 %v2569
      %v2678 = vunpack.c.l.b16 %v2570
      %v2679 = vunpack.c.h.b16 %v2570
      %v2680 = vunpack.c.l.b16 %v2571
      %v2681 = vunpack.c.h.b16 %v2571
      %v2682 = vunpack.c.l.b16 %v2572
      %v2683 = vunpack.c.h.b16 %v2572
      %v2684 = vunpack.c.l.b16 %v2573
      %v2685 = vunpack.c.h.b16 %v2573
      %v2686 = vunpack.c.l.b16 %v2574
      %v2687 = vunpack.c.h.b16 %v2574
      %v2688 = vpack.c.b16 %v2676, %v2672
      %v2689 = vpack.c.b16 %v2677, %v2673
      %v2690 = vpack.c.b16 %v2678, %v2674
      %v2691 = vpack.c.b16 %v2679, %v2675
      %v2692 = vpack.c.b16 %v2684, %v2680
      %v2693 = vpack.c.b16 %v2685, %v2681
      %v2694 = vpack.c.b16 %v2686, %v2682
      %v2695 = vpack.c.b16 %v2687, %v2683
      %2704 = vmatprep.subr.bf16.mxu0 %v2576
      %2705 = vmatpush1.bf16.msra.mxu0 %v2575
      %2706 = vmatprep.subr.bf16.mxu0 %v2578
      %2707 = vmatpush1.bf16.msra.mxu0 %v2577
      %2708 = vmatprep.subr.bf16.mxu0 %v2580
      %2709 = vmatpush1.bf16.msra.mxu0 %v2579
      %2710 = vmatprep.subr.bf16.mxu0 %v2582
      %2711 = vmatpush1.bf16.msra.mxu0 %v2581
      %2712 = vmatprep.subr.bf16.mxu0 %v2584
      %2713 = vmatpush1.bf16.msra.mxu0 %v2583
      %2714 = vmatprep.subr.bf16.mxu0 %v2586
      %2715 = vmatpush1.bf16.msra.mxu0 %v2585
      %2716 = vmatprep.subr.bf16.mxu0 %v2588
      %2717 = vmatpush1.bf16.msra.mxu0 %v2587
      %2718 = vmatprep.subr.bf16.mxu0 %v2590
      %2719 = vmatpush1.bf16.msra.mxu0 %v2589
      %2720 = vmatprep.subr.bf16.mxu0 %v2592
      %2721 = vmatpush1.bf16.msra.mxu0 %v2591
      %2722 = vmatprep.subr.bf16.mxu0 %v2594
      %2723 = vmatpush1.bf16.msra.mxu0 %v2593
      %2724 = vmatprep.subr.bf16.mxu0 %v2596
      %2725 = vmatpush1.bf16.msra.mxu0 %v2595
      %2726 = vmatprep.subr.bf16.mxu0 %v2598
      %2727 = vmatpush1.bf16.msra.mxu0 %v2597
      %2728 = vmatprep.subr.bf16.mxu0 %v2600
      %2729 = vmatpush1.bf16.msra.mxu0 %v2599
      %2730 = vmatprep.subr.bf16.mxu0 %v2602
      %2731 = vmatpush1.bf16.msra.mxu0 %v2601
      %2732 = vmatprep.subr.bf16.mxu0 %v2604
      %2733 = vmatpush1.bf16.msra.mxu0 %v2603
      %2734 = vmatprep.subr.bf16.mxu0 %v2606
      %2735 = vmatpush1.bf16.msra.mxu0 %v2605
      %2736 = vmatprep.mubr.bf16.mxu0 %v2689
      %2737 = vmatmul.mubr.bf16.gmra.mrb[0].mxu0 %v2688
      %v2738 = vpop.f32.mrb[0].mxu0
      %v2739 = vadd.f32 %v2647, %v2738
      %v2740 = vpop.f32.mrb[0].mxu0
      %v2741 = vadd.f32 %v2647, %v2740
      %v2742 = vpop.f32.mrb[0].mxu0
      %v2743 = vadd.f32 %v2652, %v2742
      %v2744 = vpop.f32.mrb[0].mxu0
      %v2745 = vadd.f32 %v2652, %v2744
      %2746 = vmatprep.mubr.bf16.mxu0 %v2693
      %2747 = vmatmul.mubr.bf16.gmra.mrb[0].mxu0 %v2692
      %v2748 = vpop.f32.mrb[0].mxu0
      %v2749 = vadd.f32 %v2657, %v2748
      %v2750 = vpop.f32.mrb[0].mxu0
      %v2751 = vadd.f32 %v2657, %v2750
      %v2752 = vpop.f32.mrb[0].mxu0
      %v2753 = vadd.f32 %v2662, %v2752
      %v2754 = vpop.f32.mrb[0].mxu0
      %v2755 = vadd.f32 %v2662, %v2754
      %2756 = vdwg.mxu0
      %2757 = vmatprep.subr.bf16.mxu0 %v2608
      %2758 = vmatpush1.bf16.msra.mxu0 %v2607
      %2759 = vmatprep.subr.bf16.mxu0 %v2610
      %2760 = vmatpush1.bf16.msra.mxu0 %v2609
      %2761 = vmatprep.subr.bf16.mxu0 %v2612
      %2762 = vmatpush1.bf16.msra.mxu0 %v2611
      %2763 = vmatprep.subr.bf16.mxu0 %v2614
      %2764 = vmatpush1.bf16.msra.mxu0 %v2613
      %2765 = vmatprep.subr.bf16.mxu0 %v2616
      %2766 = vmatpush1.bf16.msra.mxu0 %v2615
      %2767 = vmatprep.subr.bf16.mxu0 %v2618
      %2768 = vmatpush1.bf16.msra.mxu0 %v2617
      %2769 = vmatprep.subr.bf16.mxu0 %v2620
      %2770 = vmatpush1.bf16.msra.mxu0 %v2619
      %2771 = vmatprep.subr.bf16.mxu0 %v2622
      %2772 = vmatpush1.bf16.msra.mxu0 %v2621
      %2773 = vmatprep.subr.bf16.mxu0 %v2624
      %2774 = vmatpush1.bf16.msra.mxu0 %v2623
      %2775 = vmatprep.subr.bf16.mxu0 %v2626
      %2776 = vmatpush1.bf16.msra.mxu0 %v2625
      %2777 = vmatprep.subr.bf16.mxu0 %v2628
      %2778 = vmatpush1.bf16.msra.mxu0 %v2627
      %2779 = vmatprep.subr.bf16.mxu0 %v2630
      %2780 = vmatpush1.bf16.msra.mxu0 %v2629
      %2781 = vmatprep.subr.bf16.mxu0 %v2632
      %2782 = vmatpush1.bf16.msra.mxu0 %v2631
      %2783 = vmatprep.subr.bf16.mxu0 %v2634
      %2784 = vmatpush1.bf16.msra.mxu0 %v2633
      %2785 = vmatprep.subr.bf16.mxu0 %v2636
      %2786 = vmatpush1.bf16.msra.mxu0 %v2635
      %2787 = vmatprep.subr.bf16.mxu0 %v2638
      %2788 = vmatpush1.bf16.msra.mxu0 %v2637
      %2789 = vmatprep.mubr.bf16.mxu0 %v2691
      %2790 = vmatmul.mubr.bf16.gmra.mrb[0].mxu0 %v2690
      %v2791 = vpop.f32.mrb[0].mxu0
      %v2792 = vadd.f32 %v2739, %v2791
      %v2793 = vpop.f32.mrb[0].mxu0
      %v2794 = vadd.f32 %v2741, %v2793
      %v2795 = vpop.f32.mrb[0].mxu0
      %v2796 = vadd.f32 %v2743, %v2795
      %v2797 = vpop.f32.mrb[0].mxu0
      %v2798 = vadd.f32 %v2745, %v2797
      %2799 = vmatprep.mubr.bf16.mxu0 %v2695
      %2800 = vmatmul.mubr.bf16.gmra.mrb[0].mxu0 %v2694
      %v2801 = vpop.f32.mrb[0].mxu0
      %v2802 = vadd.f32 %v2749, %v2801
      %v2803 = vpop.f32.mrb[0].mxu0
      %v2804 = vadd.f32 %v2751, %v2803
      %v2805 = vpop.f32.mrb[0].mxu0
      %v2806 = vadd.f32 %v2753, %v2805
      %v2807 = vpop.f32.mrb[0].mxu0
      %v2808 = vadd.f32 %v2755, %v2807
      %2809 = vdwg.mxu0
      %v2810 = vmax.f32 %v2792, 0.0
      %v2811 = vmax.f32 %v2794, 0.0
      %v2812 = vmax.f32 %v2796, 0.0
      %v2813 = vmax.f32 %v2798, 0.0
      %v2814 = vmax.f32 %v2802, 0.0
      %v2815 = vmax.f32 %v2804, 0.0
      %v2816 = vmax.f32 %v2806, 0.0
      %v2817 = vmax.f32 %v2808, 0.0
      %v2818 = vpack.c.bf16 %v2812, %v2810
      %v2819 = vpack.c.bf16 %v2813, %v2811
      %v2820 = vpack.c.bf16 %v2816, %v2814
      %v2821 = vpack.c.bf16 %v2817, %v2815
      %2826 = vrot.lane.b32.xlu0 %v2818, 17
      %v2827 = vpop.permute.xlu0 %2826
      %2828 = vrot.lane.b32.xlu0 %v2819, 17
      %v2829 = vpop.permute.xlu0 %2828
      %2830 = vrot.lane.b32.xlu0 %v2820, 17
      %v2831 = vpop.permute.xlu0 %2830
      %2832 = vrot.lane.b32.xlu0 %v2821, 17
      %v2833 = vpop.permute.xlu0 %2832
      %v2834 = vsel %vm220, %v2827, %v2829
      %v2835 = vsel %vm220, %v2831, %v2833
      %v2839 = vsel %vm224, 0, %v2827
      %v2842 = vsel %vm224, 0, %v2831
      %v2844 = vmul.bf16 %v2839, %v247
      %v2845 = vmul.bf16 %v2834, %v254
      %v2846 = vmul.bf16 %v2842, %v247
      %v2847 = vmul.bf16 %v2835, %v254
      %2848 = vst [vmem:[#allocation2] sm:$0xff] %v2844
      %2849 = vst [vmem:[#allocation2 + $0x8] sm:$0xff] %v2845
      %2850 = vst [vmem:[#allocation2 + $0x10] sm:$0xff] %v2846
      %2851 = vst [vmem:[#allocation2 + $0x18] sm:$0xff] %v2847
      %2852 = vrot.lane.b32.xlu0 %v2818, 16
      %v2853 = vpop.permute.xlu0 %2852
      %2854 = vrot.lane.b32.xlu0 %v2819, 16
      %v2855 = vpop.permute.xlu0 %2854
      %2856 = vrot.lane.b32.xlu0 %v2820, 16
      %v2857 = vpop.permute.xlu0 %2856
      %2858 = vrot.lane.b32.xlu0 %v2821, 16
      %v2859 = vpop.permute.xlu0 %2858
      %v2860 = vsel %vm269, %v2853, %v2855
      %v2861 = vsel %vm269, %v2857, %v2859
      %v2865 = vsel %vm273, 0, %v2853
      %v2868 = vsel %vm273, 0, %v2857
      %2870 = vst [vmem:[#allocation2 + $0x20] sm:$0xff] %v2865
      %2871 = vst [vmem:[#allocation2 + $0x28] sm:$0xff] %v2860
      %2872 = vst [vmem:[#allocation2 + $0x30] sm:$0xff] %v2868
      %2873 = vst [vmem:[#allocation2 + $0x38] sm:$0xff] %v2861
      %2874 = vrot.lane.b32.xlu0 %v2818, 15
      %v2875 = vpop.permute.xlu0 %2874
      %2876 = vrot.lane.b32.xlu0 %v2819, 15
      %v2877 = vpop.permute.xlu0 %2876
      %2878 = vrot.lane.b32.xlu0 %v2820, 15
      %v2879 = vpop.permute.xlu0 %2878
      %2880 = vrot.lane.b32.xlu0 %v2821, 15
      %v2881 = vpop.permute.xlu0 %2880
      %v2882 = vsel %vm290, %v2875, %v2877
      %v2883 = vsel %vm290, %v2879, %v2881
      %v2887 = vsel %vm294, 0, %v2875
      %v2890 = vsel %vm294, 0, %v2879
      %v2892 = vmul.bf16 %v2887, %v316
      %v2893 = vmul.bf16 %v2882, %v323
      %v2894 = vmul.bf16 %v2890, %v316
      %v2895 = vmul.bf16 %v2883, %v323
      %2896 = vst [vmem:[#allocation2 + $0x40] sm:$0xff] %v2892
      %2897 = vst [vmem:[#allocation2 + $0x48] sm:$0xff] %v2893
      %2898 = vst [vmem:[#allocation2 + $0x50] sm:$0xff] %v2894
      %2899 = vst [vmem:[#allocation2 + $0x58] sm:$0xff] %v2895
      %2900 = vrot.lane.b32.xlu0 %v2818, 14
      %v2901 = vpop.permute.xlu0 %2900
      %2902 = vrot.lane.b32.xlu0 %v2819, 14
      %v2903 = vpop.permute.xlu0 %2902
      %2904 = vrot.lane.b32.xlu0 %v2820, 14
      %v2905 = vpop.permute.xlu0 %2904
      %2906 = vrot.lane.b32.xlu0 %v2821, 14
      %v2907 = vpop.permute.xlu0 %2906
      %v2908 = vsel %vm338, %v2901, %v2903
      %v2909 = vsel %vm338, %v2905, %v2907
      %v2913 = vsel %vm342, 0, %v2901
      %v2916 = vsel %vm342, 0, %v2905
      %v2918 = vmul.bf16 %v2913, %v355
      %v2919 = vmul.bf16 %v2908, %v362
      %v2920 = vmul.bf16 %v2916, %v355
      %v2921 = vmul.bf16 %v2909, %v362
      %2922 = vst [vmem:[#allocation2 + $0x60] sm:$0xff] %v2918
      %2923 = vst [vmem:[#allocation2 + $0x68] sm:$0xff] %v2919
      %2924 = vst [vmem:[#allocation2 + $0x70] sm:$0xff] %v2920
      %2925 = vst [vmem:[#allocation2 + $0x78] sm:$0xff] %v2921
      %2926 = vrot.lane.b32.xlu0 %v2818, 1
      %v2927 = vpop.permute.xlu0 %2926
      %2928 = vrot.lane.b32.xlu0 %v2819, 1
      %v2929 = vpop.permute.xlu0 %2928
      %2930 = vrot.lane.b32.xlu0 %v2820, 1
      %v2931 = vpop.permute.xlu0 %2930
      %2932 = vrot.lane.b32.xlu0 %v2821, 1
      %v2933 = vpop.permute.xlu0 %2932
      %v2934 = vsel %vm377, %v2927, %v2929
      %v2935 = vsel %vm377, %v2931, %v2933
      %v2939 = vsel %vm381, 0, %v2927
      %v2942 = vsel %vm381, 0, %v2931
      %v2944 = vmul.bf16 %v2939, %v247
      %v2945 = vmul.bf16 %v2934, %v254
      %v2946 = vmul.bf16 %v2942, %v247
      %v2947 = vmul.bf16 %v2935, %v254
      %2948 = vst [vmem:[#allocation2 + $0x80] sm:$0xff] %v2944
      %2949 = vst [vmem:[#allocation2 + $0x88] sm:$0xff] %v2945
      %2950 = vst [vmem:[#allocation2 + $0x90] sm:$0xff] %v2946
      %2951 = vst [vmem:[#allocation2 + $0x98] sm:$0xff] %v2947
      %2952 = vst [vmem:[#allocation2 + $0xa0] sm:$0xff] %v2818
      %2953 = vst [vmem:[#allocation2 + $0xa8] sm:$0xff] %v2819
      %2954 = vst [vmem:[#allocation2 + $0xb0] sm:$0xff] %v2820
      %2955 = vst [vmem:[#allocation2 + $0xb8] sm:$0xff] %v2821
      %2956 = vrot.lane.b32.xlu0 %v2818, 127
      %v2957 = vpop.permute.xlu0 %2956
      %2958 = vrot.lane.b32.xlu0 %v2819, 127
      %v2959 = vpop.permute.xlu0 %2958
      %2960 = vrot.lane.b32.xlu0 %v2820, 127
      %v2961 = vpop.permute.xlu0 %2960
      %2962 = vrot.lane.b32.xlu0 %v2821, 127
      %v2963 = vpop.permute.xlu0 %2962
      %v2964 = vsel %vm406, %v2957, %v2959
      %v2965 = vsel %vm406, %v2961, %v2963
      %v2969 = vsel %vm410, %v2959, 0
      %v2972 = vsel %vm410, %v2963, 0
      %v2974 = vmul.bf16 %v2964, %v316
      %v2975 = vmul.bf16 %v2969, %v323
      %v2976 = vmul.bf16 %v2965, %v316
      %v2977 = vmul.bf16 %v2972, %v323
      %2978 = vst [vmem:[#allocation2 + $0xc0] sm:$0xff] %v2974
      %2979 = vst [vmem:[#allocation2 + $0xc8] sm:$0xff] %v2975
      %2980 = vst [vmem:[#allocation2 + $0xd0] sm:$0xff] %v2976
      %2981 = vst [vmem:[#allocation2 + $0xd8] sm:$0xff] %v2977
      %2982 = vrot.lane.b32.xlu0 %v2818, 126
      %v2983 = vpop.permute.xlu0 %2982
      %2984 = vrot.lane.b32.xlu0 %v2819, 126
      %v2985 = vpop.permute.xlu0 %2984
      %2986 = vrot.lane.b32.xlu0 %v2820, 126
      %v2987 = vpop.permute.xlu0 %2986
      %2988 = vrot.lane.b32.xlu0 %v2821, 126
      %v2989 = vpop.permute.xlu0 %2988
      %v2990 = vsel %vm431, %v2983, %v2985
      %v2991 = vsel %vm431, %v2987, %v2989
      %v2995 = vsel %vm435, %v2985, 0
      %v2998 = vsel %vm435, %v2989, 0
      %v3000 = vmul.bf16 %v2990, %v355
      %v3001 = vmul.bf16 %v2995, %v362
      %v3002 = vmul.bf16 %v2991, %v355
      %v3003 = vmul.bf16 %v2998, %v362
      %3004 = vst [vmem:[#allocation2 + $0xe0] sm:$0xff] %v3000
      %3005 = vst [vmem:[#allocation2 + $0xe8] sm:$0xff] %v3001
      %3006 = vst [vmem:[#allocation2 + $0xf0] sm:$0xff] %v3002
      %3007 = vst [vmem:[#allocation2 + $0xf8] sm:$0xff] %v3003
      %3008 = vrot.lane.b32.xlu0 %v2818, 113
      %v3009 = vpop.permute.xlu0 %3008
      %3010 = vrot.lane.b32.xlu0 %v2819, 113
      %v3011 = vpop.permute.xlu0 %3010
      %3012 = vrot.lane.b32.xlu0 %v2820, 113
      %v3013 = vpop.permute.xlu0 %3012
      %3014 = vrot.lane.b32.xlu0 %v2821, 113
      %v3015 = vpop.permute.xlu0 %3014
      %v3016 = vsel %vm456, %v3009, %v3011
      %v3017 = vsel %vm456, %v3013, %v3015
      %v3021 = vsel %vm460, %v3011, 0
      %v3024 = vsel %vm460, %v3015, 0
      %v3026 = vmul.bf16 %v3016, %v247
      %v3027 = vmul.bf16 %v3021, %v254
      %v3028 = vmul.bf16 %v3017, %v247
      %v3029 = vmul.bf16 %v3024, %v254
      %3030 = vst [vmem:[#allocation2 + $0x100] sm:$0xff] %v3026
      %3031 = vst [vmem:[#allocation2 + $0x108] sm:$0xff] %v3027
      %3032 = vst [vmem:[#allocation2 + $0x110] sm:$0xff] %v3028
      %3033 = vst [vmem:[#allocation2 + $0x118] sm:$0xff] %v3029
      %3034 = vrot.lane.b32.xlu0 %v2818, 112
      %v3035 = vpop.permute.xlu0 %3034
      %3036 = vrot.lane.b32.xlu0 %v2819, 112
      %v3037 = vpop.permute.xlu0 %3036
      %3038 = vrot.lane.b32.xlu0 %v2820, 112
      %v3039 = vpop.permute.xlu0 %3038
      %3040 = vrot.lane.b32.xlu0 %v2821, 112
      %v3041 = vpop.permute.xlu0 %3040
      %v3042 = vsel %vm481, %v3035, %v3037
      %v3043 = vsel %vm481, %v3039, %v3041
      %v3047 = vsel %vm485, %v3037, 0
      %v3050 = vsel %vm485, %v3041, 0
      %3052 = vst [vmem:[#allocation2 + $0x120] sm:$0xff] %v3042
      %3053 = vst [vmem:[#allocation2 + $0x128] sm:$0xff] %v3047
      %3054 = vst [vmem:[#allocation2 + $0x130] sm:$0xff] %v3043
      %3055 = vst [vmem:[#allocation2 + $0x138] sm:$0xff] %v3050
      %3056 = vrot.lane.b32.xlu0 %v2818, 111
      %v3057 = vpop.permute.xlu0 %3056
      %3058 = vrot.lane.b32.xlu0 %v2819, 111
      %v3059 = vpop.permute.xlu0 %3058
      %3060 = vrot.lane.b32.xlu0 %v2820, 111
      %v3061 = vpop.permute.xlu0 %3060
      %3062 = vrot.lane.b32.xlu0 %v2821, 111
      %v3063 = vpop.permute.xlu0 %3062
      %v3064 = vsel %vm502, %v3057, %v3059
      %v3065 = vsel %vm502, %v3061, %v3063
      %v3069 = vsel %vm506, %v3059, 0
      %v3072 = vsel %vm506, %v3063, 0
      %v3074 = vmul.bf16 %v3064, %v316
      %v3075 = vmul.bf16 %v3069, %v323
      %v3076 = vmul.bf16 %v3065, %v316
      %v3077 = vmul.bf16 %v3072, %v323
      %3078 = vst [vmem:[#allocation2 + $0x140] sm:$0xff] %v3074
      %3079 = vst [vmem:[#allocation2 + $0x148] sm:$0xff] %v3075
      %3080 = vst [vmem:[#allocation2 + $0x150] sm:$0xff] %v3076
      %3081 = vst [vmem:[#allocation2 + $0x158] sm:$0xff] %v3077
      %3082 = vrot.lane.b32.xlu0 %v2818, 110
      %v3083 = vpop.permute.xlu0 %3082
      %3084 = vrot.lane.b32.xlu0 %v2819, 110
      %v3085 = vpop.permute.xlu0 %3084
      %3086 = vrot.lane.b32.xlu0 %v2820, 110
      %v3087 = vpop.permute.xlu0 %3086
      %3088 = vrot.lane.b32.xlu0 %v2821, 110
      %v3089 = vpop.permute.xlu0 %3088
      %v3090 = vsel %vm527, %v3083, %v3085
      %v3091 = vsel %vm527, %v3087, %v3089
      %v3095 = vsel %vm531, %v3085, 0
      %v3098 = vsel %vm531, %v3089, 0
      %v3100 = vmul.bf16 %v3090, %v355
      %v3101 = vmul.bf16 %v3095, %v362
      %v3102 = vmul.bf16 %v3091, %v355
      %v3103 = vmul.bf16 %v3098, %v362
      %3104 = vst [vmem:[#allocation2 + $0x160] sm:$0xff] %v3100
      %3105 = vst [vmem:[#allocation2 + $0x168] sm:$0xff] %v3101
      %3106 = vst [vmem:[#allocation2 + $0x170] sm:$0xff] %v3102
      %3107 = vst [vmem:[#allocation2 + $0x178] sm:$0xff] %v3103
      %3108 = vrot.lane.b32.xlu0 %v2818, 97
      %v3109 = vpop.permute.xlu0 %3108
      %3110 = vrot.lane.b32.xlu0 %v2819, 97
      %v3111 = vpop.permute.xlu0 %3110
      %3112 = vrot.lane.b32.xlu0 %v2820, 97
      %v3113 = vpop.permute.xlu0 %3112
      %3114 = vrot.lane.b32.xlu0 %v2821, 97
      %v3115 = vpop.permute.xlu0 %3114
      %v3116 = vsel %vm552, %v3109, %v3111
      %v3117 = vsel %vm552, %v3113, %v3115
      %v3121 = vsel %vm556, %v3111, 0
      %v3124 = vsel %vm556, %v3115, 0
      %v3126 = vmul.bf16 %v3116, %v247
      %v3127 = vmul.bf16 %v3121, %v254
      %v3128 = vmul.bf16 %v3117, %v247
      %v3129 = vmul.bf16 %v3124, %v254
      %3130 = vst [vmem:[#allocation2 + $0x180] sm:$0xff] %v3126
      %3131 = vst [vmem:[#allocation2 + $0x188] sm:$0xff] %v3127
      %3132 = vst [vmem:[#allocation2 + $0x190] sm:$0xff] %v3128
      %3133 = vst [vmem:[#allocation2 + $0x198] sm:$0xff] %v3129
      %3134 = vrot.lane.b32.xlu0 %v2818, 96
      %v3135 = vpop.permute.xlu0 %3134
      %3136 = vrot.lane.b32.xlu0 %v2819, 96
      %v3137 = vpop.permute.xlu0 %3136
      %3138 = vrot.lane.b32.xlu0 %v2820, 96
      %v3139 = vpop.permute.xlu0 %3138
      %3140 = vrot.lane.b32.xlu0 %v2821, 96
      %v3141 = vpop.permute.xlu0 %3140
      %v3142 = vsel %vm577, %v3135, %v3137
      %v3143 = vsel %vm577, %v3139, %v3141
      %v3147 = vsel %vm581, %v3137, 0
      %v3150 = vsel %vm581, %v3141, 0
      %3152 = vst [vmem:[#allocation2 + $0x1a0] sm:$0xff] %v3142
      %3153 = vst [vmem:[#allocation2 + $0x1a8] sm:$0xff] %v3147
      %3154 = vst [vmem:[#allocation2 + $0x1b0] sm:$0xff] %v3143
      %3155 = vst [vmem:[#allocation2 + $0x1b8] sm:$0xff] %v3150
      %3156 = vrot.lane.b32.xlu0 %v2818, 95
      %v3157 = vpop.permute.xlu0 %3156
      %3158 = vrot.lane.b32.xlu0 %v2819, 95
      %v3159 = vpop.permute.xlu0 %3158
      %3160 = vrot.lane.b32.xlu0 %v2820, 95
      %v3161 = vpop.permute.xlu0 %3160
      %3162 = vrot.lane.b32.xlu0 %v2821, 95
      %v3163 = vpop.permute.xlu0 %3162
      %v3164 = vsel %vm598, %v3157, %v3159
      %v3165 = vsel %vm598, %v3161, %v3163
      %v3169 = vsel %vm602, %v3159, 0
      %v3172 = vsel %vm602, %v3163, 0
      %v3174 = vmul.bf16 %v3164, %v316
      %v3175 = vmul.bf16 %v3169, %v323
      %v3176 = vmul.bf16 %v3165, %v316
      %v3177 = vmul.bf16 %v3172, %v323
      %3178 = vst [vmem:[#allocation2 + $0x1c0] sm:$0xff] %v3174
      %3179 = vst [vmem:[#allocation2 + $0x1c8] sm:$0xff] %v3175
      %3180 = vst [vmem:[#allocation2 + $0x1d0] sm:$0xff] %v3176
      %3181 = vst [vmem:[#allocation2 + $0x1d8] sm:$0xff] %v3177
      %3182 = vrot.lane.b32.xlu0 %v2818, 94
      %v3183 = vpop.permute.xlu0 %3182
      %3184 = vrot.lane.b32.xlu0 %v2819, 94
      %v3185 = vpop.permute.xlu0 %3184
      %3186 = vrot.lane.b32.xlu0 %v2820, 94
      %v3187 = vpop.permute.xlu0 %3186
      %3188 = vrot.lane.b32.xlu0 %v2821, 94
      %v3189 = vpop.permute.xlu0 %3188
      %v3190 = vsel %vm623, %v3183, %v3185
      %v3191 = vsel %vm623, %v3187, %v3189
      %v3195 = vsel %vm627, %v3185, 0
      %v3198 = vsel %vm627, %v3189, 0
      %v3200 = vmul.bf16 %v3190, %v355
      %v3201 = vmul.bf16 %v3195, %v362
      %v3202 = vmul.bf16 %v3191, %v355
      %v3203 = vmul.bf16 %v3198, %v362
      %3204 = vst [vmem:[#allocation2 + $0x1e0] sm:$0xff] %v3200
      %3205 = vst [vmem:[#allocation2 + $0x1e8] sm:$0xff] %v3201
      %3206 = vst [vmem:[#allocation2 + $0x1f0] sm:$0xff] %v3202
      %3207 = vst [vmem:[#allocation2 + $0x1f8] sm:$0xff] %v3203
      %s3208 = scalar_lea.vmem %s1, 256
      %v3209 = vld [vmem:[%s3208] sm:$0xff]
      %v3210 = vld [vmem:[%s3208 + $0x8] sm:$0xff]
      %v3211 = vld [vmem:[%s3208 + $0x10] sm:$0xff]
      %v3212 = vld [vmem:[%s3208 + $0x18] sm:$0xff]
      %v3213 = vld [vmem:[%s3208 + $0x20] sm:$0xff]
      %v3214 = vld [vmem:[%s3208 + $0x28] sm:$0xff]
      %v3215 = vld [vmem:[%s3208 + $0x30] sm:$0xff]
      %v3216 = vld [vmem:[%s3208 + $0x38] sm:$0xff]
      %v3217 = vld [vmem:[#allocation2] sm:$0xff]
      %v3218 = vld [vmem:[#allocation2 + $0x8] sm:$0xff]
      %v3219 = vld [vmem:[#allocation2 + $0x10] sm:$0xff]
      %v3220 = vld [vmem:[#allocation2 + $0x18] sm:$0xff]
      %v3221 = vld [vmem:[#allocation2 + $0x20] sm:$0xff]
      %v3222 = vld [vmem:[#allocation2 + $0x28] sm:$0xff]
      %v3223 = vld [vmem:[#allocation2 + $0x30] sm:$0xff]
      %v3224 = vld [vmem:[#allocation2 + $0x38] sm:$0xff]
      %v3225 = vld [vmem:[#allocation2 + $0x40] sm:$0xff]
      %v3226 = vld [vmem:[#allocation2 + $0x48] sm:$0xff]
      %v3227 = vld [vmem:[#allocation2 + $0x50] sm:$0xff]
      %v3228 = vld [vmem:[#allocation2 + $0x58] sm:$0xff]
      %v3229 = vld [vmem:[#allocation2 + $0x60] sm:$0xff]
      %v3230 = vld [vmem:[#allocation2 + $0x68] sm:$0xff]
      %v3231 = vld [vmem:[#allocation2 + $0x70] sm:$0xff]
      %v3232 = vld [vmem:[#allocation2 + $0x78] sm:$0xff]
      %v3233 = vld [vmem:[#allocation2 + $0x80] sm:$0xff]
      %v3234 = vld [vmem:[#allocation2 + $0x88] sm:$0xff]
      %v3235 = vld [vmem:[#allocation2 + $0x90] sm:$0xff]
      %v3236 = vld [vmem:[#allocation2 + $0x98] sm:$0xff]
      %v3237 = vld [vmem:[#allocation2 + $0xa0] sm:$0xff]
      %v3238 = vld [vmem:[#allocation2 + $0xa8] sm:$0xff]
      %v3239 = vld [vmem:[#allocation2 + $0xb0] sm:$0xff]
      %v3240 = vld [vmem:[#allocation2 + $0xb8] sm:$0xff]
      %v3241 = vld [vmem:[#allocation2 + $0xc0] sm:$0xff]
      %v3242 = vld [vmem:[#allocation2 + $0xc8] sm:$0xff]
      %v3243 = vld [vmem:[#allocation2 + $0xd0] sm:$0xff]
      %v3244 = vld [vmem:[#allocation2 + $0xd8] sm:$0xff]
      %v3245 = vld [vmem:[#allocation2 + $0xe0] sm:$0xff]
      %v3246 = vld [vmem:[#allocation2 + $0xe8] sm:$0xff]
      %v3247 = vld [vmem:[#allocation2 + $0xf0] sm:$0xff]
      %v3248 = vld [vmem:[#allocation2 + $0xf8] sm:$0xff]
      %v3249 = vld [vmem:[#allocation2 + $0x100] sm:$0xff]
      %v3250 = vld [vmem:[#allocation2 + $0x108] sm:$0xff]
      %v3251 = vld [vmem:[#allocation2 + $0x110] sm:$0xff]
      %v3252 = vld [vmem:[#allocation2 + $0x118] sm:$0xff]
      %v3253 = vld [vmem:[#allocation2 + $0x120] sm:$0xff]
      %v3254 = vld [vmem:[#allocation2 + $0x128] sm:$0xff]
      %v3255 = vld [vmem:[#allocation2 + $0x130] sm:$0xff]
      %v3256 = vld [vmem:[#allocation2 + $0x138] sm:$0xff]
      %v3257 = vld [vmem:[#allocation2 + $0x140] sm:$0xff]
      %v3258 = vld [vmem:[#allocation2 + $0x148] sm:$0xff]
      %v3259 = vld [vmem:[#allocation2 + $0x150] sm:$0xff]
      %v3260 = vld [vmem:[#allocation2 + $0x158] sm:$0xff]
      %v3261 = vld [vmem:[#allocation2 + $0x160] sm:$0xff]
      %v3262 = vld [vmem:[#allocation2 + $0x168] sm:$0xff]
      %v3263 = vld [vmem:[#allocation2 + $0x170] sm:$0xff]
      %v3264 = vld [vmem:[#allocation2 + $0x178] sm:$0xff]
      %v3265 = vld [vmem:[#allocation2 + $0x180] sm:$0xff]
      %v3266 = vld [vmem:[#allocation2 + $0x188] sm:$0xff]
      %v3267 = vld [vmem:[#allocation2 + $0x190] sm:$0xff]
      %v3268 = vld [vmem:[#allocation2 + $0x198] sm:$0xff]
      %v3269 = vld [vmem:[#allocation2 + $0x1a0] sm:$0xff]
      %v3270 = vld [vmem:[#allocation2 + $0x1a8] sm:$0xff]
      %v3271 = vld [vmem:[#allocation2 + $0x1b0] sm:$0xff]
      %v3272 = vld [vmem:[#allocation2 + $0x1b8] sm:$0xff]
      %v3273 = vld [vmem:[#allocation2 + $0x1c0] sm:$0xff]
      %v3274 = vld [vmem:[#allocation2 + $0x1c8] sm:$0xff]
      %v3275 = vld [vmem:[#allocation2 + $0x1d0] sm:$0xff]
      %v3276 = vld [vmem:[#allocation2 + $0x1d8] sm:$0xff]
      %v3277 = vld [vmem:[#allocation2 + $0x1e0] sm:$0xff]
      %v3278 = vld [vmem:[#allocation2 + $0x1e8] sm:$0xff]
      %v3279 = vld [vmem:[#allocation2 + $0x1f0] sm:$0xff]
      %v3280 = vld [vmem:[#allocation2 + $0x1f8] sm:$0xff]
      %s3281 = scalar_lea.vmem %s2, 128
      %v3282 = vld [vmem:[%s3281] sm:$0xff]
      %v3283 = vld [vmem:[%s3281 + $0x8] sm:$0xff]
      %v3284 = vld [vmem:[%s3281 + $0x10] sm:$0xff]
      %v3285 = vld [vmem:[%s3281 + $0x18] sm:$0xff]
      %3287 = vset.pattern.permute.xlu0 0
      %3288 = vperm.xlu0 %3287, %v3282
      %v3289 = vpop.permute.xlu0 %3288
      %3292 = vset.pattern.permute.xlu0 0
      %3293 = vperm.xlu0 %3292, %v3283
      %v3294 = vpop.permute.xlu0 %3293
      %3296 = vset.pattern.permute.xlu0 0
      %3297 = vperm.xlu0 %3296, %v3284
      %v3298 = vpop.permute.xlu0 %3297
      %3300 = vset.pattern.permute.xlu0 0
      %3301 = vperm.xlu0 %3300, %v3285
      %v3302 = vpop.permute.xlu0 %3301
      %v3311 = vunpack.c.l.b16 %v3209
      %v3312 = vunpack.c.h.b16 %v3209
      %v3313 = vunpack.c.l.b16 %v3210
      %v3314 = vunpack.c.h.b16 %v3210
      %v3315 = vunpack.c.l.b16 %v3211
      %v3316 = vunpack.c.h.b16 %v3211
      %v3317 = vunpack.c.l.b16 %v3212
      %v3318 = vunpack.c.h.b16 %v3212
      %v3319 = vunpack.c.l.b16 %v3213
      %v3320 = vunpack.c.h.b16 %v3213
      %v3321 = vunpack.c.l.b16 %v3214
      %v3322 = vunpack.c.h.b16 %v3214
      %v3323 = vunpack.c.l.b16 %v3215
      %v3324 = vunpack.c.h.b16 %v3215
      %v3325 = vunpack.c.l.b16 %v3216
      %v3326 = vunpack.c.h.b16 %v3216
      %v3327 = vpack.c.b16 %v3315, %v3311
      %v3328 = vpack.c.b16 %v3316, %v3312
      %v3329 = vpack.c.b16 %v3317, %v3313
      %v3330 = vpack.c.b16 %v3318, %v3314
      %v3331 = vpack.c.b16 %v3323, %v3319
      %v3332 = vpack.c.b16 %v3324, %v3320
      %v3333 = vpack.c.b16 %v3325, %v3321
      %v3334 = vpack.c.b16 %v3326, %v3322
      %3343 = vmatprep.subr.bf16.mxu0 %v3218
      %3344 = vmatpush1.bf16.msra.mxu0 %v3217
      %3345 = vmatprep.subr.bf16.mxu0 %v3220
      %3346 = vmatpush1.bf16.msra.mxu0 %v3219
      %3347 = vmatprep.subr.bf16.mxu0 %v3222
      %3348 = vmatpush1.bf16.msra.mxu0 %v3221
      %3349 = vmatprep.subr.bf16.mxu0 %v3224
      %3350 = vmatpush1.bf16.msra.mxu0 %v3223
      %3351 = vmatprep.subr.bf16.mxu0 %v3226
      %3352 = vmatpush1.bf16.msra.mxu0 %v3225
      %3353 = vmatprep.subr.bf16.mxu0 %v3228
      %3354 = vmatpush1.bf16.msra.mxu0 %v3227
      %3355 = vmatprep.subr.bf16.mxu0 %v3230
      %3356 = vmatpush1.bf16.msra.mxu0 %v3229
      %3357 = vmatprep.subr.bf16.mxu0 %v3232
      %3358 = vmatpush1.bf16.msra.mxu0 %v3231
      %3359 = vmatprep.subr.bf16.mxu0 %v3234
      %3360 = vmatpush1.bf16.msra.mxu0 %v3233
      %3361 = vmatprep.subr.bf16.mxu0 %v3236
      %3362 = vmatpush1.bf16.msra.mxu0 %v3235
      %3363 = vmatprep.subr.bf16.mxu0 %v3238
      %3364 = vmatpush1.bf16.msra.mxu0 %v3237
      %3365 = vmatprep.subr.bf16.mxu0 %v3240
      %3366 = vmatpush1.bf16.msra.mxu0 %v3239
      %3367 = vmatprep.subr.bf16.mxu0 %v3242
      %3368 = vmatpush1.bf16.msra.mxu0 %v3241
      %3369 = vmatprep.subr.bf16.mxu0 %v3244
      %3370 = vmatpush1.bf16.msra.mxu0 %v3243
      %3371 = vmatprep.subr.bf16.mxu0 %v3246
      %3372 = vmatpush1.bf16.msra.mxu0 %v3245
      %3373 = vmatprep.subr.bf16.mxu0 %v3248
      %3374 = vmatpush1.bf16.msra.mxu0 %v3247
      %3375 = vmatprep.mubr.bf16.mxu0 %v3328
      %3376 = vmatmul.mubr.bf16.gmra.mrb[0].mxu0 %v3327
      %v3377 = vpop.f32.mrb[0].mxu0
      %v3378 = vadd.f32 %v3289, %v3377
      %v3379 = vpop.f32.mrb[0].mxu0
      %v3380 = vadd.f32 %v3289, %v3379
      %v3381 = vpop.f32.mrb[0].mxu0
      %v3382 = vpop.f32.mrb[0].mxu0
      %3383 = vmatprep.mubr.bf16.mxu0 %v3332
      %3384 = vmatmul.mubr.bf16.gmra.mrb[0].mxu0 %v3331
      %v3385 = vpop.f32.mrb[0].mxu0
      %v3386 = vpop.f32.mrb[0].mxu0
      %v3387 = vpop.f32.mrb[0].mxu0
      %v3388 = vpop.f32.mrb[0].mxu0
      %3389 = vdwg.mxu0
      %3390 = vmatprep.subr.bf16.mxu0 %v3250
      %3391 = vmatpush1.bf16.msra.mxu0 %v3249
      %3392 = vmatprep.subr.bf16.mxu0 %v3252
      %3393 = vmatpush1.bf16.msra.mxu0 %v3251
      %3394 = vmatprep.subr.bf16.mxu0 %v3254
      %3395 = vmatpush1.bf16.msra.mxu0 %v3253
      %3396 = vmatprep.subr.bf16.mxu0 %v3256
      %3397 = vmatpush1.bf16.msra.mxu0 %v3255
      %3398 = vmatprep.subr.bf16.mxu0 %v3258
      %3399 = vmatpush1.bf16.msra.mxu0 %v3257
      %3400 = vmatprep.subr.bf16.mxu0 %v3260
      %3401 = vmatpush1.bf16.msra.mxu0 %v3259
      %3402 = vmatprep.subr.bf16.mxu0 %v3262
      %3403 = vmatpush1.bf16.msra.mxu0 %v3261
      %3404 = vmatprep.subr.bf16.mxu0 %v3264
      %3405 = vmatpush1.bf16.msra.mxu0 %v3263
      %3406 = vmatprep.subr.bf16.mxu0 %v3266
      %3407 = vmatpush1.bf16.msra.mxu0 %v3265
      %3408 = vmatprep.subr.bf16.mxu0 %v3268
      %3409 = vmatpush1.bf16.msra.mxu0 %v3267
      %3410 = vmatprep.subr.bf16.mxu0 %v3270
      %3411 = vmatpush1.bf16.msra.mxu0 %v3269
      %3412 = vmatprep.subr.bf16.mxu0 %v3272
      %3413 = vmatpush1.bf16.msra.mxu0 %v3271
      %3414 = vmatprep.subr.bf16.mxu0 %v3274
      %3415 = vmatpush1.bf16.msra.mxu0 %v3273
      %3416 = vmatprep.subr.bf16.mxu0 %v3276
      %3417 = vmatpush1.bf16.msra.mxu0 %v3275
      %3418 = vmatprep.subr.bf16.mxu0 %v3278
      %3419 = vmatpush1.bf16.msra.mxu0 %v3277
      %3420 = vmatprep.subr.bf16.mxu0 %v3280
      %3421 = vmatpush1.bf16.msra.mxu0 %v3279
      %3422 = vmatprep.mubr.bf16.mxu0 %v3330
      %3423 = vmatmul.mubr.bf16.gmra.mrb[0].mxu0 %v3329
      %v3424 = vpop.f32.mrb[0].mxu0
      %v3425 = vadd.f32 %v3378, %v3424
      %v3426 = vpop.f32.mrb[0].mxu0
      %v3427 = vadd.f32 %v3380, %v3426
      %v3428 = vpop.f32.mrb[0].mxu0
      %v3429 = vpop.f32.mrb[0].mxu0
      %3430 = vmatprep.mubr.bf16.mxu0 %v3334
      %3431 = vmatmul.mubr.bf16.gmra.mrb[0].mxu0 %v3333
      %v3432 = vpop.f32.mrb[0].mxu0
      %v3433 = vpop.f32.mrb[0].mxu0
      %v3434 = vpop.f32.mrb[0].mxu0
      %v3435 = vpop.f32.mrb[0].mxu0
      %3436 = vdwg.mxu0
      %v3437 = vxor.u32 %v3425, 2147483648
      %v3438 = vxor.u32 %v3427, 2147483648
      %v3439 = vmul.f32 %v3437, 1.442695
      %v3440 = vpow.pop %v3439
      %v3441 = vmul.f32 %v3438, 1.442695
      %v3442 = vpow.pop %v3441
      %v3443 = vadd.f32 %v3440, 1.0
      %v3444 = vadd.f32 %v3442, 1.0
      %v3445 = vrcp.pop %v3443
      %v3446 = vmul.f32 1.0, %v3445
      %v3447 = vrcp.pop %v3444
      %v3448 = vmul.f32 1.0, %v3447
      %v3451 = vcombine.low %v3446, %v3448
      %3453 = vst [vmem:[%s197] sm:$0xff] %v3451
      %p3454 = scmp.lt.s32.totalorder %s15, 1
      %s3455 = scalar_select %p3454, %s15, 1
      %s3456 = smul.addr %s3455, 2
      %s3457 = smul.addr %s3456, 4
      %s3458 = scalar_lea.vmem %s4, %s3457
      // Predicated region
      $region37: #{generator_forward.1} parent=35 // pred_check
        %p3459 = pneg %p122
      $region38: #{generator_forward.1} parent=35 // pred_check_branch
        %3461 = sbr.rel (%p3459) target = $region40
      $region39: #{generator_forward.1} parent=35 // pred_region
        _
      $region40: #{generator_forward.1} parent=35 // pred_fallthru
        _
    $region36: #{generator_forward.1} parent=5 // pred_fallthru
      _
    %p3462 = scmp.le.s32.totalorder 2, %s10
    // Predicated region
    $region41: #{generator_forward.1} parent=5 // pred_check
      %p3463 = pneg %p3462
    $region42: #{generator_forward.1} parent=5 // pred_check_branch
      %3465 = sbr.rel (%p3463) target = $region44
    $region43: #{generator_forward.1} parent=5 // pred_region
      %s3466 = ssub.s32 %s10, 2
      // Predicated region
      $region45: #{generator_forward.1} parent=43 // pred_check
        %p3467 = pneg %p128
      $region46: #{generator_forward.1} parent=43 // pred_check_branch
        %3469 = sbr.rel (%p3467) target = $region48
      $region47: #{generator_forward.1} parent=43 // pred_region
        %p3470 = scmp.lt.s32.totalorder %s16, 1
        %s3471 = scalar_select %p3470, %s16, 1
        %s3472 = smul.addr %s3471, 2
        %s3473 = smul.addr %s3472, 4
        %s3474 = scalar_lea.vmem %s4, %s3473
      $region48: #{generator_forward.1} parent=43 // pred_fallthru
        _
    $region44: #{generator_forward.1} parent=5 // pred_fallthru
      _
  $region6: #{generator_forward.1} parent=0 // loop_footer
    %s14 = sadd.s32 1, %s10
  $region7: #{generator_forward.1} parent=0 // loop_footer_branch
    %9 = sbr.rel target = $region3
  $region8: #{generator_forward.1} parent=0 // loop_exit
    _

</llo_original>
